<compile_context>
chip_gen: v7x
topology: tpu7x:2x2x1
jax: 0.10.0
libtpu: 0.0.40
codegen_flags: <defaults>
</compile_context>

<pallas_src>
import functools

import jax
import jax.numpy as jnp
from jax import lax
from jax.experimental import pallas as pl
from jax.experimental.pallas import tpu as pltpu

EPS = 1e-6
_MXU_DIM = 256                 # pack the tiny (T,T) matrix up to this size
_MAX_TILE_Q = 512              # packed-column tile width (256*512*4B = 512 KiB/tile)
_VMEM_LIMIT = 32 * 1024 * 1024 # explicit scoped-VMEM budget (safe on v5e/v6e/v7x)


def generate_delta_matrix(dim: int) -> jnp.ndarray:
    """Forward-difference matrix (same as the PyTorch helper)."""
    d = jnp.zeros((dim, dim), jnp.float32)
    i = jnp.arange(dim - 1)
    return d.at[i, i].set(-1.0).at[i, i + 1].set(1.0)


def _round_up(x: int, m: int) -> int:
    return ((x + m - 1) // m) * m


# ---------------------------------------------------------------------------
# Kernels (all compute on packed (G*T, tile_q) tiles)
# ---------------------------------------------------------------------------
def _init_kernel(wb_ref, sb_ref, s2_ref, m_ref, x0_ref, f_ref):
    """x0 = m*s2 + masked_time_average * (1-m);  f = Wb @ (m*s2)."""
    s2 = s2_ref[...]
    m = m_ref[...].astype(jnp.float32)
    ms2 = m * s2
    sb = sb_ref[...]
    # per-pixel sums over the T time steps of each group (block-diag ones)
    num = jnp.dot(sb, ms2, preferred_element_type=jnp.float32)
    den = jnp.dot(sb, m, preferred_element_type=jnp.float32)
    avg = num / (den + EPS)
    x0_ref[...] = ms2 + avg * (1.0 - m)
    f_ref[...] = jnp.dot(wb_ref[...], ms2, preferred_element_type=jnp.float32)


def _make_group_kernel(n_steps: int):
    """`n_steps` fused damped-interpolation steps with X resident in VMEM."""

    def kernel(wb_ref, f_ref, m_ref, x_ref, x1_ref, xn_ref, sd_ref, sa_ref):
        wb = wb_ref[...]
        f = f_ref[...]
        mbar = 1.0 - m_ref[...].astype(jnp.float32)
        x = x_ref[...]

        # First step of the group == the iteration the reference checks
        # (i % check_interval == 0).  Emit X1 + per-tile convergence partials.
        x1 = f + jnp.dot(wb, mbar * x, preferred_element_type=jnp.float32)
        x1_ref[...] = x1
        sd_ref[...] = jnp.sum(jnp.abs(x1 - x), axis=0, keepdims=True)[None]
        sa_ref[...] = jnp.sum(jnp.abs(x1), axis=0, keepdims=True)[None]

        # Remaining n_steps-1 steps never leave VMEM.
        def body(_, xc):
            return f + jnp.dot(wb, mbar * xc, preferred_element_type=jnp.float32)

        xn_ref[...] = lax.fori_loop(0, n_steps - 1, body, x1, unroll=True)

    return kernel


# ---------------------------------------------------------------------------
# Forward pass
# ---------------------------------------------------------------------------
def damped_interpolation_forward(s2, cloud_label, W, *, tol, max_iter,
                                 check_interval):
    b, c, t, h, wd = s2.shape
    P = b * c * h * wd

    # --- packed layout sizing ------------------------------------------------
    G = max(1, _MXU_DIM // t)            # pixel groups stacked on sublanes
    GT = G * t
    Q = -(-P // G)                       # packed columns needed (cdiv)
    tile_q = min(_MAX_TILE_Q, _round_up(Q, 128))
    Q_pad = _round_up(Q, tile_q)
    P_pad = G * Q_pad
    num_tiles = Q_pad // tile_q
    n_real = jnp.float32(t * P)          # element count of the reference .mean()

    # block-diagonal smoothing / time-sum matrices (built once, tiny)
    Wb = jnp.kron(jnp.eye(G, dtype=jnp.float32), W.astype(jnp.float32))
    Sb = jnp.kron(jnp.eye(G, dtype=jnp.float32), jnp.ones((t, t), jnp.float32))

    # --- one-time layout transform: 'b c t h w -> (g t) q' --------------------
    m_small = (cloud_label == 1).astype(jnp.float32)             # (b,1,t,h,w)
    m_full = jnp.broadcast_to(m_small, (b, c, t, h, wd))

    def pack(a, dtype):
        a = jnp.transpose(a, (2, 0, 1, 3, 4)).reshape(t, P)      # t x (b c h w)
        if P_pad > P:
            a = jnp.pad(a, ((0, 0), (0, P_pad - P)))             # zero pad pixels
        return a.reshape(t, G, Q_pad).transpose(1, 0, 2).reshape(GT, Q_pad).astype(dtype)

    s2_p = pack(s2.astype(jnp.float32), jnp.float32)
    m_p = pack(m_full, jnp.bfloat16)      # {0,1} exact in bf16, halves mask stream

    grid = (num_tiles,)
    mat_spec = pl.BlockSpec((GT, GT), lambda i: (0, 0))
    tile_spec = pl.BlockSpec((GT, tile_q), lambda i: (0, i))
    red_spec = pl.BlockSpec((1, 1, tile_q), lambda i: (i, 0, 0))
    cparams = pltpu.CompilerParams(dimension_semantics=("parallel",),
                                   vmem_limit_bytes=_VMEM_LIMIT)

    # --- kernel 1: initial masked-average fill + f = Wb @ (M .* S2) -----------
    x0, f = pl.pallas_call(
        _init_kernel,
        out_shape=(jax.ShapeDtypeStruct((GT, Q_pad), jnp.float32),
                   jax.ShapeDtypeStruct((GT, Q_pad), jnp.float32)),
        grid_spec=pltpu.PrefetchScalarGridSpec(
            num_scalar_prefetch=0, grid=grid,
            in_specs=[mat_spec, mat_spec, tile_spec, tile_spec],
            out_specs=(tile_spec, tile_spec)),
        compiler_params=cparams,
    )(Wb, Sb, s2_p, m_p)

    # --- kernel 2 factory: n_steps fused fixed-point steps --------------------
    def make_group_call(n_steps):
        return pl.pallas_call(
            _make_group_kernel(n_steps),
            out_shape=(jax.ShapeDtypeStruct((GT, Q_pad), jnp.float32),   # X after 1 step
                       jax.ShapeDtypeStruct((GT, Q_pad), jnp.float32),   # X after n_steps
                       jax.ShapeDtypeStruct((num_tiles, 1, tile_q), jnp.float32),
                       jax.ShapeDtypeStruct((num_tiles, 1, tile_q), jnp.float32)),
            grid_spec=pltpu.PrefetchScalarGridSpec(
                num_scalar_prefetch=0, grid=grid,
                in_specs=[mat_spec, tile_spec, tile_spec, tile_spec],
                out_specs=(tile_spec, tile_spec, red_spec, red_spec)),
            input_output_aliases={3: 1},      # advance X in place (X -> X_n)
            compiler_params=cparams,
        )

    def rel_of(sd, sa):
        # == (x1 - x).abs().mean() / (x1.abs().mean() + EPS); padded cols are 0.
        return (jnp.sum(sd) / n_real) / (jnp.sum(sa) / n_real + EPS)

    num_groups = max_iter // check_interval
    rem = max_iter % check_interval
    group_call = make_group_call(check_interval) if num_groups > 0 else None

    # Each while-loop step advances check_interval iterations; the convergence
    # gate (a GLOBAL reduction) is evaluated in the wrapper from the per-tile
    # partial sums produced on the group's first step.
    def cond(carry):
        _, _, g, done = carry
        return jnp.logical_and(g < num_groups, jnp.logical_not(done))

    def body(carry):
        x, _, g, _ = carry
        x1, xn, sd, sa = group_call(Wb, f, m_p, x)
        done = rel_of(sd, sa) < tol
        return (xn, x1, g + 1, done)

    carry0 = (x0, x0, jnp.asarray(0, jnp.int32), jnp.asarray(False))
    if num_groups > 0:
        x_run, x1_conv, _, done = lax.while_loop(cond, body, carry0)
    else:
        x_run, x1_conv, _, done = carry0

    if rem > 0:
        # Tail group (max_iter not a multiple of check_interval); check still
        # fires on its first step, matching the reference exactly.
        tail_call = make_group_call(rem)

        def run_tail(xr):
            x1, xn, sd, sa = tail_call(Wb, f, m_p, xr)
            return jnp.where(rel_of(sd, sa) < tol, x1, xn)

        x_run = lax.cond(done, lambda xr: xr, run_tail, x_run)

    # If converged at a check, the answer is that group's first-step X1.
    x_out = jnp.where(done, x1_conv, x_run)

    # --- inverse layout transform: '(g t) q -> b c t h w' ---------------------
    x_tp = x_out.reshape(G, t, Q_pad).transpose(1, 0, 2).reshape(t, P_pad)[:, :P]
    return jnp.transpose(x_tp.reshape(t, b, c, h, wd), (1, 2, 0, 3, 4))


forward = jax.jit(functools.partial(
    damped_interpolation_forward,
    tol=1e-3, max_iter=200, check_interval=5))


# ---------------------------------------------------------------------------
# Pure-JAX reference (mirrors the PyTorch forward) for validation.
# ---------------------------------------------------------------------------
def reference_forward(s2, cloud_label, W, *, tol, max_iter, check_interval):
    b, c, t, h, wd = s2.shape
    m = jnp.broadcast_to((cloud_label == 1).astype(jnp.float32), s2.shape)
    num = jnp.sum(s2 * m, axis=2, keepdims=True)
    den = jnp.sum(m, axis=2, keepdims=True)
    x = s2 * m + (num / (den + EPS)) * (1.0 - m)
    to_tp = lambda a: jnp.transpose(a, (2, 0, 1, 3, 4)).reshape(t, -1)
    s2m, xm, mm = to_tp(s2), to_tp(x), to_tp(m)
    mbar = 1.0 - mm
    f = W @ (mm * s2m)
    for i in range(max_iter):
        x1 = f + W @ (mbar * xm)
        if i % check_interval == 0:
            rel = jnp.mean(jnp.abs(x1 - xm)) / (jnp.mean(jnp.abs(x1)) + EPS)
            if float(rel) < tol:
                xm = x1
                break
        xm = x1
    return jnp.transpose(xm.reshape(t, b, c, h, wd), (1, 2, 0, 3, 4))


# ---------------------------------------------------------------------------
if __name__ == "__main__":
    NUM_BANDS, TIME_WINDOW = 4, 8
    DAMPING = 0.1
    B, C, T, H, Wd = 2, NUM_BANDS, TIME_WINDOW, 8, 8     # P = 2*4*8*8 = 2048

    # Module "parameters": W = inv(I + alpha * D^T D) from __init__.
    d = generate_delta_matrix(TIME_WINDOW)
    W = jnp.linalg.inv(
        jnp.eye(TIME_WINDOW, dtype=jnp.float32) + DAMPING * (d.T @ d)
    ).astype(jnp.float32)

    key = jax.random.PRNGKey(0)
    k1, k2 = jax.random.split(key)
    s2 = jax.random.uniform(k1, (B, C, T, H, Wd), jnp.float32)
    cloud_label = jax.random.randint(k2, (B, 1, T, H, Wd), 0, 2, jnp.int32)

    out = forward(s2, cloud_label, W)
    jax.block_until_ready(out)
    assert out.shape == (B, C, T, H, Wd) and out.dtype == jnp.float32

    ref = reference_forward(s2, cloud_label, W,
                            tol=1e-3, max_iter=200, check_interval=5)
    max_err = float(jnp.max(jnp.abs(out - ref)))
    assert max_err < 2e-2, f"mismatch vs reference: {max_err}"

    print("KERNEL_OK")
</pallas_src>

<mosaic_0001>
module attributes {stable_mosaic.version = 11 : i64} {
  func.func @_init_kernel(%arg0: i32, %arg1: memref<256x256xf32, #tpu.memory_space<vmem>>, %arg2: memref<256x256xf32, #tpu.memory_space<vmem>>, %arg3: memref<256x128xf32, #tpu.memory_space<vmem>>, %arg4: memref<256x128xbf16, #tpu.memory_space<vmem>>, %arg5: memref<256x128xf32, #tpu.memory_space<vmem>>, %arg6: memref<256x128xf32, #tpu.memory_space<vmem>>) attributes {dimension_semantics = [#tpu.dimension_semantics<parallel>], iteration_bounds = array<i64: 1>, scalar_prefetch = 0 : i64, scratch_operands = 0 : i64, tpu.core_type = #tpu.core_type<tc>, window_params = [{pipeline_mode = #tpu.pipeline_mode<synchronous>, transform_indices = @transform_0, window_bounds = array<i64: 256, 256>}, {pipeline_mode = #tpu.pipeline_mode<synchronous>, transform_indices = @transform_1, window_bounds = array<i64: 256, 256>}, {transform_indices = @transform_2, window_bounds = array<i64: 256, 128>}, {transform_indices = @transform_3, window_bounds = array<i64: 256, 128>}, {transform_indices = @transform_4, window_bounds = array<i64: 256, 128>}, {transform_indices = @transform_5, window_bounds = array<i64: 256, 128>}]} {
    %c0 = arith.constant 0 : index
    %c0_0 = arith.constant 0 : index
    %0 = vector.load %arg3[%c0, %c0_0] : memref<256x128xf32, #tpu.memory_space<vmem>>, vector<256x128xf32>
    %c0_1 = arith.constant 0 : index
    %c0_2 = arith.constant 0 : index
    %1 = vector.load %arg4[%c0_1, %c0_2] : memref<256x128xbf16, #tpu.memory_space<vmem>>, vector<256x128xbf16>
    %2 = arith.extf %1 : vector<256x128xbf16> to vector<256x128xf32>
    %3 = arith.mulf %2, %0 : vector<256x128xf32>
    %c0_3 = arith.constant 0 : index
    %c0_4 = arith.constant 0 : index
    %4 = vector.load %arg2[%c0_3, %c0_4] : memref<256x256xf32, #tpu.memory_space<vmem>>, vector<256x256xf32>
    %cst = arith.constant dense<0.000000e+00> : vector<256x128xf32>
    %5 = tpu.matmul %4, %3, %cst {dimension_numbers = #tpu.dot_dimension_numbers<[1], [0], [0], [1], [0, 0, 1, 1], [], []>} : vector<256x256xf32>, vector<256x128xf32>, vector<256x128xf32> -> vector<256x128xf32>
    %cst_5 = arith.constant dense<0.000000e+00> : vector<256x128xf32>
    %6 = tpu.matmul %4, %2, %cst_5 {dimension_numbers = #tpu.dot_dimension_numbers<[1], [0], [0], [1], [0, 0, 1, 1], [], []>} : vector<256x256xf32>, vector<256x128xf32>, vector<256x128xf32> -> vector<256x128xf32>
    %cst_6 = arith.constant 9.99999997E-7 : f32
    %7 = vector.broadcast %cst_6 : f32 to vector<256x128xf32>
    %8 = arith.addf %6, %7 : vector<256x128xf32>
    %9 = arith.divf %5, %8 : vector<256x128xf32>
    %cst_7 = arith.constant 1.000000e+00 : f32
    %10 = vector.broadcast %cst_7 : f32 to vector<256x128xf32>
    %11 = arith.subf %10, %2 : vector<256x128xf32>
    %12 = arith.mulf %9, %11 : vector<256x128xf32>
    %13 = arith.addf %3, %12 : vector<256x128xf32>
    %c0_8 = arith.constant 0 : index
    %c0_9 = arith.constant 0 : index
    %14 = vector.load %arg5[%c0_8, %c0_9] : memref<256x128xf32, #tpu.memory_space<vmem>>, vector<256x128xf32>
    tpu.vector_store %arg5[%c0_8, %c0_9], %13 {strides = array<i32>} : memref<256x128xf32, #tpu.memory_space<vmem>>, vector<256x128xf32>,
    %c0_10 = arith.constant 0 : index
    %c0_11 = arith.constant 0 : index
    %15 = vector.load %arg1[%c0_10, %c0_11] : memref<256x256xf32, #tpu.memory_space<vmem>>, vector<256x256xf32>
    %cst_12 = arith.constant dense<0.000000e+00> : vector<256x128xf32>
    %16 = tpu.matmul %15, %3, %cst_12 {dimension_numbers = #tpu.dot_dimension_numbers<[1], [0], [0], [1], [0, 0, 1, 1], [], []>} : vector<256x256xf32>, vector<256x128xf32>, vector<256x128xf32> -> vector<256x128xf32>
    %c0_13 = arith.constant 0 : index
    %c0_14 = arith.constant 0 : index
    %17 = vector.load %arg6[%c0_13, %c0_14] : memref<256x128xf32, #tpu.memory_space<vmem>>, vector<256x128xf32>
    tpu.vector_store %arg6[%c0_13, %c0_14], %16 {strides = array<i32>} : memref<256x128xf32, #tpu.memory_space<vmem>>, vector<256x128xf32>,
    return
  }
  func.func @transform_0(%arg0: i32) -> (i32, i32) {
    %c0_i32 = arith.constant 0 : i32
    %c0_i32_0 = arith.constant 0 : i32
    %c0_i32_1 = arith.constant 0 : i32
    return %c0_i32, %c0_i32_0 : i32, i32
  }
  func.func @transform_1(%arg0: i32) -> (i32, i32) {
    %c0_i32 = arith.constant 0 : i32
    %c0_i32_0 = arith.constant 0 : i32
    %c0_i32_1 = arith.constant 0 : i32
    return %c0_i32, %c0_i32_0 : i32, i32
  }
  func.func @transform_2(%arg0: i32) -> (i32, i32) {
    %c0_i32 = arith.constant 0 : i32
    %c0_i32_0 = arith.constant 0 : i32
    return %c0_i32, %arg0 : i32, i32
  }
  func.func @transform_3(%arg0: i32) -> (i32, i32) {
    %c0_i32 = arith.constant 0 : i32
    %c0_i32_0 = arith.constant 0 : i32
    return %c0_i32, %arg0 : i32, i32
  }
  func.func @transform_4(%arg0: i32) -> (i32, i32) {
    %c0_i32 = arith.constant 0 : i32
    %c0_i32_0 = arith.constant 0 : i32
    return %c0_i32, %arg0 : i32, i32
  }
  func.func @transform_5(%arg0: i32) -> (i32, i32) {
    %c0_i32 = arith.constant 0 : i32
    %c0_i32_0 = arith.constant 0 : i32
    return %c0_i32, %arg0 : i32, i32
  }
}

module attributes {stable_mosaic.version = 11 : i64} {
  func.func @kernel(%arg0: i32, %arg1: memref<256x256xf32, #tpu.memory_space<vmem>>, %arg2: memref<256x128xf32, #tpu.memory_space<vmem>>, %arg3: memref<256x128xbf16, #tpu.memory_space<vmem>>, %arg4: memref<256x128xf32, #tpu.memory_space<vmem>>, %arg5: memref<256x128xf32, #tpu.memory_space<vmem>>, %arg6: memref<256x128xf32, #tpu.memory_space<vmem>>, %arg7: memref<1x1x128xf32, #tpu.memory_space<vmem>>, %arg8: memref<1x1x128xf32, #tpu.memory_space<vmem>>) attributes {dimension_semantics = [#tpu.dimension_semantics<parallel>], iteration_bounds = array<i64: 1>, scalar_prefetch = 0 : i64, scratch_operands = 0 : i64, tpu.core_type = #tpu.core_type<tc>, window_params = [{pipeline_mode = #tpu.pipeline_mode<synchronous>, transform_indices = @transform_0, window_bounds = array<i64: 256, 256>}, {transform_indices = @transform_1, window_bounds = array<i64: 256, 128>}, {transform_indices = @transform_2, window_bounds = array<i64: 256, 128>}, {transform_indices = @transform_3, window_bounds = array<i64: 256, 128>}, {transform_indices = @transform_4, window_bounds = array<i64: 256, 128>}, {transform_indices = @transform_5, window_bounds = array<i64: 256, 128>}, {transform_indices = @transform_6, window_bounds = array<i64: 1, 1, 128>}, {transform_indices = @transform_7, window_bounds = array<i64: 1, 1, 128>}]} {
    %c0 = arith.constant 0 : index
    %c0_0 = arith.constant 0 : index
    %0 = vector.load %arg1[%c0, %c0_0] : memref<256x256xf32, #tpu.memory_space<vmem>>, vector<256x256xf32>
    %c0_1 = arith.constant 0 : index
    %c0_2 = arith.constant 0 : index
    %1 = vector.load %arg2[%c0_1, %c0_2] : memref<256x128xf32, #tpu.memory_space<vmem>>, vector<256x128xf32>
    %c0_3 = arith.constant 0 : index
    %c0_4 = arith.constant 0 : index
    %2 = vector.load %arg3[%c0_3, %c0_4] : memref<256x128xbf16, #tpu.memory_space<vmem>>, vector<256x128xbf16>
    %3 = arith.extf %2 : vector<256x128xbf16> to vector<256x128xf32>
    %cst = arith.constant 1.000000e+00 : f32
    %4 = vector.broadcast %cst : f32 to vector<256x128xf32>
    %5 = arith.subf %4, %3 : vector<256x128xf32>
    %c0_5 = arith.constant 0 : index
    %c0_6 = arith.constant 0 : index
    %6 = vector.load %arg4[%c0_5, %c0_6] : memref<256x128xf32, #tpu.memory_space<vmem>>, vector<256x128xf32>
    %7 = arith.mulf %5, %6 : vector<256x128xf32>
    %cst_7 = arith.constant dense<0.000000e+00> : vector<256x128xf32>
    %8 = tpu.matmul %0, %7, %cst_7 {dimension_numbers = #tpu.dot_dimension_numbers<[1], [0], [0], [1], [0, 0, 1, 1], [], []>} : vector<256x256xf32>, vector<256x128xf32>, vector<256x128xf32> -> vector<256x128xf32>
    %9 = arith.addf %1, %8 : vector<256x128xf32>
    %c0_8 = arith.constant 0 : index
    %c0_9 = arith.constant 0 : index
    %10 = vector.load %arg5[%c0_8, %c0_9] : memref<256x128xf32, #tpu.memory_space<vmem>>, vector<256x128xf32>
    tpu.vector_store %arg5[%c0_8, %c0_9], %9 {strides = array<i32>} : memref<256x128xf32, #tpu.memory_space<vmem>>, vector<256x128xf32>,
    %11 = arith.subf %9, %6 : vector<256x128xf32>
    %12 = math.absf %11 : vector<256x128xf32>
    %cst_10 = arith.constant dense<0.000000e+00> : vector<128xf32>
    %13 = vector.multi_reduction <add>, %12, %cst_10 [0] : vector<256x128xf32> to vector<128xf32>
    %14 = vector.shape_cast %13 : vector<128xf32> to vector<1x128xf32>
    %15 = vector.shape_cast %14 : vector<1x128xf32> to vector<1x1x128xf32>
    %c0_11 = arith.constant 0 : index
    %c0_12 = arith.constant 0 : index
    %c0_13 = arith.constant 0 : index
    %16 = vector.load %arg7[%c0_11, %c0_12, %c0_13] : memref<1x1x128xf32, #tpu.memory_space<vmem>>, vector<1x1x128xf32>
    tpu.vector_store %arg7[%c0_11, %c0_12, %c0_13], %15 {strides = array<i32>} : memref<1x1x128xf32, #tpu.memory_space<vmem>>, vector<1x1x128xf32>,
    %17 = math.absf %9 : vector<256x128xf32>
    %cst_14 = arith.constant dense<0.000000e+00> : vector<128xf32>
    %18 = vector.multi_reduction <add>, %17, %cst_14 [0] : vector<256x128xf32> to vector<128xf32>
    %19 = vector.shape_cast %18 : vector<128xf32> to vector<1x128xf32>
    %20 = vector.shape_cast %19 : vector<1x128xf32> to vector<1x1x128xf32>
    %c0_15 = arith.constant 0 : index
    %c0_16 = arith.constant 0 : index
    %c0_17 = arith.constant 0 : index
    %21 = vector.load %arg8[%c0_15, %c0_16, %c0_17] : memref<1x1x128xf32, #tpu.memory_space<vmem>>, vector<1x1x128xf32>
    tpu.vector_store %arg8[%c0_15, %c0_16, %c0_17], %20 {strides = array<i32>} : memref<1x1x128xf32, #tpu.memory_space<vmem>>, vector<1x1x128xf32>,
    %c0_i32 = arith.constant 0 : i32
    %22 = arith.mulf %5, %9 : vector<256x128xf32>
    %cst_18 = arith.constant dense<0.000000e+00> : vector<256x128xf32>
    %23 = tpu.matmul %0, %22, %cst_18 {dimension_numbers = #tpu.dot_dimension_numbers<[1], [0], [0], [1], [0, 0, 1, 1], [], []>} : vector<256x256xf32>, vector<256x128xf32>, vector<256x128xf32> -> vector<256x128xf32>
    %24 = arith.addf %1, %23 : vector<256x128xf32>
    %c1_i32 = arith.constant 1 : i32
    %25 = arith.mulf %5, %24 : vector<256x128xf32>
    %cst_19 = arith.constant dense<0.000000e+00> : vector<256x128xf32>
    %26 = tpu.matmul %0, %25, %cst_19 {dimension_numbers = #tpu.dot_dimension_numbers<[1], [0], [0], [1], [0, 0, 1, 1], [], []>} : vector<256x256xf32>, vector<256x128xf32>, vector<256x128xf32> -> vector<256x128xf32>
    %27 = arith.addf %1, %26 : vector<256x128xf32>
    %c2_i32 = arith.constant 2 : i32
    %28 = arith.mulf %5, %27 : vector<256x128xf32>
    %cst_20 = arith.constant dense<0.000000e+00> : vector<256x128xf32>
    %29 = tpu.matmul %0, %28, %cst_20 {dimension_numbers = #tpu.dot_dimension_numbers<[1], [0], [0], [1], [0, 0, 1, 1], [], []>} : vector<256x256xf32>, vector<256x128xf32>, vector<256x128xf32> -> vector<256x128xf32>
    %30 = arith.addf %1, %29 : vector<256x128xf32>
    %c3_i32 = arith.constant 3 : i32
    %31 = arith.mulf %5, %30 : vector<256x128xf32>
    %cst_21 = arith.constant dense<0.000000e+00> : vector<256x128xf32>
    %32 = tpu.matmul %0, %31, %cst_21 {dimension_numbers = #tpu.dot_dimension_numbers<[1], [0], [0], [1], [0, 0, 1, 1], [], []>} : vector<256x256xf32>, vector<256x128xf32>, vector<256x128xf32> -> vector<256x128xf32>
    %33 = arith.addf %1, %32 : vector<256x128xf32>
    %c0_22 = arith.constant 0 : index
    %c0_23 = arith.constant 0 : index
    %34 = vector.load %arg6[%c0_22, %c0_23] : memref<256x128xf32, #tpu.memory_space<vmem>>, vector<256x128xf32>
    tpu.vector_store %arg6[%c0_22, %c0_23], %33 {strides = array<i32>} : memref<256x128xf32, #tpu.memory_space<vmem>>, vector<256x128xf32>,
    return
  }
  func.func @transform_0(%arg0: i32) -> (i32, i32) {
    %c0_i32 = arith.constant 0 : i32
    %c0_i32_0 = arith.constant 0 : i32
    %c0_i32_1 = arith.constant 0 : i32
    return %c0_i32, %c0_i32_0 : i32, i32
  }
  func.func @transform_1(%arg0: i32) -> (i32, i32) {
    %c0_i32 = arith.constant 0 : i32
    %c0_i32_0 = arith.constant 0 : i32
    return %c0_i32, %arg0 : i32, i32
  }
  func.func @transform_2(%arg0: i32) -> (i32, i32) {
    %c0_i32 = arith.constant 0 : i32
    %c0_i32_0 = arith.constant 0 : i32
    return %c0_i32, %arg0 : i32, i32
  }
  func.func @transform_3(%arg0: i32) -> (i32, i32) {
    %c0_i32 = arith.constant 0 : i32
    %c0_i32_0 = arith.constant 0 : i32
    return %c0_i32, %arg0 : i32, i32
  }
  func.func @transform_4(%arg0: i32) -> (i32, i32) {
    %c0_i32 = arith.constant 0 : i32
    %c0_i32_0 = arith.constant 0 : i32
    return %c0_i32, %arg0 : i32, i32
  }
  func.func @transform_5(%arg0: i32) -> (i32, i32) {
    %c0_i32 = arith.constant 0 : i32
    %c0_i32_0 = arith.constant 0 : i32
    return %c0_i32, %arg0 : i32, i32
  }
  func.func @transform_6(%arg0: i32) -> (i32, i32, i32) {
    %c0_i32 = arith.constant 0 : i32
    %c0_i32_0 = arith.constant 0 : i32
    %c0_i32_1 = arith.constant 0 : i32
    return %arg0, %c0_i32, %c0_i32_0 : i32, i32, i32
  }
  func.func @transform_7(%arg0: i32) -> (i32, i32, i32) {
    %c0_i32 = arith.constant 0 : i32
    %c0_i32_0 = arith.constant 0 : i32
    %c0_i32_1 = arith.constant 0 : i32
    return %arg0, %c0_i32, %c0_i32_0 : i32, i32, i32
  }
}

</mosaic_0001>

<llo_original>
// kernel: mul.21
$region0: #{mul.21}
  #allocation0 [shape = 's32[1]{0}', space=sflag, size = 0x4, scoped, tag = 'scoped memory for mul.21']
  %s0 = inlined_call_operand.vmem [shape: f32[256,256], index: 0, kind: input, shape index: {}]
  %s1 = inlined_call_operand.vmem [shape: f32[256,256], index: 1, kind: input, shape index: {}]
  %s2 = inlined_call_operand.vmem [shape: f32[256,256], index: 2, kind: output, shape index: {}]
  %v3 = vld [vmem:[%s0] sm:$0xff]
  %v4 = vld [vmem:[%s1] sm:$0xff]
  %5 = xla_tuple %v3, %v4
  %6 = xla_tuple %5
  %v7 = vmul.f32 %v3, %v4
  %8 = xla_tuple %v7
  %9 = vst [vmem:[%s2] sm:$0xff] %v7
  %s10 = scalar_lea.vmem %s0, 16
  %v11 = vld [vmem:[%s10] sm:$0xff]
  %s12 = scalar_lea.vmem %s1, 16
  %v13 = vld [vmem:[%s12] sm:$0xff]
  %14 = xla_tuple %v11, %v13
  %15 = xla_tuple %14
  %v16 = vmul.f32 %v11, %v13
  %17 = xla_tuple %v16
  %s18 = scalar_lea.vmem %s2, 16
  %19 = vst [vmem:[%s18] sm:$0xff] %v16
  %s20 = scalar_lea.vmem %s0, 32
  %v21 = vld [vmem:[%s20] sm:$0xff]
  %s22 = scalar_lea.vmem %s1, 32
  %v23 = vld [vmem:[%s22] sm:$0xff]
  %24 = xla_tuple %v21, %v23
  %25 = xla_tuple %24
  %v26 = vmul.f32 %v21, %v23
  %27 = xla_tuple %v26
  %s28 = scalar_lea.vmem %s2, 32
  %29 = vst [vmem:[%s28] sm:$0xff] %v26
  %s30 = scalar_lea.vmem %s0, 48
  %v31 = vld [vmem:[%s30] sm:$0xff]
  %s32 = scalar_lea.vmem %s1, 48
  %v33 = vld [vmem:[%s32] sm:$0xff]
  %34 = xla_tuple %v31, %v33
  %35 = xla_tuple %34
  %v36 = vmul.f32 %v31, %v33
  %37 = xla_tuple %v36
  %s38 = scalar_lea.vmem %s2, 48
  %39 = vst [vmem:[%s38] sm:$0xff] %v36
  %s40 = scalar_lea.vmem %s0, 64
  %v41 = vld [vmem:[%s40] sm:$0xff]
  %s42 = scalar_lea.vmem %s1, 64
  %v43 = vld [vmem:[%s42] sm:$0xff]
  %44 = xla_tuple %v41, %v43
  %45 = xla_tuple %44
  %v46 = vmul.f32 %v41, %v43
  %47 = xla_tuple %v46
  %s48 = scalar_lea.vmem %s2, 64
  %49 = vst [vmem:[%s48] sm:$0xff] %v46
  %s50 = scalar_lea.vmem %s0, 80
  %v51 = vld [vmem:[%s50] sm:$0xff]
  %s52 = scalar_lea.vmem %s1, 80
  %v53 = vld [vmem:[%s52] sm:$0xff]
  %54 = xla_tuple %v51, %v53
  %55 = xla_tuple %54
  %v56 = vmul.f32 %v51, %v53
  %57 = xla_tuple %v56
  %s58 = scalar_lea.vmem %s2, 80
  %59 = vst [vmem:[%s58] sm:$0xff] %v56
  %s60 = scalar_lea.vmem %s0, 96
  %v61 = vld [vmem:[%s60] sm:$0xff]
  %s62 = scalar_lea.vmem %s1, 96
  %v63 = vld [vmem:[%s62] sm:$0xff]
  %64 = xla_tuple %v61, %v63
  %65 = xla_tuple %64
  %v66 = vmul.f32 %v61, %v63
  %67 = xla_tuple %v66
  %s68 = scalar_lea.vmem %s2, 96
  %69 = vst [vmem:[%s68] sm:$0xff] %v66
  %s70 = scalar_lea.vmem %s0, 112
  %v71 = vld [vmem:[%s70] sm:$0xff]
  %s72 = scalar_lea.vmem %s1, 112
  %v73 = vld [vmem:[%s72] sm:$0xff]
  %74 = xla_tuple %v71, %v73
  %75 = xla_tuple %74
  %v76 = vmul.f32 %v71, %v73
  %77 = xla_tuple %v76
  %s78 = scalar_lea.vmem %s2, 112
  %79 = vst [vmem:[%s78] sm:$0xff] %v76
  %s80 = scalar_lea.vmem %s0, 128
  %v81 = vld [vmem:[%s80] sm:$0xff]
  %s82 = scalar_lea.vmem %s1, 128
  %v83 = vld [vmem:[%s82] sm:$0xff]
  %84 = xla_tuple %v81, %v83
  %85 = xla_tuple %84
  %v86 = vmul.f32 %v81, %v83
  %87 = xla_tuple %v86
  %s88 = scalar_lea.vmem %s2, 128
  %89 = vst [vmem:[%s88] sm:$0xff] %v86
  %s90 = scalar_lea.vmem %s0, 144
  %v91 = vld [vmem:[%s90] sm:$0xff]
  %s92 = scalar_lea.vmem %s1, 144
  %v93 = vld [vmem:[%s92] sm:$0xff]
  %94 = xla_tuple %v91, %v93
  %95 = xla_tuple %94
  %v96 = vmul.f32 %v91, %v93
  %97 = xla_tuple %v96
  %s98 = scalar_lea.vmem %s2, 144
  %99 = vst [vmem:[%s98] sm:$0xff] %v96
  %s100 = scalar_lea.vmem %s0, 160
  %v101 = vld [vmem:[%s100] sm:$0xff]
  %s102 = scalar_lea.vmem %s1, 160
  %v103 = vld [vmem:[%s102] sm:$0xff]
  %104 = xla_tuple %v101, %v103
  %105 = xla_tuple %104
  %v106 = vmul.f32 %v101, %v103
  %107 = xla_tuple %v106
  %s108 = scalar_lea.vmem %s2, 160
  %109 = vst [vmem:[%s108] sm:$0xff] %v106
  %s110 = scalar_lea.vmem %s0, 176
  %v111 = vld [vmem:[%s110] sm:$0xff]
  %s112 = scalar_lea.vmem %s1, 176
  %v113 = vld [vmem:[%s112] sm:$0xff]
  %114 = xla_tuple %v111, %v113
  %115 = xla_tuple %114
  %v116 = vmul.f32 %v111, %v113
  %117 = xla_tuple %v116
  %s118 = scalar_lea.vmem %s2, 176
  %119 = vst [vmem:[%s118] sm:$0xff] %v116
  %s120 = scalar_lea.vmem %s0, 192
  %v121 = vld [vmem:[%s120] sm:$0xff]
  %s122 = scalar_lea.vmem %s1, 192
  %v123 = vld [vmem:[%s122] sm:$0xff]
  %124 = xla_tuple %v121, %v123
  %125 = xla_tuple %124
  %v126 = vmul.f32 %v121, %v123
  %127 = xla_tuple %v126
  %s128 = scalar_lea.vmem %s2, 192
  %129 = vst [vmem:[%s128] sm:$0xff] %v126
  %s130 = scalar_lea.vmem %s0, 208
  %v131 = vld [vmem:[%s130] sm:$0xff]
  %s132 = scalar_lea.vmem %s1, 208
  %v133 = vld [vmem:[%s132] sm:$0xff]
  %134 = xla_tuple %v131, %v133
  %135 = xla_tuple %134
  %v136 = vmul.f32 %v131, %v133
  %137 = xla_tuple %v136
  %s138 = scalar_lea.vmem %s2, 208
  %139 = vst [vmem:[%s138] sm:$0xff] %v136
  %s140 = scalar_lea.vmem %s0, 224
  %v141 = vld [vmem:[%s140] sm:$0xff]
  %s142 = scalar_lea.vmem %s1, 224
  %v143 = vld [vmem:[%s142] sm:$0xff]
  %144 = xla_tuple %v141, %v143
  %145 = xla_tuple %144
  %v146 = vmul.f32 %v141, %v143
  %147 = xla_tuple %v146
  %s148 = scalar_lea.vmem %s2, 224
  %149 = vst [vmem:[%s148] sm:$0xff] %v146
  %s150 = scalar_lea.vmem %s0, 240
  %v151 = vld [vmem:[%s150] sm:$0xff]
  %s152 = scalar_lea.vmem %s1, 240
  %v153 = vld [vmem:[%s152] sm:$0xff]
  %154 = xla_tuple %v151, %v153
  %155 = xla_tuple %154
  %v156 = vmul.f32 %v151, %v153
  %157 = xla_tuple %v156
  %s158 = scalar_lea.vmem %s2, 240
  %159 = vst [vmem:[%s158] sm:$0xff] %v156
  %s160 = scalar_lea.vmem %s0, 256
  %v161 = vld [vmem:[%s160] sm:$0xff]
  %s162 = scalar_lea.vmem %s1, 256
  %v163 = vld [vmem:[%s162] sm:$0xff]
  %164 = xla_tuple %v161, %v163
  %165 = xla_tuple %164
  %v166 = vmul.f32 %v161, %v163
  %167 = xla_tuple %v166
  %s168 = scalar_lea.vmem %s2, 256
  %169 = vst [vmem:[%s168] sm:$0xff] %v166
  %s170 = scalar_lea.vmem %s0, 272
  %v171 = vld [vmem:[%s170] sm:$0xff]
  %s172 = scalar_lea.vmem %s1, 272
  %v173 = vld [vmem:[%s172] sm:$0xff]
  %174 = xla_tuple %v171, %v173
  %175 = xla_tuple %174
  %v176 = vmul.f32 %v171, %v173
  %177 = xla_tuple %v176
  %s178 = scalar_lea.vmem %s2, 272
  %179 = vst [vmem:[%s178] sm:$0xff] %v176
  %s180 = scalar_lea.vmem %s0, 288
  %v181 = vld [vmem:[%s180] sm:$0xff]
  %s182 = scalar_lea.vmem %s1, 288
  %v183 = vld [vmem:[%s182] sm:$0xff]
  %184 = xla_tuple %v181, %v183
  %185 = xla_tuple %184
  %v186 = vmul.f32 %v181, %v183
  %187 = xla_tuple %v186
  %s188 = scalar_lea.vmem %s2, 288
  %189 = vst [vmem:[%s188] sm:$0xff] %v186
  %s190 = scalar_lea.vmem %s0, 304
  %v191 = vld [vmem:[%s190] sm:$0xff]
  %s192 = scalar_lea.vmem %s1, 304
  %v193 = vld [vmem:[%s192] sm:$0xff]
  %194 = xla_tuple %v191, %v193
  %195 = xla_tuple %194
  %v196 = vmul.f32 %v191, %v193
  %197 = xla_tuple %v196
  %s198 = scalar_lea.vmem %s2, 304
  %199 = vst [vmem:[%s198] sm:$0xff] %v196
  %s200 = scalar_lea.vmem %s0, 320
  %v201 = vld [vmem:[%s200] sm:$0xff]
  %s202 = scalar_lea.vmem %s1, 320
  %v203 = vld [vmem:[%s202] sm:$0xff]
  %204 = xla_tuple %v201, %v203
  %205 = xla_tuple %204
  %v206 = vmul.f32 %v201, %v203
  %207 = xla_tuple %v206
  %s208 = scalar_lea.vmem %s2, 320
  %209 = vst [vmem:[%s208] sm:$0xff] %v206
  %s210 = scalar_lea.vmem %s0, 336
  %v211 = vld [vmem:[%s210] sm:$0xff]
  %s212 = scalar_lea.vmem %s1, 336
  %v213 = vld [vmem:[%s212] sm:$0xff]
  %214 = xla_tuple %v211, %v213
  %215 = xla_tuple %214
  %v216 = vmul.f32 %v211, %v213
  %217 = xla_tuple %v216
  %s218 = scalar_lea.vmem %s2, 336
  %219 = vst [vmem:[%s218] sm:$0xff] %v216
  %s220 = scalar_lea.vmem %s0, 352
  %v221 = vld [vmem:[%s220] sm:$0xff]
  %s222 = scalar_lea.vmem %s1, 352
  %v223 = vld [vmem:[%s222] sm:$0xff]
  %224 = xla_tuple %v221, %v223
  %225 = xla_tuple %224
  %v226 = vmul.f32 %v221, %v223
  %227 = xla_tuple %v226
  %s228 = scalar_lea.vmem %s2, 352
  %229 = vst [vmem:[%s228] sm:$0xff] %v226
  %s230 = scalar_lea.vmem %s0, 368
  %v231 = vld [vmem:[%s230] sm:$0xff]
  %s232 = scalar_lea.vmem %s1, 368
  %v233 = vld [vmem:[%s232] sm:$0xff]
  %234 = xla_tuple %v231, %v233
  %235 = xla_tuple %234
  %v236 = vmul.f32 %v231, %v233
  %237 = xla_tuple %v236
  %s238 = scalar_lea.vmem %s2, 368
  %239 = vst [vmem:[%s238] sm:$0xff] %v236
  %s240 = scalar_lea.vmem %s0, 384
  %v241 = vld [vmem:[%s240] sm:$0xff]
  %s242 = scalar_lea.vmem %s1, 384
  %v243 = vld [vmem:[%s242] sm:$0xff]
  %244 = xla_tuple %v241, %v243
  %245 = xla_tuple %244
  %v246 = vmul.f32 %v241, %v243
  %247 = xla_tuple %v246
  %s248 = scalar_lea.vmem %s2, 384
  %249 = vst [vmem:[%s248] sm:$0xff] %v246
  %s250 = scalar_lea.vmem %s0, 400
  %v251 = vld [vmem:[%s250] sm:$0xff]
  %s252 = scalar_lea.vmem %s1, 400
  %v253 = vld [vmem:[%s252] sm:$0xff]
  %254 = xla_tuple %v251, %v253
  %255 = xla_tuple %254
  %v256 = vmul.f32 %v251, %v253
  %257 = xla_tuple %v256
  %s258 = scalar_lea.vmem %s2, 400
  %259 = vst [vmem:[%s258] sm:$0xff] %v256
  %s260 = scalar_lea.vmem %s0, 416
  %v261 = vld [vmem:[%s260] sm:$0xff]
  %s262 = scalar_lea.vmem %s1, 416
  %v263 = vld [vmem:[%s262] sm:$0xff]
  %264 = xla_tuple %v261, %v263
  %265 = xla_tuple %264
  %v266 = vmul.f32 %v261, %v263
  %267 = xla_tuple %v266
  %s268 = scalar_lea.vmem %s2, 416
  %269 = vst [vmem:[%s268] sm:$0xff] %v266
  %s270 = scalar_lea.vmem %s0, 432
  %v271 = vld [vmem:[%s270] sm:$0xff]
  %s272 = scalar_lea.vmem %s1, 432
  %v273 = vld [vmem:[%s272] sm:$0xff]
  %274 = xla_tuple %v271, %v273
  %275 = xla_tuple %274
  %v276 = vmul.f32 %v271, %v273
  %277 = xla_tuple %v276
  %s278 = scalar_lea.vmem %s2, 432
  %279 = vst [vmem:[%s278] sm:$0xff] %v276
  %s280 = scalar_lea.vmem %s0, 448
  %v281 = vld [vmem:[%s280] sm:$0xff]
  %s282 = scalar_lea.vmem %s1, 448
  %v283 = vld [vmem:[%s282] sm:$0xff]
  %284 = xla_tuple %v281, %v283
  %285 = xla_tuple %284
  %v286 = vmul.f32 %v281, %v283
  %287 = xla_tuple %v286
  %s288 = scalar_lea.vmem %s2, 448
  %289 = vst [vmem:[%s288] sm:$0xff] %v286
  %s290 = scalar_lea.vmem %s0, 464
  %v291 = vld [vmem:[%s290] sm:$0xff]
  %s292 = scalar_lea.vmem %s1, 464
  %v293 = vld [vmem:[%s292] sm:$0xff]
  %294 = xla_tuple %v291, %v293
  %295 = xla_tuple %294
  %v296 = vmul.f32 %v291, %v293
  %297 = xla_tuple %v296
  %s298 = scalar_lea.vmem %s2, 464
  %299 = vst [vmem:[%s298] sm:$0xff] %v296
  %s300 = scalar_lea.vmem %s0, 480
  %v301 = vld [vmem:[%s300] sm:$0xff]
  %s302 = scalar_lea.vmem %s1, 480
  %v303 = vld [vmem:[%s302] sm:$0xff]
  %304 = xla_tuple %v301, %v303
  %305 = xla_tuple %304
  %v306 = vmul.f32 %v301, %v303
  %307 = xla_tuple %v306
  %s308 = scalar_lea.vmem %s2, 480
  %309 = vst [vmem:[%s308] sm:$0xff] %v306
  %s310 = scalar_lea.vmem %s0, 496
  %v311 = vld [vmem:[%s310] sm:$0xff]
  %s312 = scalar_lea.vmem %s1, 496
  %v313 = vld [vmem:[%s312] sm:$0xff]
  %314 = xla_tuple %v311, %v313
  %315 = xla_tuple %314
  %v316 = vmul.f32 %v311, %v313
  %317 = xla_tuple %v316
  %s318 = scalar_lea.vmem %s2, 496
  %319 = vst [vmem:[%s318] sm:$0xff] %v316
  %s320 = scalar_lea.vmem %s0, 8
  %v321 = vld [vmem:[%s320] sm:$0xff]
  %s322 = scalar_lea.vmem %s1, 8
  %v323 = vld [vmem:[%s322] sm:$0xff]
  %324 = xla_tuple %v321, %v323
  %325 = xla_tuple %324
  %v326 = vmul.f32 %v321, %v323
  %327 = xla_tuple %v326
  %s328 = scalar_lea.vmem %s2, 8
  %329 = vst [vmem:[%s328] sm:$0xff] %v326
  %s330 = scalar_lea.vmem %s0, 24
  %v331 = vld [vmem:[%s330] sm:$0xff]
  %s332 = scalar_lea.vmem %s1, 24
  %v333 = vld [vmem:[%s332] sm:$0xff]
  %334 = xla_tuple %v331, %v333
  %335 = xla_tuple %334
  %v336 = vmul.f32 %v331, %v333
  %337 = xla_tuple %v336
  %s338 = scalar_lea.vmem %s2, 24
  %339 = vst [vmem:[%s338] sm:$0xff] %v336
  %s340 = scalar_lea.vmem %s0, 40
  %v341 = vld [vmem:[%s340] sm:$0xff]
  %s342 = scalar_lea.vmem %s1, 40
  %v343 = vld [vmem:[%s342] sm:$0xff]
  %344 = xla_tuple %v341, %v343
  %345 = xla_tuple %344
  %v346 = vmul.f32 %v341, %v343
  %347 = xla_tuple %v346
  %s348 = scalar_lea.vmem %s2, 40
  %349 = vst [vmem:[%s348] sm:$0xff] %v346
  %s350 = scalar_lea.vmem %s0, 56
  %v351 = vld [vmem:[%s350] sm:$0xff]
  %s352 = scalar_lea.vmem %s1, 56
  %v353 = vld [vmem:[%s352] sm:$0xff]
  %354 = xla_tuple %v351, %v353
  %355 = xla_tuple %354
  %v356 = vmul.f32 %v351, %v353
  %357 = xla_tuple %v356
  %s358 = scalar_lea.vmem %s2, 56
  %359 = vst [vmem:[%s358] sm:$0xff] %v356
  %s360 = scalar_lea.vmem %s0, 72
  %v361 = vld [vmem:[%s360] sm:$0xff]
  %s362 = scalar_lea.vmem %s1, 72
  %v363 = vld [vmem:[%s362] sm:$0xff]
  %364 = xla_tuple %v361, %v363
  %365 = xla_tuple %364
  %v366 = vmul.f32 %v361, %v363
  %367 = xla_tuple %v366
  %s368 = scalar_lea.vmem %s2, 72
  %369 = vst [vmem:[%s368] sm:$0xff] %v366
  %s370 = scalar_lea.vmem %s0, 88
  %v371 = vld [vmem:[%s370] sm:$0xff]
  %s372 = scalar_lea.vmem %s1, 88
  %v373 = vld [vmem:[%s372] sm:$0xff]
  %374 = xla_tuple %v371, %v373
  %375 = xla_tuple %374
  %v376 = vmul.f32 %v371, %v373
  %377 = xla_tuple %v376
  %s378 = scalar_lea.vmem %s2, 88
  %379 = vst [vmem:[%s378] sm:$0xff] %v376
  %s380 = scalar_lea.vmem %s0, 104
  %v381 = vld [vmem:[%s380] sm:$0xff]
  %s382 = scalar_lea.vmem %s1, 104
  %v383 = vld [vmem:[%s382] sm:$0xff]
  %384 = xla_tuple %v381, %v383
  %385 = xla_tuple %384
  %v386 = vmul.f32 %v381, %v383
  %387 = xla_tuple %v386
  %s388 = scalar_lea.vmem %s2, 104
  %389 = vst [vmem:[%s388] sm:$0xff] %v386
  %s390 = scalar_lea.vmem %s0, 120
  %v391 = vld [vmem:[%s390] sm:$0xff]
  %s392 = scalar_lea.vmem %s1, 120
  %v393 = vld [vmem:[%s392] sm:$0xff]
  %394 = xla_tuple %v391, %v393
  %395 = xla_tuple %394
  %v396 = vmul.f32 %v391, %v393
  %397 = xla_tuple %v396
  %s398 = scalar_lea.vmem %s2, 120
  %399 = vst [vmem:[%s398] sm:$0xff] %v396
  %s400 = scalar_lea.vmem %s0, 136
  %v401 = vld [vmem:[%s400] sm:$0xff]
  %s402 = scalar_lea.vmem %s1, 136
  %v403 = vld [vmem:[%s402] sm:$0xff]
  %404 = xla_tuple %v401, %v403
  %405 = xla_tuple %404
  %v406 = vmul.f32 %v401, %v403
  %407 = xla_tuple %v406
  %s408 = scalar_lea.vmem %s2, 136
  %409 = vst [vmem:[%s408] sm:$0xff] %v406
  %s410 = scalar_lea.vmem %s0, 152
  %v411 = vld [vmem:[%s410] sm:$0xff]
  %s412 = scalar_lea.vmem %s1, 152
  %v413 = vld [vmem:[%s412] sm:$0xff]
  %414 = xla_tuple %v411, %v413
  %415 = xla_tuple %414
  %v416 = vmul.f32 %v411, %v413
  %417 = xla_tuple %v416
  %s418 = scalar_lea.vmem %s2, 152
  %419 = vst [vmem:[%s418] sm:$0xff] %v416
  %s420 = scalar_lea.vmem %s0, 168
  %v421 = vld [vmem:[%s420] sm:$0xff]
  %s422 = scalar_lea.vmem %s1, 168
  %v423 = vld [vmem:[%s422] sm:$0xff]
  %424 = xla_tuple %v421, %v423
  %425 = xla_tuple %424
  %v426 = vmul.f32 %v421, %v423
  %427 = xla_tuple %v426
  %s428 = scalar_lea.vmem %s2, 168
  %429 = vst [vmem:[%s428] sm:$0xff] %v426
  %s430 = scalar_lea.vmem %s0, 184
  %v431 = vld [vmem:[%s430] sm:$0xff]
  %s432 = scalar_lea.vmem %s1, 184
  %v433 = vld [vmem:[%s432] sm:$0xff]
  %434 = xla_tuple %v431, %v433
  %435 = xla_tuple %434
  %v436 = vmul.f32 %v431, %v433
  %437 = xla_tuple %v436
  %s438 = scalar_lea.vmem %s2, 184
  %439 = vst [vmem:[%s438] sm:$0xff] %v436
  %s440 = scalar_lea.vmem %s0, 200
  %v441 = vld [vmem:[%s440] sm:$0xff]
  %s442 = scalar_lea.vmem %s1, 200
  %v443 = vld [vmem:[%s442] sm:$0xff]
  %444 = xla_tuple %v441, %v443
  %445 = xla_tuple %444
  %v446 = vmul.f32 %v441, %v443
  %447 = xla_tuple %v446
  %s448 = scalar_lea.vmem %s2, 200
  %449 = vst [vmem:[%s448] sm:$0xff] %v446
  %s450 = scalar_lea.vmem %s0, 216
  %v451 = vld [vmem:[%s450] sm:$0xff]
  %s452 = scalar_lea.vmem %s1, 216
  %v453 = vld [vmem:[%s452] sm:$0xff]
  %454 = xla_tuple %v451, %v453
  %455 = xla_tuple %454
  %v456 = vmul.f32 %v451, %v453
  %457 = xla_tuple %v456
  %s458 = scalar_lea.vmem %s2, 216
  %459 = vst [vmem:[%s458] sm:$0xff] %v456
  %s460 = scalar_lea.vmem %s0, 232
  %v461 = vld [vmem:[%s460] sm:$0xff]
  %s462 = scalar_lea.vmem %s1, 232
  %v463 = vld [vmem:[%s462] sm:$0xff]
  %464 = xla_tuple %v461, %v463
  %465 = xla_tuple %464
  %v466 = vmul.f32 %v461, %v463
  %467 = xla_tuple %v466
  %s468 = scalar_lea.vmem %s2, 232
  %469 = vst [vmem:[%s468] sm:$0xff] %v466
  %s470 = scalar_lea.vmem %s0, 248
  %v471 = vld [vmem:[%s470] sm:$0xff]
  %s472 = scalar_lea.vmem %s1, 248
  %v473 = vld [vmem:[%s472] sm:$0xff]
  %474 = xla_tuple %v471, %v473
  %475 = xla_tuple %474
  %v476 = vmul.f32 %v471, %v473
  %477 = xla_tuple %v476
  %s478 = scalar_lea.vmem %s2, 248
  %479 = vst [vmem:[%s478] sm:$0xff] %v476
  %s480 = scalar_lea.vmem %s0, 264
  %v481 = vld [vmem:[%s480] sm:$0xff]
  %s482 = scalar_lea.vmem %s1, 264
  %v483 = vld [vmem:[%s482] sm:$0xff]
  %484 = xla_tuple %v481, %v483
  %485 = xla_tuple %484
  %v486 = vmul.f32 %v481, %v483
  %487 = xla_tuple %v486
  %s488 = scalar_lea.vmem %s2, 264
  %489 = vst [vmem:[%s488] sm:$0xff] %v486
  %s490 = scalar_lea.vmem %s0, 280
  %v491 = vld [vmem:[%s490] sm:$0xff]
  %s492 = scalar_lea.vmem %s1, 280
  %v493 = vld [vmem:[%s492] sm:$0xff]
  %494 = xla_tuple %v491, %v493
  %495 = xla_tuple %494
  %v496 = vmul.f32 %v491, %v493
  %497 = xla_tuple %v496
  %s498 = scalar_lea.vmem %s2, 280
  %499 = vst [vmem:[%s498] sm:$0xff] %v496
  %s500 = scalar_lea.vmem %s0, 296
  %v501 = vld [vmem:[%s500] sm:$0xff]
  %s502 = scalar_lea.vmem %s1, 296
  %v503 = vld [vmem:[%s502] sm:$0xff]
  %504 = xla_tuple %v501, %v503
  %505 = xla_tuple %504
  %v506 = vmul.f32 %v501, %v503
  %507 = xla_tuple %v506
  %s508 = scalar_lea.vmem %s2, 296
  %509 = vst [vmem:[%s508] sm:$0xff] %v506
  %s510 = scalar_lea.vmem %s0, 312
  %v511 = vld [vmem:[%s510] sm:$0xff]
  %s512 = scalar_lea.vmem %s1, 312
  %v513 = vld [vmem:[%s512] sm:$0xff]
  %514 = xla_tuple %v511, %v513
  %515 = xla_tuple %514
  %v516 = vmul.f32 %v511, %v513
  %517 = xla_tuple %v516
  %s518 = scalar_lea.vmem %s2, 312
  %519 = vst [vmem:[%s518] sm:$0xff] %v516
  %s520 = scalar_lea.vmem %s0, 328
  %v521 = vld [vmem:[%s520] sm:$0xff]
  %s522 = scalar_lea.vmem %s1, 328
  %v523 = vld [vmem:[%s522] sm:$0xff]
  %524 = xla_tuple %v521, %v523
  %525 = xla_tuple %524
  %v526 = vmul.f32 %v521, %v523
  %527 = xla_tuple %v526
  %s528 = scalar_lea.vmem %s2, 328
  %529 = vst [vmem:[%s528] sm:$0xff] %v526
  %s530 = scalar_lea.vmem %s0, 344
  %v531 = vld [vmem:[%s530] sm:$0xff]
  %s532 = scalar_lea.vmem %s1, 344
  %v533 = vld [vmem:[%s532] sm:$0xff]
  %534 = xla_tuple %v531, %v533
  %535 = xla_tuple %534
  %v536 = vmul.f32 %v531, %v533
  %537 = xla_tuple %v536
  %s538 = scalar_lea.vmem %s2, 344
  %539 = vst [vmem:[%s538] sm:$0xff] %v536
  %s540 = scalar_lea.vmem %s0, 360
  %v541 = vld [vmem:[%s540] sm:$0xff]
  %s542 = scalar_lea.vmem %s1, 360
  %v543 = vld [vmem:[%s542] sm:$0xff]
  %544 = xla_tuple %v541, %v543
  %545 = xla_tuple %544
  %v546 = vmul.f32 %v541, %v543
  %547 = xla_tuple %v546
  %s548 = scalar_lea.vmem %s2, 360
  %549 = vst [vmem:[%s548] sm:$0xff] %v546
  %s550 = scalar_lea.vmem %s0, 376
  %v551 = vld [vmem:[%s550] sm:$0xff]
  %s552 = scalar_lea.vmem %s1, 376
  %v553 = vld [vmem:[%s552] sm:$0xff]
  %554 = xla_tuple %v551, %v553
  %555 = xla_tuple %554
  %v556 = vmul.f32 %v551, %v553
  %557 = xla_tuple %v556
  %s558 = scalar_lea.vmem %s2, 376
  %559 = vst [vmem:[%s558] sm:$0xff] %v556
  %s560 = scalar_lea.vmem %s0, 392
  %v561 = vld [vmem:[%s560] sm:$0xff]
  %s562 = scalar_lea.vmem %s1, 392
  %v563 = vld [vmem:[%s562] sm:$0xff]
  %564 = xla_tuple %v561, %v563
  %565 = xla_tuple %564
  %v566 = vmul.f32 %v561, %v563
  %567 = xla_tuple %v566
  %s568 = scalar_lea.vmem %s2, 392
  %569 = vst [vmem:[%s568] sm:$0xff] %v566
  %s570 = scalar_lea.vmem %s0, 408
  %v571 = vld [vmem:[%s570] sm:$0xff]
  %s572 = scalar_lea.vmem %s1, 408
  %v573 = vld [vmem:[%s572] sm:$0xff]
  %574 = xla_tuple %v571, %v573
  %575 = xla_tuple %574
  %v576 = vmul.f32 %v571, %v573
  %577 = xla_tuple %v576
  %s578 = scalar_lea.vmem %s2, 408
  %579 = vst [vmem:[%s578] sm:$0xff] %v576
  %s580 = scalar_lea.vmem %s0, 424
  %v581 = vld [vmem:[%s580] sm:$0xff]
  %s582 = scalar_lea.vmem %s1, 424
  %v583 = vld [vmem:[%s582] sm:$0xff]
  %584 = xla_tuple %v581, %v583
  %585 = xla_tuple %584
  %v586 = vmul.f32 %v581, %v583
  %587 = xla_tuple %v586
  %s588 = scalar_lea.vmem %s2, 424
  %589 = vst [vmem:[%s588] sm:$0xff] %v586
  %s590 = scalar_lea.vmem %s0, 440
  %v591 = vld [vmem:[%s590] sm:$0xff]
  %s592 = scalar_lea.vmem %s1, 440
  %v593 = vld [vmem:[%s592] sm:$0xff]
  %594 = xla_tuple %v591, %v593
  %595 = xla_tuple %594
  %v596 = vmul.f32 %v591, %v593
  %597 = xla_tuple %v596
  %s598 = scalar_lea.vmem %s2, 440
  %599 = vst [vmem:[%s598] sm:$0xff] %v596
  %s600 = scalar_lea.vmem %s0, 456
  %v601 = vld [vmem:[%s600] sm:$0xff]
  %s602 = scalar_lea.vmem %s1, 456
  %v603 = vld [vmem:[%s602] sm:$0xff]
  %604 = xla_tuple %v601, %v603
  %605 = xla_tuple %604
  %v606 = vmul.f32 %v601, %v603
  %607 = xla_tuple %v606
  %s608 = scalar_lea.vmem %s2, 456
  %609 = vst [vmem:[%s608] sm:$0xff] %v606
  %s610 = scalar_lea.vmem %s0, 472
  %v611 = vld [vmem:[%s610] sm:$0xff]
  %s612 = scalar_lea.vmem %s1, 472
  %v613 = vld [vmem:[%s612] sm:$0xff]
  %614 = xla_tuple %v611, %v613
  %615 = xla_tuple %614
  %v616 = vmul.f32 %v611, %v613
  %617 = xla_tuple %v616
  %s618 = scalar_lea.vmem %s2, 472
  %619 = vst [vmem:[%s618] sm:$0xff] %v616
  %s620 = scalar_lea.vmem %s0, 488
  %v621 = vld [vmem:[%s620] sm:$0xff]
  %s622 = scalar_lea.vmem %s1, 488
  %v623 = vld [vmem:[%s622] sm:$0xff]
  %624 = xla_tuple %v621, %v623
  %625 = xla_tuple %624
  %v626 = vmul.f32 %v621, %v623
  %627 = xla_tuple %v626
  %s628 = scalar_lea.vmem %s2, 488
  %629 = vst [vmem:[%s628] sm:$0xff] %v626
  %s630 = scalar_lea.vmem %s0, 504
  %v631 = vld [vmem:[%s630] sm:$0xff]
  %s632 = scalar_lea.vmem %s1, 504
  %v633 = vld [vmem:[%s632] sm:$0xff]
  %634 = xla_tuple %v631, %v633
  %635 = xla_tuple %634
  %v636 = vmul.f32 %v631, %v633
  %637 = xla_tuple %v636
  %s638 = scalar_lea.vmem %s2, 504
  %639 = vst [vmem:[%s638] sm:$0xff] %v636

// kernel: damped_interpolation_forward.1
$region0: #{damped_interpolation_forward.1}
  #allocation0 [shape = 'u32[]', space=smem, size = 0x4, offset = 0x4, fixed_abs, tag = 'smem constant byte address 0x4 - core index']
  #allocation1 [shape = 'u32[144,128]{1,0:T(1,128)}', space=vmem, size = 0x12000, scoped, tag = 'internal scratch']
  %s0 = inlined_call_operand.vmem [shape: f32[256,256], index: 0, kind: input, shape index: {}]
  %s1 = inlined_call_operand.vmem [shape: f32[256,256], index: 1, kind: input, shape index: {}]
  %s2 = inlined_call_operand.vmem [shape: f32[256,128], index: 2, kind: input, shape index: {}]
  %s3 = inlined_call_operand.vmem [shape: bf16[256,128], index: 3, kind: input, shape index: {}]
  %s4 = inlined_call_operand.vmem [shape: f32[256,128], index: 4, kind: output, shape index: {0}]
  %s5 = inlined_call_operand.vmem [shape: f32[256,128], index: 5, kind: output, shape index: {1}]
  %6 = xla_tuple %s4, %s5
  %s7 = sld [smem:[#allocation0]]
  $region34: #{damped_interpolation_forward.1} parent=0
    _
  %s9 = ssub.s32 1, %s7
  %s10 = scalar_select 0, %s9, %s7
  // Predicated region
  $region2: #{damped_interpolation_forward.1} parent=0 // pred_check
    _
  $region3: #{damped_interpolation_forward.1} parent=0 // pred_check_branch
    %12 = sbr.rel (0) target = $region5
  $region4: #{damped_interpolation_forward.1} parent=0 // pred_region
    _
  $region5: #{damped_interpolation_forward.1} parent=0 // pred_fallthru
    _
  // Predicated region
  $region6: #{damped_interpolation_forward.1} parent=0 // pred_check
    _
  $region7: #{damped_interpolation_forward.1} parent=0 // pred_check_branch
    %14 = sbr.rel (0) target = $region9
  $region8: #{damped_interpolation_forward.1} parent=0 // pred_region
    _
  $region9: #{damped_interpolation_forward.1} parent=0 // pred_fallthru
    _
  // Predicated region
  $region10: #{damped_interpolation_forward.1} parent=0 // pred_check
    _
  $region11: #{damped_interpolation_forward.1} parent=0 // pred_check_branch
    %16 = sbr.rel (0) target = $region13
  $region12: #{damped_interpolation_forward.1} parent=0 // pred_region
    _
  $region13: #{damped_interpolation_forward.1} parent=0 // pred_fallthru
    _
  // Predicated region
  $region14: #{damped_interpolation_forward.1} parent=0 // pred_check
    _
  $region15: #{damped_interpolation_forward.1} parent=0 // pred_check_branch
    %18 = sbr.rel (0) target = $region17
  $region16: #{damped_interpolation_forward.1} parent=0 // pred_region
    _
  $region17: #{damped_interpolation_forward.1} parent=0 // pred_fallthru
    _
  %v19 = vld [vmem:[%s2] sm:$0xff]
  %v20 = vld [vmem:[%s2 + $0x8] sm:$0xff]
  %v21 = vld [vmem:[%s2 + $0x10] sm:$0xff]
  %v22 = vld [vmem:[%s2 + $0x18] sm:$0xff]
  %v23 = vld [vmem:[%s2 + $0x20] sm:$0xff]
  %v24 = vld [vmem:[%s2 + $0x28] sm:$0xff]
  %v25 = vld [vmem:[%s2 + $0x30] sm:$0xff]
  %v26 = vld [vmem:[%s2 + $0x38] sm:$0xff]
  %v27 = vld [vmem:[%s2 + $0x40] sm:$0xff]
  %v28 = vld [vmem:[%s2 + $0x48] sm:$0xff]
  %v29 = vld [vmem:[%s2 + $0x50] sm:$0xff]
  %v30 = vld [vmem:[%s2 + $0x58] sm:$0xff]
  %v31 = vld [vmem:[%s2 + $0x60] sm:$0xff]
  %v32 = vld [vmem:[%s2 + $0x68] sm:$0xff]
  %v33 = vld [vmem:[%s2 + $0x70] sm:$0xff]
  %v34 = vld [vmem:[%s2 + $0x78] sm:$0xff]
  %v35 = vld [vmem:[%s2 + $0x80] sm:$0xff]
  %v36 = vld [vmem:[%s2 + $0x88] sm:$0xff]
  %v37 = vld [vmem:[%s2 + $0x90] sm:$0xff]
  %v38 = vld [vmem:[%s2 + $0x98] sm:$0xff]
  %v39 = vld [vmem:[%s2 + $0xa0] sm:$0xff]
  %v40 = vld [vmem:[%s2 + $0xa8] sm:$0xff]
  %v41 = vld [vmem:[%s2 + $0xb0] sm:$0xff]
  %v42 = vld [vmem:[%s2 + $0xb8] sm:$0xff]
  %v43 = vld [vmem:[%s2 + $0xc0] sm:$0xff]
  %v44 = vld [vmem:[%s2 + $0xc8] sm:$0xff]
  %v45 = vld [vmem:[%s2 + $0xd0] sm:$0xff]
  %v46 = vld [vmem:[%s2 + $0xd8] sm:$0xff]
  %v47 = vld [vmem:[%s2 + $0xe0] sm:$0xff]
  %v48 = vld [vmem:[%s2 + $0xe8] sm:$0xff]
  %v49 = vld [vmem:[%s2 + $0xf0] sm:$0xff]
  %v50 = vld [vmem:[%s2 + $0xf8] sm:$0xff]
  %v51 = vld [vmem:[%s3] sm:$0xf]
  %v52 = vld [vmem:[%s3 + $0x4] sm:$0xf]
  %v53 = vld [vmem:[%s3 + $0x8] sm:$0xf]
  %v54 = vld [vmem:[%s3 + $0xc] sm:$0xf]
  %v55 = vld [vmem:[%s3 + $0x10] sm:$0xf]
  %v56 = vld [vmem:[%s3 + $0x14] sm:$0xf]
  %v57 = vld [vmem:[%s3 + $0x18] sm:$0xf]
  %v58 = vld [vmem:[%s3 + $0x1c] sm:$0xf]
  %v59 = vld [vmem:[%s3 + $0x20] sm:$0xf]
  %v60 = vld [vmem:[%s3 + $0x24] sm:$0xf]
  %v61 = vld [vmem:[%s3 + $0x28] sm:$0xf]
  %v62 = vld [vmem:[%s3 + $0x2c] sm:$0xf]
  %v63 = vld [vmem:[%s3 + $0x30] sm:$0xf]
  %v64 = vld [vmem:[%s3 + $0x34] sm:$0xf]
  %v65 = vld [vmem:[%s3 + $0x38] sm:$0xf]
  %v66 = vld [vmem:[%s3 + $0x3c] sm:$0xf]
  %v67 = vld [vmem:[%s3 + $0x40] sm:$0xf]
  %v68 = vld [vmem:[%s3 + $0x44] sm:$0xf]
  %v69 = vld [vmem:[%s3 + $0x48] sm:$0xf]
  %v70 = vld [vmem:[%s3 + $0x4c] sm:$0xf]
  %v71 = vld [vmem:[%s3 + $0x50] sm:$0xf]
  %v72 = vld [vmem:[%s3 + $0x54] sm:$0xf]
  %v73 = vld [vmem:[%s3 + $0x58] sm:$0xf]
  %v74 = vld [vmem:[%s3 + $0x5c] sm:$0xf]
  %v75 = vld [vmem:[%s3 + $0x60] sm:$0xf]
  %v76 = vld [vmem:[%s3 + $0x64] sm:$0xf]
  %v77 = vld [vmem:[%s3 + $0x68] sm:$0xf]
  %v78 = vld [vmem:[%s3 + $0x6c] sm:$0xf]
  %v79 = vld [vmem:[%s3 + $0x70] sm:$0xf]
  %v80 = vld [vmem:[%s3 + $0x74] sm:$0xf]
  %v81 = vld [vmem:[%s3 + $0x78] sm:$0xf]
  %v82 = vld [vmem:[%s3 + $0x7c] sm:$0xf]
  %v83 = vunpack.c.l.bf16 %v51
  %v84 = vunpack.c.l.bf16 %v52
  %v85 = vunpack.c.l.bf16 %v53
  %v86 = vunpack.c.l.bf16 %v54
  %v87 = vunpack.c.l.bf16 %v55
  %v88 = vunpack.c.l.bf16 %v56
  %v89 = vunpack.c.l.bf16 %v57
  %v90 = vunpack.c.l.bf16 %v58
  %v91 = vunpack.c.l.bf16 %v59
  %v92 = vunpack.c.l.bf16 %v60
  %v93 = vunpack.c.l.bf16 %v61
  %v94 = vunpack.c.l.bf16 %v62
  %v95 = vunpack.c.l.bf16 %v63
  %v96 = vunpack.c.l.bf16 %v64
  %v97 = vunpack.c.l.bf16 %v65
  %v98 = vunpack.c.l.bf16 %v66
  %v99 = vunpack.c.l.bf16 %v67
  %v100 = vunpack.c.l.bf16 %v68
  %v101 = vunpack.c.l.bf16 %v69
  %v102 = vunpack.c.l.bf16 %v70
  %v103 = vunpack.c.l.bf16 %v71
  %v104 = vunpack.c.l.bf16 %v72
  %v105 = vunpack.c.l.bf16 %v73
  %v106 = vunpack.c.l.bf16 %v74
  %v107 = vunpack.c.l.bf16 %v75
  %v108 = vunpack.c.l.bf16 %v76
  %v109 = vunpack.c.l.bf16 %v77
  %v110 = vunpack.c.l.bf16 %v78
  %v111 = vunpack.c.l.bf16 %v79
  %v112 = vunpack.c.l.bf16 %v80
  %v113 = vunpack.c.l.bf16 %v81
  %v114 = vunpack.c.l.bf16 %v82
  %v115 = vmul.f32 %v83, %v19
  %v116 = vmul.f32 %v84, %v20
  %v117 = vmul.f32 %v85, %v21
  %v118 = vmul.f32 %v86, %v22
  %v119 = vmul.f32 %v87, %v23
  %v120 = vmul.f32 %v88, %v24
  %v121 = vmul.f32 %v89, %v25
  %v122 = vmul.f32 %v90, %v26
  %v123 = vmul.f32 %v91, %v27
  %v124 = vmul.f32 %v92, %v28
  %v125 = vmul.f32 %v93, %v29
  %v126 = vmul.f32 %v94, %v30
  %v127 = vmul.f32 %v95, %v31
  %v128 = vmul.f32 %v96, %v32
  %v129 = vmul.f32 %v97, %v33
  %v130 = vmul.f32 %v98, %v34
  %v131 = vmul.f32 %v99, %v35
  %v132 = vmul.f32 %v100, %v36
  %v133 = vmul.f32 %v101, %v37
  %v134 = vmul.f32 %v102, %v38
  %v135 = vmul.f32 %v103, %v39
  %v136 = vmul.f32 %v104, %v40
  %v137 = vmul.f32 %v105, %v41
  %v138 = vmul.f32 %v106, %v42
  %v139 = vmul.f32 %v107, %v43
  %v140 = vmul.f32 %v108, %v44
  %v141 = vmul.f32 %v109, %v45
  %v142 = vmul.f32 %v110, %v46
  %v143 = vmul.f32 %v111, %v47
  %v144 = vmul.f32 %v112, %v48
  %v145 = vmul.f32 %v113, %v49
  %v146 = vmul.f32 %v114, %v50
  %v147 = vld [vmem:[%s1] sm:$0xff]
  %v148 = vld [vmem:[%s1 + $0x8] sm:$0xff]
  %v149 = vld [vmem:[%s1 + $0x10] sm:$0xff]
  %v150 = vld [vmem:[%s1 + $0x18] sm:$0xff]
  %v151 = vld [vmem:[%s1 + $0x20] sm:$0xff]
  %v152 = vld [vmem:[%s1 + $0x28] sm:$0xff]
  %v153 = vld [vmem:[%s1 + $0x30] sm:$0xff]
  %v154 = vld [vmem:[%s1 + $0x38] sm:$0xff]
  %v155 = vld [vmem:[%s1 + $0x40] sm:$0xff]
  %v156 = vld [vmem:[%s1 + $0x48] sm:$0xff]
  %v157 = vld [vmem:[%s1 + $0x50] sm:$0xff]
  %v158 = vld [vmem:[%s1 + $0x58] sm:$0xff]
  %v159 = vld [vmem:[%s1 + $0x60] sm:$0xff]
  %v160 = vld [vmem:[%s1 + $0x68] sm:$0xff]
  %v161 = vld [vmem:[%s1 + $0x70] sm:$0xff]
  %v162 = vld [vmem:[%s1 + $0x78] sm:$0xff]
  %v163 = vld [vmem:[%s1 + $0x80] sm:$0xff]
  %v164 = vld [vmem:[%s1 + $0x88] sm:$0xff]
  %v165 = vld [vmem:[%s1 + $0x90] sm:$0xff]
  %v166 = vld [vmem:[%s1 + $0x98] sm:$0xff]
  %v167 = vld [vmem:[%s1 + $0xa0] sm:$0xff]
  %v168 = vld [vmem:[%s1 + $0xa8] sm:$0xff]
  %v169 = vld [vmem:[%s1 + $0xb0] sm:$0xff]
  %v170 = vld [vmem:[%s1 + $0xb8] sm:$0xff]
  %v171 = vld [vmem:[%s1 + $0xc0] sm:$0xff]
  %v172 = vld [vmem:[%s1 + $0xc8] sm:$0xff]
  %v173 = vld [vmem:[%s1 + $0xd0] sm:$0xff]
  %v174 = vld [vmem:[%s1 + $0xd8] sm:$0xff]
  %v175 = vld [vmem:[%s1 + $0xe0] sm:$0xff]
  %v176 = vld [vmem:[%s1 + $0xe8] sm:$0xff]
  %v177 = vld [vmem:[%s1 + $0xf0] sm:$0xff]
  %v178 = vld [vmem:[%s1 + $0xf8] sm:$0xff]
  %v179 = vld [vmem:[%s1 + $0x100] sm:$0xff]
  %v180 = vld [vmem:[%s1 + $0x108] sm:$0xff]
  %v181 = vld [vmem:[%s1 + $0x110] sm:$0xff]
  %v182 = vld [vmem:[%s1 + $0x118] sm:$0xff]
  %v183 = vld [vmem:[%s1 + $0x120] sm:$0xff]
  %v184 = vld [vmem:[%s1 + $0x128] sm:$0xff]
  %v185 = vld [vmem:[%s1 + $0x130] sm:$0xff]
  %v186 = vld [vmem:[%s1 + $0x138] sm:$0xff]
  %v187 = vld [vmem:[%s1 + $0x140] sm:$0xff]
  %v188 = vld [vmem:[%s1 + $0x148] sm:$0xff]
  %v189 = vld [vmem:[%s1 + $0x150] sm:$0xff]
  %v190 = vld [vmem:[%s1 + $0x158] sm:$0xff]
  %v191 = vld [vmem:[%s1 + $0x160] sm:$0xff]
  %v192 = vld [vmem:[%s1 + $0x168] sm:$0xff]
  %v193 = vld [vmem:[%s1 + $0x170] sm:$0xff]
  %v194 = vld [vmem:[%s1 + $0x178] sm:$0xff]
  %v195 = vld [vmem:[%s1 + $0x180] sm:$0xff]
  %v196 = vld [vmem:[%s1 + $0x188] sm:$0xff]
  %v197 = vld [vmem:[%s1 + $0x190] sm:$0xff]
  %v198 = vld [vmem:[%s1 + $0x198] sm:$0xff]
  %v199 = vld [vmem:[%s1 + $0x1a0] sm:$0xff]
  %v200 = vld [vmem:[%s1 + $0x1a8] sm:$0xff]
  %v201 = vld [vmem:[%s1 + $0x1b0] sm:$0xff]
  %v202 = vld [vmem:[%s1 + $0x1b8] sm:$0xff]
  %v203 = vld [vmem:[%s1 + $0x1c0] sm:$0xff]
  %v204 = vld [vmem:[%s1 + $0x1c8] sm:$0xff]
  %v205 = vld [vmem:[%s1 + $0x1d0] sm:$0xff]
  %v206 = vld [vmem:[%s1 + $0x1d8] sm:$0xff]
  %v207 = vld [vmem:[%s1 + $0x1e0] sm:$0xff]
  %v208 = vld [vmem:[%s1 + $0x1e8] sm:$0xff]
  %v209 = vld [vmem:[%s1 + $0x1f0] sm:$0xff]
  %v210 = vld [vmem:[%s1 + $0x1f8] sm:$0xff]
  %211 = vmatprep.subr.mxu0 0.0
  %212 = vmatpush1.msra.mxu0 %v115
  %213 = vmatprep.subr.mxu0 0.0
  %214 = vmatpush1.msra.mxu0 %v116
  %215 = vmatprep.subr.mxu0 0.0
  %216 = vmatpush1.msra.mxu0 %v117
  %217 = vmatprep.subr.mxu0 0.0
  %218 = vmatpush1.msra.mxu0 %v118
  %219 = vmatprep.subr.mxu0 0.0
  %220 = vmatpush1.msra.mxu0 %v119
  %221 = vmatprep.subr.mxu0 0.0
  %222 = vmatpush1.msra.mxu0 %v120
  %223 = vmatprep.subr.mxu0 0.0
  %224 = vmatpush1.msra.mxu0 %v121
  %225 = vmatprep.subr.mxu0 0.0
  %226 = vmatpush1.msra.mxu0 %v122
  %227 = vmatprep.subr.mxu0 0.0
  %228 = vmatpush1.msra.mxu0 %v123
  %229 = vmatprep.subr.mxu0 0.0
  %230 = vmatpush1.msra.mxu0 %v124
  %231 = vmatprep.subr.mxu0 0.0
  %232 = vmatpush1.msra.mxu0 %v125
  %233 = vmatprep.subr.mxu0 0.0
  %234 = vmatpush1.msra.mxu0 %v126
  %235 = vmatprep.subr.mxu0 0.0
  %236 = vmatpush1.msra.mxu0 %v127
  %237 = vmatprep.subr.mxu0 0.0
  %238 = vmatpush1.msra.mxu0 %v128
  %239 = vmatprep.subr.mxu0 0.0
  %240 = vmatpush1.msra.mxu0 %v129
  %241 = vmatprep.subr.mxu0 0.0
  %242 = vmatpush1.msra.mxu0 %v130
  %243 = vmatprep.subr.mxu0 0.0
  %244 = vmatpush1.msra.mxu0 %v131
  %245 = vmatprep.subr.mxu0 0.0
  %246 = vmatpush1.msra.mxu0 %v132
  %247 = vmatprep.subr.mxu0 0.0
  %248 = vmatpush1.msra.mxu0 %v133
  %249 = vmatprep.subr.mxu0 0.0
  %250 = vmatpush1.msra.mxu0 %v134
  %251 = vmatprep.subr.mxu0 0.0
  %252 = vmatpush1.msra.mxu0 %v135
  %253 = vmatprep.subr.mxu0 0.0
  %254 = vmatpush1.msra.mxu0 %v136
  %255 = vmatprep.subr.mxu0 0.0
  %256 = vmatpush1.msra.mxu0 %v137
  %257 = vmatprep.subr.mxu0 0.0
  %258 = vmatpush1.msra.mxu0 %v138
  %259 = vmatprep.subr.mxu0 0.0
  %260 = vmatpush1.msra.mxu0 %v139
  %261 = vmatprep.subr.mxu0 0.0
  %262 = vmatpush1.msra.mxu0 %v140
  %263 = vmatprep.subr.mxu0 0.0
  %264 = vmatpush1.msra.mxu0 %v141
  %265 = vmatprep.subr.mxu0 0.0
  %266 = vmatpush1.msra.mxu0 %v142
  %267 = vmatprep.subr.mxu0 0.0
  %268 = vmatpush1.msra.mxu0 %v143
  %269 = vmatprep.subr.mxu0 0.0
  %270 = vmatpush1.msra.mxu0 %v144
  %271 = vmatprep.subr.mxu0 0.0
  %272 = vmatpush1.msra.mxu0 %v145
  %273 = vmatprep.subr.mxu0 0.0
  %274 = vmatpush1.msra.mxu0 %v146
  %275 = vmatprep.mubr.f32.mxu0 %v148
  %276 = vmatmul.mubr.f32.gmra.mrb[0].mxu0 %v147
  %v277 = vpop.f32.mrb[0].mxu0
  %v278 = vadd.f32 0.0, %v277
  %v279 = vpop.f32.mrb[0].mxu0
  %280 = vmatprep.mubr.f32.mxu0 %v150
  %281 = vmatmul.mubr.f32.gmra.mrb[0].mxu0 %v149
  %v282 = vpop.f32.mrb[0].mxu0
  %v283 = vadd.f32 0.0, %v282
  %v284 = vpop.f32.mrb[0].mxu0
  %285 = vmatprep.mubr.f32.mxu0 %v152
  %286 = vmatmul.mubr.f32.gmra.mrb[0].mxu0 %v151
  %v287 = vpop.f32.mrb[0].mxu0
  %v288 = vadd.f32 0.0, %v287
  %v289 = vpop.f32.mrb[0].mxu0
  %290 = vmatprep.mubr.f32.mxu0 %v154
  %291 = vmatmul.mubr.f32.gmra.mrb[0].mxu0 %v153
  %v292 = vpop.f32.mrb[0].mxu0
  %v293 = vadd.f32 0.0, %v292
  %v294 = vpop.f32.mrb[0].mxu0
  %295 = vmatprep.mubr.f32.mxu0 %v156
  %296 = vmatmul.mubr.f32.gmra.mrb[0].mxu0 %v155
  %v297 = vpop.f32.mrb[0].mxu0
  %v298 = vadd.f32 0.0, %v297
  %v299 = vpop.f32.mrb[0].mxu0
  %300 = vmatprep.mubr.f32.mxu0 %v158
  %301 = vmatmul.mubr.f32.gmra.mrb[0].mxu0 %v157
  %v302 = vpop.f32.mrb[0].mxu0
  %v303 = vadd.f32 0.0, %v302
  %v304 = vpop.f32.mrb[0].mxu0
  %305 = vmatprep.mubr.f32.mxu0 %v160
  %306 = vmatmul.mubr.f32.gmra.mrb[0].mxu0 %v159
  %v307 = vpop.f32.mrb[0].mxu0
  %v308 = vadd.f32 0.0, %v307
  %v309 = vpop.f32.mrb[0].mxu0
  %310 = vmatprep.mubr.f32.mxu0 %v162
  %311 = vmatmul.mubr.f32.gmra.mrb[0].mxu0 %v161
  %v312 = vpop.f32.mrb[0].mxu0
  %v313 = vadd.f32 0.0, %v312
  %v314 = vpop.f32.mrb[0].mxu0
  %315 = vmatprep.mubr.f32.mxu0 %v164
  %316 = vmatmul.mubr.f32.gmra.mrb[0].mxu0 %v163
  %v317 = vpop.f32.mrb[0].mxu0
  %v318 = vadd.f32 0.0, %v317
  %v319 = vpop.f32.mrb[0].mxu0
  %320 = vmatprep.mubr.f32.mxu0 %v166
  %321 = vmatmul.mubr.f32.gmra.mrb[0].mxu0 %v165
  %v322 = vpop.f32.mrb[0].mxu0
  %v323 = vadd.f32 0.0, %v322
  %v324 = vpop.f32.mrb[0].mxu0
  %325 = vmatprep.mubr.f32.mxu0 %v168
  %326 = vmatmul.mubr.f32.gmra.mrb[0].mxu0 %v167
  %v327 = vpop.f32.mrb[0].mxu0
  %v328 = vadd.f32 0.0, %v327
  %v329 = vpop.f32.mrb[0].mxu0
  %330 = vmatprep.mubr.f32.mxu0 %v170
  %331 = vmatmul.mubr.f32.gmra.mrb[0].mxu0 %v169
  %v332 = vpop.f32.mrb[0].mxu0
  %v333 = vadd.f32 0.0, %v332
  %v334 = vpop.f32.mrb[0].mxu0
  %335 = vmatprep.mubr.f32.mxu0 %v172
  %336 = vmatmul.mubr.f32.gmra.mrb[0].mxu0 %v171
  %v337 = vpop.f32.mrb[0].mxu0
  %v338 = vadd.f32 0.0, %v337
  %v339 = vpop.f32.mrb[0].mxu0
  %340 = vmatprep.mubr.f32.mxu0 %v174
  %341 = vmatmul.mubr.f32.gmra.mrb[0].mxu0 %v173
  %v342 = vpop.f32.mrb[0].mxu0
  %v343 = vadd.f32 0.0, %v342
  %v344 = vpop.f32.mrb[0].mxu0
  %345 = vmatprep.mubr.f32.mxu0 %v176
  %346 = vmatmul.mubr.f32.gmra.mrb[0].mxu0 %v175
  %v347 = vpop.f32.mrb[0].mxu0
  %v348 = vadd.f32 0.0, %v347
  %v349 = vpop.f32.mrb[0].mxu0
  %350 = vmatprep.mubr.f32.mxu0 %v178
  %351 = vmatmul.mubr.f32.gmra.mrb[0].mxu0 %v177
  %v352 = vpop.f32.mrb[0].mxu0
  %v353 = vadd.f32 0.0, %v352
  %v354 = vpop.f32.mrb[0].mxu0
  %355 = vmatprep.mubr.f32.mxu0 %v180
  %356 = vmatmul.mubr.f32.gmra.mrb[0].mxu0 %v179
  %v357 = vpop.f32.mrb[0].mxu0
  %v358 = vadd.f32 0.0, %v357
  %v359 = vpop.f32.mrb[0].mxu0
  %360 = vmatprep.mubr.f32.mxu0 %v182
  %361 = vmatmul.mubr.f32.gmra.mrb[0].mxu0 %v181
  %v362 = vpop.f32.mrb[0].mxu0
  %v363 = vadd.f32 0.0, %v362
  %v364 = vpop.f32.mrb[0].mxu0
  %365 = vmatprep.mubr.f32.mxu0 %v184
  %366 = vmatmul.mubr.f32.gmra.mrb[0].mxu0 %v183
  %v367 = vpop.f32.mrb[0].mxu0
  %v368 = vadd.f32 0.0, %v367
  %v369 = vpop.f32.mrb[0].mxu0
  %370 = vmatprep.mubr.f32.mxu0 %v186
  %371 = vmatmul.mubr.f32.gmra.mrb[0].mxu0 %v185
  %v372 = vpop.f32.mrb[0].mxu0
  %v373 = vadd.f32 0.0, %v372
  %v374 = vpop.f32.mrb[0].mxu0
  %375 = vmatprep.mubr.f32.mxu0 %v188
  %376 = vmatmul.mubr.f32.gmra.mrb[0].mxu0 %v187
  %v377 = vpop.f32.mrb[0].mxu0
  %v378 = vadd.f32 0.0, %v377
  %v379 = vpop.f32.mrb[0].mxu0
  %380 = vmatprep.mubr.f32.mxu0 %v190
  %381 = vmatmul.mubr.f32.gmra.mrb[0].mxu0 %v189
  %v382 = vpop.f32.mrb[0].mxu0
  %v383 = vadd.f32 0.0, %v382
  %v384 = vpop.f32.mrb[0].mxu0
  %385 = vmatprep.mubr.f32.mxu0 %v192
  %386 = vmatmul.mubr.f32.gmra.mrb[0].mxu0 %v191
  %v387 = vpop.f32.mrb[0].mxu0
  %v388 = vadd.f32 0.0, %v387
  %v389 = vpop.f32.mrb[0].mxu0
  %390 = vmatprep.mubr.f32.mxu0 %v194
  %391 = vmatmul.mubr.f32.gmra.mrb[0].mxu0 %v193
  %v392 = vpop.f32.mrb[0].mxu0
  %v393 = vadd.f32 0.0, %v392
  %v394 = vpop.f32.mrb[0].mxu0
  %395 = vmatprep.mubr.f32.mxu0 %v196
  %396 = vmatmul.mubr.f32.gmra.mrb[0].mxu0 %v195
  %v397 = vpop.f32.mrb[0].mxu0
  %v398 = vadd.f32 0.0, %v397
  %v399 = vpop.f32.mrb[0].mxu0
  %400 = vmatprep.mubr.f32.mxu0 %v198
  %401 = vmatmul.mubr.f32.gmra.mrb[0].mxu0 %v197
  %v402 = vpop.f32.mrb[0].mxu0
  %v403 = vadd.f32 0.0, %v402
  %v404 = vpop.f32.mrb[0].mxu0
  %405 = vmatprep.mubr.f32.mxu0 %v200
  %406 = vmatmul.mubr.f32.gmra.mrb[0].mxu0 %v199
  %v407 = vpop.f32.mrb[0].mxu0
  %v408 = vadd.f32 0.0, %v407
  %v409 = vpop.f32.mrb[0].mxu0
  %410 = vmatprep.mubr.f32.mxu0 %v202
  %411 = vmatmul.mubr.f32.gmra.mrb[0].mxu0 %v201
  %v412 = vpop.f32.mrb[0].mxu0
  %v413 = vadd.f32 0.0, %v412
  %v414 = vpop.f32.mrb[0].mxu0
  %415 = vmatprep.mubr.f32.mxu0 %v204
  %416 = vmatmul.mubr.f32.gmra.mrb[0].mxu0 %v203
  %v417 = vpop.f32.mrb[0].mxu0
  %v418 = vadd.f32 0.0, %v417
  %v419 = vpop.f32.mrb[0].mxu0
  %420 = vmatprep.mubr.f32.mxu0 %v206
  %421 = vmatmul.mubr.f32.gmra.mrb[0].mxu0 %v205
  %v422 = vpop.f32.mrb[0].mxu0
  %v423 = vadd.f32 0.0, %v422
  %v424 = vpop.f32.mrb[0].mxu0
  %425 = vmatprep.mubr.f32.mxu0 %v208
  %426 = vmatmul.mubr.f32.gmra.mrb[0].mxu0 %v207
  %v427 = vpop.f32.mrb[0].mxu0
  %v428 = vadd.f32 0.0, %v427
  %v429 = vpop.f32.mrb[0].mxu0
  %430 = vmatprep.mubr.f32.mxu0 %v210
  %431 = vmatmul.mubr.f32.gmra.mrb[0].mxu0 %v209
  %v432 = vpop.f32.mrb[0].mxu0
  %v433 = vadd.f32 0.0, %v432
  %v434 = vpop.f32.mrb[0].mxu0
  %435 = vdwg.mxu0
  %436 = vmatprep.subr.mxu0 0.0
  %437 = vmatpush1.msra.mxu0 %v83
  %438 = vmatprep.subr.mxu0 0.0
  %439 = vmatpush1.msra.mxu0 %v84
  %440 = vmatprep.subr.mxu0 0.0
  %441 = vmatpush1.msra.mxu0 %v85
  %442 = vmatprep.subr.mxu0 0.0
  %443 = vmatpush1.msra.mxu0 %v86
  %444 = vmatprep.subr.mxu0 0.0
  %445 = vmatpush1.msra.mxu0 %v87
  %446 = vmatprep.subr.mxu0 0.0
  %447 = vmatpush1.msra.mxu0 %v88
  %448 = vmatprep.subr.mxu0 0.0
  %449 = vmatpush1.msra.mxu0 %v89
  %450 = vmatprep.subr.mxu0 0.0
  %451 = vmatpush1.msra.mxu0 %v90
  %452 = vmatprep.subr.mxu0 0.0
  %453 = vmatpush1.msra.mxu0 %v91
  %454 = vmatprep.subr.mxu0 0.0
  %455 = vmatpush1.msra.mxu0 %v92
  %456 = vmatprep.subr.mxu0 0.0
  %457 = vmatpush1.msra.mxu0 %v93
  %458 = vmatprep.subr.mxu0 0.0
  %459 = vmatpush1.msra.mxu0 %v94
  %460 = vmatprep.subr.mxu0 0.0
  %461 = vmatpush1.msra.mxu0 %v95
  %462 = vmatprep.subr.mxu0 0.0
  %463 = vmatpush1.msra.mxu0 %v96
  %464 = vmatprep.subr.mxu0 0.0
  %465 = vmatpush1.msra.mxu0 %v97
  %466 = vmatprep.subr.mxu0 0.0
  %467 = vmatpush1.msra.mxu0 %v98
  %468 = vmatprep.subr.mxu0 0.0
  %469 = vmatpush1.msra.mxu0 %v99
  %470 = vmatprep.subr.mxu0 0.0
  %471 = vmatpush1.msra.mxu0 %v100
  %472 = vmatprep.subr.mxu0 0.0
  %473 = vmatpush1.msra.mxu0 %v101
  %474 = vmatprep.subr.mxu0 0.0
  %475 = vmatpush1.msra.mxu0 %v102
  %476 = vmatprep.subr.mxu0 0.0
  %477 = vmatpush1.msra.mxu0 %v103
  %478 = vmatprep.subr.mxu0 0.0
  %479 = vmatpush1.msra.mxu0 %v104
  %480 = vmatprep.subr.mxu0 0.0
  %481 = vmatpush1.msra.mxu0 %v105
  %482 = vmatprep.subr.mxu0 0.0
  %483 = vmatpush1.msra.mxu0 %v106
  %484 = vmatprep.subr.mxu0 0.0
  %485 = vmatpush1.msra.mxu0 %v107
  %486 = vmatprep.subr.mxu0 0.0
  %487 = vmatpush1.msra.mxu0 %v108
  %488 = vmatprep.subr.mxu0 0.0
  %489 = vmatpush1.msra.mxu0 %v109
  %490 = vmatprep.subr.mxu0 0.0
  %491 = vmatpush1.msra.mxu0 %v110
  %492 = vmatprep.subr.mxu0 0.0
  %493 = vmatpush1.msra.mxu0 %v111
  %494 = vmatprep.subr.mxu0 0.0
  %495 = vmatpush1.msra.mxu0 %v112
  %496 = vmatprep.subr.mxu0 0.0
  %497 = vmatpush1.msra.mxu0 %v113
  %498 = vmatprep.subr.mxu0 0.0
  %499 = vmatpush1.msra.mxu0 %v114
  %500 = vmatprep.mubr.f32.mxu0 %v148
  %501 = vmatmul.mubr.f32.gmra.mrb[0].mxu0 %v147
  %v502 = vpop.f32.mrb[0].mxu0
  %v503 = vadd.f32 1e-06, %v502
  %v504 = vpop.f32.mrb[0].mxu0
  %505 = vmatprep.mubr.f32.mxu0 %v150
  %506 = vmatmul.mubr.f32.gmra.mrb[0].mxu0 %v149
  %v507 = vpop.f32.mrb[0].mxu0
  %v508 = vadd.f32 1e-06, %v507
  %v509 = vpop.f32.mrb[0].mxu0
  %510 = vmatprep.mubr.f32.mxu0 %v152
  %511 = vmatmul.mubr.f32.gmra.mrb[0].mxu0 %v151
  %v512 = vpop.f32.mrb[0].mxu0
  %v513 = vadd.f32 1e-06, %v512
  %v514 = vpop.f32.mrb[0].mxu0
  %515 = vmatprep.mubr.f32.mxu0 %v154
  %516 = vmatmul.mubr.f32.gmra.mrb[0].mxu0 %v153
  %v517 = vpop.f32.mrb[0].mxu0
  %v518 = vadd.f32 1e-06, %v517
  %v519 = vpop.f32.mrb[0].mxu0
  %520 = vmatprep.mubr.f32.mxu0 %v156
  %521 = vmatmul.mubr.f32.gmra.mrb[0].mxu0 %v155
  %v522 = vpop.f32.mrb[0].mxu0
  %v523 = vadd.f32 1e-06, %v522
  %v524 = vpop.f32.mrb[0].mxu0
  %525 = vmatprep.mubr.f32.mxu0 %v158
  %526 = vmatmul.mubr.f32.gmra.mrb[0].mxu0 %v157
  %v527 = vpop.f32.mrb[0].mxu0
  %v528 = vadd.f32 1e-06, %v527
  %v529 = vpop.f32.mrb[0].mxu0
  %530 = vmatprep.mubr.f32.mxu0 %v160
  %531 = vmatmul.mubr.f32.gmra.mrb[0].mxu0 %v159
  %v532 = vpop.f32.mrb[0].mxu0
  %v533 = vadd.f32 1e-06, %v532
  %v534 = vpop.f32.mrb[0].mxu0
  %535 = vmatprep.mubr.f32.mxu0 %v162
  %536 = vmatmul.mubr.f32.gmra.mrb[0].mxu0 %v161
  %v537 = vpop.f32.mrb[0].mxu0
  %v538 = vadd.f32 1e-06, %v537
  %v539 = vpop.f32.mrb[0].mxu0
  %540 = vmatprep.mubr.f32.mxu0 %v164
  %541 = vmatmul.mubr.f32.gmra.mrb[0].mxu0 %v163
  %v542 = vpop.f32.mrb[0].mxu0
  %v543 = vadd.f32 1e-06, %v542
  %v544 = vpop.f32.mrb[0].mxu0
  %545 = vmatprep.mubr.f32.mxu0 %v166
  %546 = vmatmul.mubr.f32.gmra.mrb[0].mxu0 %v165
  %v547 = vpop.f32.mrb[0].mxu0
  %v548 = vadd.f32 1e-06, %v547
  %v549 = vpop.f32.mrb[0].mxu0
  %550 = vmatprep.mubr.f32.mxu0 %v168
  %551 = vmatmul.mubr.f32.gmra.mrb[0].mxu0 %v167
  %v552 = vpop.f32.mrb[0].mxu0
  %v553 = vadd.f32 1e-06, %v552
  %v554 = vpop.f32.mrb[0].mxu0
  %555 = vmatprep.mubr.f32.mxu0 %v170
  %556 = vmatmul.mubr.f32.gmra.mrb[0].mxu0 %v169
  %v557 = vpop.f32.mrb[0].mxu0
  %v558 = vadd.f32 1e-06, %v557
  %v559 = vpop.f32.mrb[0].mxu0
  %560 = vmatprep.mubr.f32.mxu0 %v172
  %561 = vmatmul.mubr.f32.gmra.mrb[0].mxu0 %v171
  %v562 = vpop.f32.mrb[0].mxu0
  %v563 = vadd.f32 1e-06, %v562
  %v564 = vpop.f32.mrb[0].mxu0
  %565 = vmatprep.mubr.f32.mxu0 %v174
  %566 = vmatmul.mubr.f32.gmra.mrb[0].mxu0 %v173
  %v567 = vpop.f32.mrb[0].mxu0
  %v568 = vadd.f32 1e-06, %v567
  %v569 = vpop.f32.mrb[0].mxu0
  %570 = vmatprep.mubr.f32.mxu0 %v176
  %571 = vmatmul.mubr.f32.gmra.mrb[0].mxu0 %v175
  %v572 = vpop.f32.mrb[0].mxu0
  %v573 = vadd.f32 1e-06, %v572
  %v574 = vpop.f32.mrb[0].mxu0
  %575 = vmatprep.mubr.f32.mxu0 %v178
  %576 = vmatmul.mubr.f32.gmra.mrb[0].mxu0 %v177
  %v577 = vpop.f32.mrb[0].mxu0
  %v578 = vadd.f32 1e-06, %v577
  %v579 = vpop.f32.mrb[0].mxu0
  %580 = vmatprep.mubr.f32.mxu0 %v180
  %581 = vmatmul.mubr.f32.gmra.mrb[0].mxu0 %v179
  %v582 = vpop.f32.mrb[0].mxu0
  %v583 = vadd.f32 1e-06, %v582
  %v584 = vpop.f32.mrb[0].mxu0
  %585 = vmatprep.mubr.f32.mxu0 %v182
  %586 = vmatmul.mubr.f32.gmra.mrb[0].mxu0 %v181
  %v587 = vpop.f32.mrb[0].mxu0
  %v588 = vadd.f32 1e-06, %v587
  %v589 = vpop.f32.mrb[0].mxu0
  %590 = vmatprep.mubr.f32.mxu0 %v184
  %591 = vmatmul.mubr.f32.gmra.mrb[0].mxu0 %v183
  %v592 = vpop.f32.mrb[0].mxu0
  %v593 = vadd.f32 1e-06, %v592
  %v594 = vpop.f32.mrb[0].mxu0
  %595 = vmatprep.mubr.f32.mxu0 %v186
  %596 = vmatmul.mubr.f32.gmra.mrb[0].mxu0 %v185
  %v597 = vpop.f32.mrb[0].mxu0
  %v598 = vadd.f32 1e-06, %v597
  %v599 = vpop.f32.mrb[0].mxu0
  %600 = vmatprep.mubr.f32.mxu0 %v188
  %601 = vmatmul.mubr.f32.gmra.mrb[0].mxu0 %v187
  %v602 = vpop.f32.mrb[0].mxu0
  %v603 = vadd.f32 1e-06, %v602
  %v604 = vpop.f32.mrb[0].mxu0
  %605 = vmatprep.mubr.f32.mxu0 %v190
  %606 = vmatmul.mubr.f32.gmra.mrb[0].mxu0 %v189
  %v607 = vpop.f32.mrb[0].mxu0
  %v608 = vadd.f32 1e-06, %v607
  %v609 = vpop.f32.mrb[0].mxu0
  %610 = vmatprep.mubr.f32.mxu0 %v192
  %611 = vmatmul.mubr.f32.gmra.mrb[0].mxu0 %v191
  %v612 = vpop.f32.mrb[0].mxu0
  %v613 = vadd.f32 1e-06, %v612
  %v614 = vpop.f32.mrb[0].mxu0
  %615 = vmatprep.mubr.f32.mxu0 %v194
  %616 = vmatmul.mubr.f32.gmra.mrb[0].mxu0 %v193
  %v617 = vpop.f32.mrb[0].mxu0
  %v618 = vadd.f32 1e-06, %v617
  %v619 = vpop.f32.mrb[0].mxu0
  %620 = vmatprep.mubr.f32.mxu0 %v196
  %621 = vmatmul.mubr.f32.gmra.mrb[0].mxu0 %v195
  %v622 = vpop.f32.mrb[0].mxu0
  %v623 = vadd.f32 1e-06, %v622
  %v624 = vpop.f32.mrb[0].mxu0
  %625 = vmatprep.mubr.f32.mxu0 %v198
  %626 = vmatmul.mubr.f32.gmra.mrb[0].mxu0 %v197
  %v627 = vpop.f32.mrb[0].mxu0
  %v628 = vadd.f32 1e-06, %v627
  %v629 = vpop.f32.mrb[0].mxu0
  %630 = vmatprep.mubr.f32.mxu0 %v200
  %631 = vmatmul.mubr.f32.gmra.mrb[0].mxu0 %v199
  %v632 = vpop.f32.mrb[0].mxu0
  %v633 = vadd.f32 1e-06, %v632
  %v634 = vpop.f32.mrb[0].mxu0
  %635 = vmatprep.mubr.f32.mxu0 %v202
  %636 = vmatmul.mubr.f32.gmra.mrb[0].mxu0 %v201
  %v637 = vpop.f32.mrb[0].mxu0
  %v638 = vadd.f32 1e-06, %v637
  %v639 = vpop.f32.mrb[0].mxu0
  %640 = vmatprep.mubr.f32.mxu0 %v204
  %641 = vmatmul.mubr.f32.gmra.mrb[0].mxu0 %v203
  %v642 = vpop.f32.mrb[0].mxu0
  %v643 = vadd.f32 1e-06, %v642
  %v644 = vpop.f32.mrb[0].mxu0
  %645 = vmatprep.mubr.f32.mxu0 %v206
  %646 = vmatmul.mubr.f32.gmra.mrb[0].mxu0 %v205
  %v647 = vpop.f32.mrb[0].mxu0
  %v648 = vadd.f32 1e-06, %v647
  %v649 = vpop.f32.mrb[0].mxu0
  %650 = vmatprep.mubr.f32.mxu0 %v208
  %651 = vmatmul.mubr.f32.gmra.mrb[0].mxu0 %v207
  %v652 = vpop.f32.mrb[0].mxu0
  %v653 = vadd.f32 1e-06, %v652
  %v654 = vpop.f32.mrb[0].mxu0
  %655 = vmatprep.mubr.f32.mxu0 %v210
  %656 = vmatmul.mubr.f32.gmra.mrb[0].mxu0 %v209
  %v657 = vpop.f32.mrb[0].mxu0
  %v658 = vadd.f32 1e-06, %v657
  %v659 = vpop.f32.mrb[0].mxu0
  %660 = vdwg.mxu0
  %v661 = vrcp.pop %v503
  %v662 = vmul.f32 %v278, %v661
  %v663 = vrcp.pop %v508
  %v664 = vmul.f32 %v283, %v663
  %v665 = vrcp.pop %v513
  %v666 = vmul.f32 %v288, %v665
  %v667 = vrcp.pop %v518
  %v668 = vmul.f32 %v293, %v667
  %v669 = vrcp.pop %v523
  %v670 = vmul.f32 %v298, %v669
  %v671 = vrcp.pop %v528
  %v672 = vmul.f32 %v303, %v671
  %v673 = vrcp.pop %v533
  %v674 = vmul.f32 %v308, %v673
  %v675 = vrcp.pop %v538
  %v676 = vmul.f32 %v313, %v675
  %v677 = vrcp.pop %v543
  %v678 = vmul.f32 %v318, %v677
  %v679 = vrcp.pop %v548
  %v680 = vmul.f32 %v323, %v679
  %v681 = vrcp.pop %v553
  %v682 = vmul.f32 %v328, %v681
  %v683 = vrcp.pop %v558
  %v684 = vmul.f32 %v333, %v683
  %v685 = vrcp.pop %v563
  %v686 = vmul.f32 %v338, %v685
  %v687 = vrcp.pop %v568
  %v688 = vmul.f32 %v343, %v687
  %v689 = vrcp.pop %v573
  %v690 = vmul.f32 %v348, %v689
  %v691 = vrcp.pop %v578
  %v692 = vmul.f32 %v353, %v691
  %v693 = vrcp.pop %v583
  %v694 = vmul.f32 %v358, %v693
  %v695 = vrcp.pop %v588
  %v696 = vmul.f32 %v363, %v695
  %v697 = vrcp.pop %v593
  %v698 = vmul.f32 %v368, %v697
  %v699 = vrcp.pop %v598
  %v700 = vmul.f32 %v373, %v699
  %v701 = vrcp.pop %v603
  %v702 = vmul.f32 %v378, %v701
  %v703 = vrcp.pop %v608
  %v704 = vmul.f32 %v383, %v703
  %v705 = vrcp.pop %v613
  %v706 = vmul.f32 %v388, %v705
  %v707 = vrcp.pop %v618
  %v708 = vmul.f32 %v393, %v707
  %v709 = vrcp.pop %v623
  %v710 = vmul.f32 %v398, %v709
  %v711 = vrcp.pop %v628
  %v712 = vmul.f32 %v403, %v711
  %v713 = vrcp.pop %v633
  %v714 = vmul.f32 %v408, %v713
  %v715 = vrcp.pop %v638
  %v716 = vmul.f32 %v413, %v715
  %v717 = vrcp.pop %v643
  %v718 = vmul.f32 %v418, %v717
  %v719 = vrcp.pop %v648
  %v720 = vmul.f32 %v423, %v719
  %v721 = vrcp.pop %v653
  %v722 = vmul.f32 %v428, %v721
  %v723 = vrcp.pop %v658
  %v724 = vmul.f32 %v433, %v723
  %v725 = vsub.f32 1.0, %v83
  %v726 = vsub.f32 1.0, %v84
  %v727 = vsub.f32 1.0, %v85
  %v728 = vsub.f32 1.0, %v86
  %v729 = vsub.f32 1.0, %v87
  %v730 = vsub.f32 1.0, %v88
  %v731 = vsub.f32 1.0, %v89
  %v732 = vsub.f32 1.0, %v90
  %v733 = vsub.f32 1.0, %v91
  %v734 = vsub.f32 1.0, %v92
  %v735 = vsub.f32 1.0, %v93
  %v736 = vsub.f32 1.0, %v94
  %v737 = vsub.f32 1.0, %v95
  %v738 = vsub.f32 1.0, %v96
  %v739 = vsub.f32 1.0, %v97
  %v740 = vsub.f32 1.0, %v98
  %v741 = vsub.f32 1.0, %v99
  %v742 = vsub.f32 1.0, %v100
  %v743 = vsub.f32 1.0, %v101
  %v744 = vsub.f32 1.0, %v102
  %v745 = vsub.f32 1.0, %v103
  %v746 = vsub.f32 1.0, %v104
  %v747 = vsub.f32 1.0, %v105
  %v748 = vsub.f32 1.0, %v106
  %v749 = vsub.f32 1.0, %v107
  %v750 = vsub.f32 1.0, %v108
  %v751 = vsub.f32 1.0, %v109
  %v752 = vsub.f32 1.0, %v110
  %v753 = vsub.f32 1.0, %v111
  %v754 = vsub.f32 1.0, %v112
  %v755 = vsub.f32 1.0, %v113
  %v756 = vsub.f32 1.0, %v114
  %v757 = vmul.f32 %v662, %v725
  %v758 = vmul.f32 %v664, %v726
  %v759 = vmul.f32 %v666, %v727
  %v760 = vmul.f32 %v668, %v728
  %v761 = vmul.f32 %v670, %v729
  %v762 = vmul.f32 %v672, %v730
  %v763 = vmul.f32 %v674, %v731
  %v764 = vmul.f32 %v676, %v732
  %v765 = vmul.f32 %v678, %v733
  %v766 = vmul.f32 %v680, %v734
  %v767 = vmul.f32 %v682, %v735
  %v768 = vmul.f32 %v684, %v736
  %v769 = vmul.f32 %v686, %v737
  %v770 = vmul.f32 %v688, %v738
  %v771 = vmul.f32 %v690, %v739
  %v772 = vmul.f32 %v692, %v740
  %v773 = vmul.f32 %v694, %v741
  %v774 = vmul.f32 %v696, %v742
  %v775 = vmul.f32 %v698, %v743
  %v776 = vmul.f32 %v700, %v744
  %v777 = vmul.f32 %v702, %v745
  %v778 = vmul.f32 %v704, %v746
  %v779 = vmul.f32 %v706, %v747
  %v780 = vmul.f32 %v708, %v748
  %v781 = vmul.f32 %v710, %v749
  %v782 = vmul.f32 %v712, %v750
  %v783 = vmul.f32 %v714, %v751
  %v784 = vmul.f32 %v716, %v752
  %v785 = vmul.f32 %v718, %v753
  %v786 = vmul.f32 %v720, %v754
  %v787 = vmul.f32 %v722, %v755
  %v788 = vmul.f32 %v724, %v756
  %v789 = vadd.f32 %v115, %v757
  %v790 = vadd.f32 %v116, %v758
  %v791 = vadd.f32 %v117, %v759
  %v792 = vadd.f32 %v118, %v760
  %v793 = vadd.f32 %v119, %v761
  %v794 = vadd.f32 %v120, %v762
  %v795 = vadd.f32 %v121, %v763
  %v796 = vadd.f32 %v122, %v764
  %v797 = vadd.f32 %v123, %v765
  %v798 = vadd.f32 %v124, %v766
  %v799 = vadd.f32 %v125, %v767
  %v800 = vadd.f32 %v126, %v768
  %v801 = vadd.f32 %v127, %v769
  %v802 = vadd.f32 %v128, %v770
  %v803 = vadd.f32 %v129, %v771
  %v804 = vadd.f32 %v130, %v772
  %v805 = vadd.f32 %v131, %v773
  %v806 = vadd.f32 %v132, %v774
  %v807 = vadd.f32 %v133, %v775
  %v808 = vadd.f32 %v134, %v776
  %v809 = vadd.f32 %v135, %v777
  %v810 = vadd.f32 %v136, %v778
  %v811 = vadd.f32 %v137, %v779
  %v812 = vadd.f32 %v138, %v780
  %v813 = vadd.f32 %v139, %v781
  %v814 = vadd.f32 %v140, %v782
  %v815 = vadd.f32 %v141, %v783
  %v816 = vadd.f32 %v142, %v784
  %v817 = vadd.f32 %v143, %v785
  %v818 = vadd.f32 %v144, %v786
  %v819 = vadd.f32 %v145, %v787
  %v820 = vadd.f32 %v146, %v788
  %821 = vst [vmem:[%s4] sm:$0xff] %v789
  %822 = vst [vmem:[%s4 + $0x8] sm:$0xff] %v790
  %823 = vst [vmem:[%s4 + $0x10] sm:$0xff] %v791
  %824 = vst [vmem:[%s4 + $0x18] sm:$0xff] %v792
  %825 = vst [vmem:[%s4 + $0x20] sm:$0xff] %v793
  %826 = vst [vmem:[%s4 + $0x28] sm:$0xff] %v794
  %827 = vst [vmem:[%s4 + $0x30] sm:$0xff] %v795
  %828 = vst [vmem:[%s4 + $0x38] sm:$0xff] %v796
  %829 = vst [vmem:[%s4 + $0x40] sm:$0xff] %v797
  %830 = vst [vmem:[%s4 + $0x48] sm:$0xff] %v798
  %831 = vst [vmem:[%s4 + $0x50] sm:$0xff] %v799
  %832 = vst [vmem:[%s4 + $0x58] sm:$0xff] %v800
  %833 = vst [vmem:[%s4 + $0x60] sm:$0xff] %v801
  %834 = vst [vmem:[%s4 + $0x68] sm:$0xff] %v802
  %835 = vst [vmem:[%s4 + $0x70] sm:$0xff] %v803
  %836 = vst [vmem:[%s4 + $0x78] sm:$0xff] %v804
  %837 = vst [vmem:[%s4 + $0x80] sm:$0xff] %v805
  %838 = vst [vmem:[%s4 + $0x88] sm:$0xff] %v806
  %839 = vst [vmem:[%s4 + $0x90] sm:$0xff] %v807
  %840 = vst [vmem:[%s4 + $0x98] sm:$0xff] %v808
  %841 = vst [vmem:[%s4 + $0xa0] sm:$0xff] %v809
  %842 = vst [vmem:[%s4 + $0xa8] sm:$0xff] %v810
  %843 = vst [vmem:[%s4 + $0xb0] sm:$0xff] %v811
  %844 = vst [vmem:[%s4 + $0xb8] sm:$0xff] %v812
  %845 = vst [vmem:[%s4 + $0xc0] sm:$0xff] %v813
  %846 = vst [vmem:[%s4 + $0xc8] sm:$0xff] %v814
  %847 = vst [vmem:[%s4 + $0xd0] sm:$0xff] %v815
  %848 = vst [vmem:[%s4 + $0xd8] sm:$0xff] %v816
  %849 = vst [vmem:[%s4 + $0xe0] sm:$0xff] %v817
  %850 = vst [vmem:[%s4 + $0xe8] sm:$0xff] %v818
  %851 = vst [vmem:[%s4 + $0xf0] sm:$0xff] %v819
  %852 = vst [vmem:[%s4 + $0xf8] sm:$0xff] %v820
  %v853 = vld [vmem:[%s0] sm:$0xff]
  %v854 = vld [vmem:[%s0 + $0x8] sm:$0xff]
  %v855 = vld [vmem:[%s0 + $0x10] sm:$0xff]
  %v856 = vld [vmem:[%s0 + $0x18] sm:$0xff]
  %v857 = vld [vmem:[%s0 + $0x20] sm:$0xff]
  %v858 = vld [vmem:[%s0 + $0x28] sm:$0xff]
  %v859 = vld [vmem:[%s0 + $0x30] sm:$0xff]
  %v860 = vld [vmem:[%s0 + $0x38] sm:$0xff]
  %v861 = vld [vmem:[%s0 + $0x40] sm:$0xff]
  %v862 = vld [vmem:[%s0 + $0x48] sm:$0xff]
  %v863 = vld [vmem:[%s0 + $0x50] sm:$0xff]
  %v864 = vld [vmem:[%s0 + $0x58] sm:$0xff]
  %v865 = vld [vmem:[%s0 + $0x60] sm:$0xff]
  %v866 = vld [vmem:[%s0 + $0x68] sm:$0xff]
  %v867 = vld [vmem:[%s0 + $0x70] sm:$0xff]
  %v868 = vld [vmem:[%s0 + $0x78] sm:$0xff]
  %v869 = vld [vmem:[%s0 + $0x80] sm:$0xff]
  %v870 = vld [vmem:[%s0 + $0x88] sm:$0xff]
  %v871 = vld [vmem:[%s0 + $0x90] sm:$0xff]
  %v872 = vld [vmem:[%s0 + $0x98] sm:$0xff]
  %v873 = vld [vmem:[%s0 + $0xa0] sm:$0xff]
  %v874 = vld [vmem:[%s0 + $0xa8] sm:$0xff]
  %v875 = vld [vmem:[%s0 + $0xb0] sm:$0xff]
  %v876 = vld [vmem:[%s0 + $0xb8] sm:$0xff]
  %v877 = vld [vmem:[%s0 + $0xc0] sm:$0xff]
  %v878 = vld [vmem:[%s0 + $0xc8] sm:$0xff]
  %v879 = vld [vmem:[%s0 + $0xd0] sm:$0xff]
  %v880 = vld [vmem:[%s0 + $0xd8] sm:$0xff]
  %v881 = vld [vmem:[%s0 + $0xe0] sm:$0xff]
  %v882 = vld [vmem:[%s0 + $0xe8] sm:$0xff]
  %v883 = vld [vmem:[%s0 + $0xf0] sm:$0xff]
  %v884 = vld [vmem:[%s0 + $0xf8] sm:$0xff]
  %v885 = vld [vmem:[%s0 + $0x100] sm:$0xff]
  %v886 = vld [vmem:[%s0 + $0x108] sm:$0xff]
  %v887 = vld [vmem:[%s0 + $0x110] sm:$0xff]
  %v888 = vld [vmem:[%s0 + $0x118] sm:$0xff]
  %v889 = vld [vmem:[%s0 + $0x120] sm:$0xff]
  %v890 = vld [vmem:[%s0 + $0x128] sm:$0xff]
  %v891 = vld [vmem:[%s0 + $0x130] sm:$0xff]
  %v892 = vld [vmem:[%s0 + $0x138] sm:$0xff]
  %v893 = vld [vmem:[%s0 + $0x140] sm:$0xff]
  %v894 = vld [vmem:[%s0 + $0x148] sm:$0xff]
  %v895 = vld [vmem:[%s0 + $0x150] sm:$0xff]
  %v896 = vld [vmem:[%s0 + $0x158] sm:$0xff]
  %v897 = vld [vmem:[%s0 + $0x160] sm:$0xff]
  %v898 = vld [vmem:[%s0 + $0x168] sm:$0xff]
  %v899 = vld [vmem:[%s0 + $0x170] sm:$0xff]
  %v900 = vld [vmem:[%s0 + $0x178] sm:$0xff]
  %v901 = vld [vmem:[%s0 + $0x180] sm:$0xff]
  %v902 = vld [vmem:[%s0 + $0x188] sm:$0xff]
  %v903 = vld [vmem:[%s0 + $0x190] sm:$0xff]
  %v904 = vld [vmem:[%s0 + $0x198] sm:$0xff]
  %v905 = vld [vmem:[%s0 + $0x1a0] sm:$0xff]
  %v906 = vld [vmem:[%s0 + $0x1a8] sm:$0xff]
  %v907 = vld [vmem:[%s0 + $0x1b0] sm:$0xff]
  %v908 = vld [vmem:[%s0 + $0x1b8] sm:$0xff]
  %v909 = vld [vmem:[%s0 + $0x1c0] sm:$0xff]
  %v910 = vld [vmem:[%s0 + $0x1c8] sm:$0xff]
  %v911 = vld [vmem:[%s0 + $0x1d0] sm:$0xff]
  %v912 = vld [vmem:[%s0 + $0x1d8] sm:$0xff]
  %v913 = vld [vmem:[%s0 + $0x1e0] sm:$0xff]
  %v914 = vld [vmem:[%s0 + $0x1e8] sm:$0xff]
  %v915 = vld [vmem:[%s0 + $0x1f0] sm:$0xff]
  %v916 = vld [vmem:[%s0 + $0x1f8] sm:$0xff]
  %917 = vmatprep.subr.mxu0 0.0
  %918 = vmatpush1.msra.mxu0 %v115
  %919 = vmatprep.subr.mxu0 0.0
  %920 = vmatpush1.msra.mxu0 %v116
  %921 = vmatprep.subr.mxu0 0.0
  %922 = vmatpush1.msra.mxu0 %v117
  %923 = vmatprep.subr.mxu0 0.0
  %924 = vmatpush1.msra.mxu0 %v118
  %925 = vmatprep.subr.mxu0 0.0
  %926 = vmatpush1.msra.mxu0 %v119
  %927 = vmatprep.subr.mxu0 0.0
  %928 = vmatpush1.msra.mxu0 %v120
  %929 = vmatprep.subr.mxu0 0.0
  %930 = vmatpush1.msra.mxu0 %v121
  %931 = vmatprep.subr.mxu0 0.0
  %932 = vmatpush1.msra.mxu0 %v122
  %933 = vmatprep.subr.mxu0 0.0
  %934 = vmatpush1.msra.mxu0 %v123
  %935 = vmatprep.subr.mxu0 0.0
  %936 = vmatpush1.msra.mxu0 %v124
  %937 = vmatprep.subr.mxu0 0.0
  %938 = vmatpush1.msra.mxu0 %v125
  %939 = vmatprep.subr.mxu0 0.0
  %940 = vmatpush1.msra.mxu0 %v126
  %941 = vmatprep.subr.mxu0 0.0
  %942 = vmatpush1.msra.mxu0 %v127
  %943 = vmatprep.subr.mxu0 0.0
  %944 = vmatpush1.msra.mxu0 %v128
  %945 = vmatprep.subr.mxu0 0.0
  %946 = vmatpush1.msra.mxu0 %v129
  %947 = vmatprep.subr.mxu0 0.0
  %948 = vmatpush1.msra.mxu0 %v130
  %949 = vmatprep.subr.mxu0 0.0
  %950 = vmatpush1.msra.mxu0 %v131
  %951 = vmatprep.subr.mxu0 0.0
  %952 = vmatpush1.msra.mxu0 %v132
  %953 = vmatprep.subr.mxu0 0.0
  %954 = vmatpush1.msra.mxu0 %v133
  %955 = vmatprep.subr.mxu0 0.0
  %956 = vmatpush1.msra.mxu0 %v134
  %957 = vmatprep.subr.mxu0 0.0
  %958 = vmatpush1.msra.mxu0 %v135
  %959 = vmatprep.subr.mxu0 0.0
  %960 = vmatpush1.msra.mxu0 %v136
  %961 = vmatprep.subr.mxu0 0.0
  %962 = vmatpush1.msra.mxu0 %v137
  %963 = vmatprep.subr.mxu0 0.0
  %964 = vmatpush1.msra.mxu0 %v138
  %965 = vmatprep.subr.mxu0 0.0
  %966 = vmatpush1.msra.mxu0 %v139
  %967 = vmatprep.subr.mxu0 0.0
  %968 = vmatpush1.msra.mxu0 %v140
  %969 = vmatprep.subr.mxu0 0.0
  %970 = vmatpush1.msra.mxu0 %v141
  %971 = vmatprep.subr.mxu0 0.0
  %972 = vmatpush1.msra.mxu0 %v142
  %973 = vmatprep.subr.mxu0 0.0
  %974 = vmatpush1.msra.mxu0 %v143
  %975 = vmatprep.subr.mxu0 0.0
  %976 = vmatpush1.msra.mxu0 %v144
  %977 = vmatprep.subr.mxu0 0.0
  %978 = vmatpush1.msra.mxu0 %v145
  %979 = vmatprep.subr.mxu0 0.0
  %980 = vmatpush1.msra.mxu0 %v146
  %981 = vmatprep.mubr.f32.mxu0 %v854
  %982 = vmatmul.mubr.f32.gmra.mrb[0].mxu0 %v853
  %v983 = vpop.f32.mrb[0].mxu0
  %v984 = vadd.f32 0.0, %v983
  %v985 = vpop.f32.mrb[0].mxu0
  %986 = vmatprep.mubr.f32.mxu0 %v856
  %987 = vmatmul.mubr.f32.gmra.mrb[0].mxu0 %v855
  %v988 = vpop.f32.mrb[0].mxu0
  %v989 = vadd.f32 0.0, %v988
  %v990 = vpop.f32.mrb[0].mxu0
  %991 = vmatprep.mubr.f32.mxu0 %v858
  %992 = vmatmul.mubr.f32.gmra.mrb[0].mxu0 %v857
  %v993 = vpop.f32.mrb[0].mxu0
  %v994 = vadd.f32 0.0, %v993
  %v995 = vpop.f32.mrb[0].mxu0
  %996 = vmatprep.mubr.f32.mxu0 %v860
  %997 = vmatmul.mubr.f32.gmra.mrb[0].mxu0 %v859
  %v998 = vpop.f32.mrb[0].mxu0
  %v999 = vadd.f32 0.0, %v998
  %v1000 = vpop.f32.mrb[0].mxu0
  %1001 = vmatprep.mubr.f32.mxu0 %v862
  %1002 = vmatmul.mubr.f32.gmra.mrb[0].mxu0 %v861
  %v1003 = vpop.f32.mrb[0].mxu0
  %v1004 = vadd.f32 0.0, %v1003
  %v1005 = vpop.f32.mrb[0].mxu0
  %1006 = vmatprep.mubr.f32.mxu0 %v864
  %1007 = vmatmul.mubr.f32.gmra.mrb[0].mxu0 %v863
  %v1008 = vpop.f32.mrb[0].mxu0
  %v1009 = vadd.f32 0.0, %v1008
  %v1010 = vpop.f32.mrb[0].mxu0
  %1011 = vmatprep.mubr.f32.mxu0 %v866
  %1012 = vmatmul.mubr.f32.gmra.mrb[0].mxu0 %v865
  %v1013 = vpop.f32.mrb[0].mxu0
  %v1014 = vadd.f32 0.0, %v1013
  %v1015 = vpop.f32.mrb[0].mxu0
  %1016 = vmatprep.mubr.f32.mxu0 %v868
  %1017 = vmatmul.mubr.f32.gmra.mrb[0].mxu0 %v867
  %v1018 = vpop.f32.mrb[0].mxu0
  %v1019 = vadd.f32 0.0, %v1018
  %v1020 = vpop.f32.mrb[0].mxu0
  %1021 = vmatprep.mubr.f32.mxu0 %v870
  %1022 = vmatmul.mubr.f32.gmra.mrb[0].mxu0 %v869
  %v1023 = vpop.f32.mrb[0].mxu0
  %v1024 = vadd.f32 0.0, %v1023
  %v1025 = vpop.f32.mrb[0].mxu0
  %1026 = vmatprep.mubr.f32.mxu0 %v872
  %1027 = vmatmul.mubr.f32.gmra.mrb[0].mxu0 %v871
  %v1028 = vpop.f32.mrb[0].mxu0
  %v1029 = vadd.f32 0.0, %v1028
  %v1030 = vpop.f32.mrb[0].mxu0
  %1031 = vmatprep.mubr.f32.mxu0 %v874
  %1032 = vmatmul.mubr.f32.gmra.mrb[0].mxu0 %v873
  %v1033 = vpop.f32.mrb[0].mxu0
  %v1034 = vadd.f32 0.0, %v1033
  %v1035 = vpop.f32.mrb[0].mxu0
  %1036 = vmatprep.mubr.f32.mxu0 %v876
  %1037 = vmatmul.mubr.f32.gmra.mrb[0].mxu0 %v875
  %v1038 = vpop.f32.mrb[0].mxu0
  %v1039 = vadd.f32 0.0, %v1038
  %v1040 = vpop.f32.mrb[0].mxu0
  %1041 = vmatprep.mubr.f32.mxu0 %v878
  %1042 = vmatmul.mubr.f32.gmra.mrb[0].mxu0 %v877
  %v1043 = vpop.f32.mrb[0].mxu0
  %v1044 = vadd.f32 0.0, %v1043
  %v1045 = vpop.f32.mrb[0].mxu0
  %1046 = vmatprep.mubr.f32.mxu0 %v880
  %1047 = vmatmul.mubr.f32.gmra.mrb[0].mxu0 %v879
  %v1048 = vpop.f32.mrb[0].mxu0
  %v1049 = vadd.f32 0.0, %v1048
  %v1050 = vpop.f32.mrb[0].mxu0
  %1051 = vmatprep.mubr.f32.mxu0 %v882
  %1052 = vmatmul.mubr.f32.gmra.mrb[0].mxu0 %v881
  %v1053 = vpop.f32.mrb[0].mxu0
  %v1054 = vadd.f32 0.0, %v1053
  %v1055 = vpop.f32.mrb[0].mxu0
  %1056 = vmatprep.mubr.f32.mxu0 %v884
  %1057 = vmatmul.mubr.f32.gmra.mrb[0].mxu0 %v883
  %v1058 = vpop.f32.mrb[0].mxu0
  %v1059 = vadd.f32 0.0, %v1058
  %v1060 = vpop.f32.mrb[0].mxu0
  %1061 = vmatprep.mubr.f32.mxu0 %v886
  %1062 = vmatmul.mubr.f32.gmra.mrb[0].mxu0 %v885
  %v1063 = vpop.f32.mrb[0].mxu0
  %v1064 = vadd.f32 0.0, %v1063
  %v1065 = vpop.f32.mrb[0].mxu0
  %1066 = vmatprep.mubr.f32.mxu0 %v888
  %1067 = vmatmul.mubr.f32.gmra.mrb[0].mxu0 %v887
  %v1068 = vpop.f32.mrb[0].mxu0
  %v1069 = vadd.f32 0.0, %v1068
  %v1070 = vpop.f32.mrb[0].mxu0
  %1071 = vmatprep.mubr.f32.mxu0 %v890
  %1072 = vmatmul.mubr.f32.gmra.mrb[0].mxu0 %v889
  %v1073 = vpop.f32.mrb[0].mxu0
  %v1074 = vadd.f32 0.0, %v1073
  %v1075 = vpop.f32.mrb[0].mxu0
  %1076 = vmatprep.mubr.f32.mxu0 %v892
  %1077 = vmatmul.mubr.f32.gmra.mrb[0].mxu0 %v891
  %v1078 = vpop.f32.mrb[0].mxu0
  %v1079 = vadd.f32 0.0, %v1078
  %v1080 = vpop.f32.mrb[0].mxu0
  %1081 = vmatprep.mubr.f32.mxu0 %v894
  %1082 = vmatmul.mubr.f32.gmra.mrb[0].mxu0 %v893
  %v1083 = vpop.f32.mrb[0].mxu0
  %v1084 = vadd.f32 0.0, %v1083
  %v1085 = vpop.f32.mrb[0].mxu0
  %1086 = vmatprep.mubr.f32.mxu0 %v896
  %1087 = vmatmul.mubr.f32.gmra.mrb[0].mxu0 %v895
  %v1088 = vpop.f32.mrb[0].mxu0
  %v1089 = vadd.f32 0.0, %v1088
  %v1090 = vpop.f32.mrb[0].mxu0
  %1091 = vmatprep.mubr.f32.mxu0 %v898
  %1092 = vmatmul.mubr.f32.gmra.mrb[0].mxu0 %v897
  %v1093 = vpop.f32.mrb[0].mxu0
  %v1094 = vadd.f32 0.0, %v1093
  %v1095 = vpop.f32.mrb[0].mxu0
  %1096 = vmatprep.mubr.f32.mxu0 %v900
  %1097 = vmatmul.mubr.f32.gmra.mrb[0].mxu0 %v899
  %v1098 = vpop.f32.mrb[0].mxu0
  %v1099 = vadd.f32 0.0, %v1098
  %v1100 = vpop.f32.mrb[0].mxu0
  %1101 = vmatprep.mubr.f32.mxu0 %v902
  %1102 = vmatmul.mubr.f32.gmra.mrb[0].mxu0 %v901
  %v1103 = vpop.f32.mrb[0].mxu0
  %v1104 = vadd.f32 0.0, %v1103
  %v1105 = vpop.f32.mrb[0].mxu0
  %1106 = vmatprep.mubr.f32.mxu0 %v904
  %1107 = vmatmul.mubr.f32.gmra.mrb[0].mxu0 %v903
  %v1108 = vpop.f32.mrb[0].mxu0
  %v1109 = vadd.f32 0.0, %v1108
  %v1110 = vpop.f32.mrb[0].mxu0
  %1111 = vmatprep.mubr.f32.mxu0 %v906
  %1112 = vmatmul.mubr.f32.gmra.mrb[0].mxu0 %v905
  %v1113 = vpop.f32.mrb[0].mxu0
  %v1114 = vadd.f32 0.0, %v1113
  %v1115 = vpop.f32.mrb[0].mxu0
  %1116 = vmatprep.mubr.f32.mxu0 %v908
  %1117 = vmatmul.mubr.f32.gmra.mrb[0].mxu0 %v907
  %v1118 = vpop.f32.mrb[0].mxu0
  %v1119 = vadd.f32 0.0, %v1118
  %v1120 = vpop.f32.mrb[0].mxu0
  %1121 = vmatprep.mubr.f32.mxu0 %v910
  %1122 = vmatmul.mubr.f32.gmra.mrb[0].mxu0 %v909
  %v1123 = vpop.f32.mrb[0].mxu0
  %v1124 = vadd.f32 0.0, %v1123
  %v1125 = vpop.f32.mrb[0].mxu0
  %1126 = vmatprep.mubr.f32.mxu0 %v912
  %1127 = vmatmul.mubr.f32.gmra.mrb[0].mxu0 %v911
  %v1128 = vpop.f32.mrb[0].mxu0
  %v1129 = vadd.f32 0.0, %v1128
  %v1130 = vpop.f32.mrb[0].mxu0
  %1131 = vmatprep.mubr.f32.mxu0 %v914
  %1132 = vmatmul.mubr.f32.gmra.mrb[0].mxu0 %v913
  %v1133 = vpop.f32.mrb[0].mxu0
  %v1134 = vadd.f32 0.0, %v1133
  %v1135 = vpop.f32.mrb[0].mxu0
  %1136 = vmatprep.mubr.f32.mxu0 %v916
  %1137 = vmatmul.mubr.f32.gmra.mrb[0].mxu0 %v915
  %v1138 = vpop.f32.mrb[0].mxu0
  %v1139 = vadd.f32 0.0, %v1138
  %v1140 = vpop.f32.mrb[0].mxu0
  %1141 = vdwg.mxu0
  %1142 = vst [vmem:[%s5] sm:$0xff] %v984
  %1143 = vst [vmem:[%s5 + $0x8] sm:$0xff] %v989
  %1144 = vst [vmem:[%s5 + $0x10] sm:$0xff] %v994
  %1145 = vst [vmem:[%s5 + $0x18] sm:$0xff] %v999
  %1146 = vst [vmem:[%s5 + $0x20] sm:$0xff] %v1004
  %1147 = vst [vmem:[%s5 + $0x28] sm:$0xff] %v1009
  %1148 = vst [vmem:[%s5 + $0x30] sm:$0xff] %v1014
  %1149 = vst [vmem:[%s5 + $0x38] sm:$0xff] %v1019
  %1150 = vst [vmem:[%s5 + $0x40] sm:$0xff] %v1024
  %1151 = vst [vmem:[%s5 + $0x48] sm:$0xff] %v1029
  %1152 = vst [vmem:[%s5 + $0x50] sm:$0xff] %v1034
  %1153 = vst [vmem:[%s5 + $0x58] sm:$0xff] %v1039
  %1154 = vst [vmem:[%s5 + $0x60] sm:$0xff] %v1044
  %1155 = vst [vmem:[%s5 + $0x68] sm:$0xff] %v1049
  %1156 = vst [vmem:[%s5 + $0x70] sm:$0xff] %v1054
  %1157 = vst [vmem:[%s5 + $0x78] sm:$0xff] %v1059
  %1158 = vst [vmem:[%s5 + $0x80] sm:$0xff] %v1064
  %1159 = vst [vmem:[%s5 + $0x88] sm:$0xff] %v1069
  %1160 = vst [vmem:[%s5 + $0x90] sm:$0xff] %v1074
  %1161 = vst [vmem:[%s5 + $0x98] sm:$0xff] %v1079
  %1162 = vst [vmem:[%s5 + $0xa0] sm:$0xff] %v1084
  %1163 = vst [vmem:[%s5 + $0xa8] sm:$0xff] %v1089
  %1164 = vst [vmem:[%s5 + $0xb0] sm:$0xff] %v1094
  %1165 = vst [vmem:[%s5 + $0xb8] sm:$0xff] %v1099
  %1166 = vst [vmem:[%s5 + $0xc0] sm:$0xff] %v1104
  %1167 = vst [vmem:[%s5 + $0xc8] sm:$0xff] %v1109
  %1168 = vst [vmem:[%s5 + $0xd0] sm:$0xff] %v1114
  %1169 = vst [vmem:[%s5 + $0xd8] sm:$0xff] %v1119
  %1170 = vst [vmem:[%s5 + $0xe0] sm:$0xff] %v1124
  %1171 = vst [vmem:[%s5 + $0xe8] sm:$0xff] %v1129
  %1172 = vst [vmem:[%s5 + $0xf0] sm:$0xff] %v1134
  %1173 = vst [vmem:[%s5 + $0xf8] sm:$0xff] %v1139
  // Predicated region
  $region18: #{damped_interpolation_forward.1} parent=0 // pred_check
    _
  $region19: #{damped_interpolation_forward.1} parent=0 // pred_check_branch
    %1175 = sbr.rel (0) target = $region21
  $region20: #{damped_interpolation_forward.1} parent=0 // pred_region
    _
  $region21: #{damped_interpolation_forward.1} parent=0 // pred_fallthru
    _
  // Predicated region
  $region22: #{damped_interpolation_forward.1} parent=0 // pred_check
    _
  $region23: #{damped_interpolation_forward.1} parent=0 // pred_check_branch
    %1177 = sbr.rel (0) target = $region25
  $region24: #{damped_interpolation_forward.1} parent=0 // pred_region
    _
  $region25: #{damped_interpolation_forward.1} parent=0 // pred_fallthru
    _
  // Predicated region
  $region26: #{damped_interpolation_forward.1} parent=0 // pred_check
    _
  $region27: #{damped_interpolation_forward.1} parent=0 // pred_check_branch
    %1179 = sbr.rel (0) target = $region29
  $region28: #{damped_interpolation_forward.1} parent=0 // pred_region
    _
  $region29: #{damped_interpolation_forward.1} parent=0 // pred_fallthru
    _
  // Predicated region
  $region30: #{damped_interpolation_forward.1} parent=0 // pred_check
    _
  $region31: #{damped_interpolation_forward.1} parent=0 // pred_check_branch
    %1181 = sbr.rel (0) target = $region33
  $region32: #{damped_interpolation_forward.1} parent=0 // pred_region
    _
  $region33: #{damped_interpolation_forward.1} parent=0 // pred_fallthru
    _

// kernel: body.4
$region0: #{body.4}
  #allocation0 [shape = 'u32[]', space=smem, size = 0x4, offset = 0x4, fixed_abs, tag = 'smem constant byte address 0x4 - core index']
  #allocation1 [shape = 'u32[144,128]{1,0:T(1,128)}', space=vmem, size = 0x12000, scoped, tag = 'internal scratch']
  %s0 = inlined_call_operand.vmem [shape: f32[256,256], index: 0, kind: input, shape index: {}]
  %s1 = inlined_call_operand.vmem [shape: f32[256,128], index: 1, kind: input, shape index: {}]
  %s2 = inlined_call_operand.vmem [shape: bf16[256,128], index: 2, kind: input, shape index: {}]
  %s3 = inlined_call_operand.vmem [shape: f32[256,128], index: 3, kind: input, shape index: {}, may-alias: {3,5}]
  %s4 = inlined_call_operand.hbm [shape: f32[256,128], index: 4, kind: output, shape index: {0}]
  %s5 = inlined_call_operand.vmem [shape: f32[256,128], index: 5, kind: output, shape index: {1}, may-alias: {3,5}]
  %s6 = inlined_call_operand.vmem [shape: f32[1,1,128], index: 6, kind: output, shape index: {2}]
  %s7 = inlined_call_operand.vmem [shape: f32[1,1,128], index: 7, kind: output, shape index: {3}]
  %8 = xla_tuple %s4, %s5, %s6, %s7
  %s9 = sld [smem:[#allocation0]]
  $region50: #{body.4} parent=0
    _
  %s11 = ssub.s32 1, %s9
  %s12 = scalar_select 0, %s11, %s9
  $region1: #{body.4} parent=0
    #allocation2 [shape = 'u8[131072]{0}', space=vmem, size = 0x20000, scoped, tag = 'output window, operand 0, single buffered']
    #allocation3 [shape = 's32[1]{0}', space=sflag, size = 0x4, scoped, tag = 'scoped memory for body.4']
    %13 = vsyncpa [#allocation3], 0
    // Predicated region
    $region2: #{body.4} parent=1 // pred_check
      _
    $region3: #{body.4} parent=1 // pred_check_branch
      %15 = sbr.rel (0) target = $region5
    $region4: #{body.4} parent=1 // pred_region
      _
    $region5: #{body.4} parent=1 // pred_fallthru
      _
    // Predicated region
    $region6: #{body.4} parent=1 // pred_check
      _
    $region7: #{body.4} parent=1 // pred_check_branch
      %17 = sbr.rel (0) target = $region9
    $region8: #{body.4} parent=1 // pred_region
      _
    $region9: #{body.4} parent=1 // pred_fallthru
      _
    // Predicated region
    $region10: #{body.4} parent=1 // pred_check
      _
    $region11: #{body.4} parent=1 // pred_check_branch
      %19 = sbr.rel (0) target = $region13
    $region12: #{body.4} parent=1 // pred_region
      _
    $region13: #{body.4} parent=1 // pred_fallthru
      _
    // Predicated region
    $region14: #{body.4} parent=1 // pred_check
      _
    $region15: #{body.4} parent=1 // pred_check_branch
      %21 = sbr.rel (0) target = $region17
    $region16: #{body.4} parent=1 // pred_region
      _
    $region17: #{body.4} parent=1 // pred_fallthru
      _
    %v22 = vld [vmem:[%s0] sm:$0xff]
    %v23 = vld [vmem:[%s0 + $0x8] sm:$0xff]
    %v24 = vld [vmem:[%s0 + $0x10] sm:$0xff]
    %v25 = vld [vmem:[%s0 + $0x18] sm:$0xff]
    %v26 = vld [vmem:[%s0 + $0x20] sm:$0xff]
    %v27 = vld [vmem:[%s0 + $0x28] sm:$0xff]
    %v28 = vld [vmem:[%s0 + $0x30] sm:$0xff]
    %v29 = vld [vmem:[%s0 + $0x38] sm:$0xff]
    %v30 = vld [vmem:[%s0 + $0x40] sm:$0xff]
    %v31 = vld [vmem:[%s0 + $0x48] sm:$0xff]
    %v32 = vld [vmem:[%s0 + $0x50] sm:$0xff]
    %v33 = vld [vmem:[%s0 + $0x58] sm:$0xff]
    %v34 = vld [vmem:[%s0 + $0x60] sm:$0xff]
    %v35 = vld [vmem:[%s0 + $0x68] sm:$0xff]
    %v36 = vld [vmem:[%s0 + $0x70] sm:$0xff]
    %v37 = vld [vmem:[%s0 + $0x78] sm:$0xff]
    %v38 = vld [vmem:[%s0 + $0x80] sm:$0xff]
    %v39 = vld [vmem:[%s0 + $0x88] sm:$0xff]
    %v40 = vld [vmem:[%s0 + $0x90] sm:$0xff]
    %v41 = vld [vmem:[%s0 + $0x98] sm:$0xff]
    %v42 = vld [vmem:[%s0 + $0xa0] sm:$0xff]
    %v43 = vld [vmem:[%s0 + $0xa8] sm:$0xff]
    %v44 = vld [vmem:[%s0 + $0xb0] sm:$0xff]
    %v45 = vld [vmem:[%s0 + $0xb8] sm:$0xff]
    %v46 = vld [vmem:[%s0 + $0xc0] sm:$0xff]
    %v47 = vld [vmem:[%s0 + $0xc8] sm:$0xff]
    %v48 = vld [vmem:[%s0 + $0xd0] sm:$0xff]
    %v49 = vld [vmem:[%s0 + $0xd8] sm:$0xff]
    %v50 = vld [vmem:[%s0 + $0xe0] sm:$0xff]
    %v51 = vld [vmem:[%s0 + $0xe8] sm:$0xff]
    %v52 = vld [vmem:[%s0 + $0xf0] sm:$0xff]
    %v53 = vld [vmem:[%s0 + $0xf8] sm:$0xff]
    %v54 = vld [vmem:[%s0 + $0x100] sm:$0xff]
    %v55 = vld [vmem:[%s0 + $0x108] sm:$0xff]
    %v56 = vld [vmem:[%s0 + $0x110] sm:$0xff]
    %v57 = vld [vmem:[%s0 + $0x118] sm:$0xff]
    %v58 = vld [vmem:[%s0 + $0x120] sm:$0xff]
    %v59 = vld [vmem:[%s0 + $0x128] sm:$0xff]
    %v60 = vld [vmem:[%s0 + $0x130] sm:$0xff]
    %v61 = vld [vmem:[%s0 + $0x138] sm:$0xff]
    %v62 = vld [vmem:[%s0 + $0x140] sm:$0xff]
    %v63 = vld [vmem:[%s0 + $0x148] sm:$0xff]
    %v64 = vld [vmem:[%s0 + $0x150] sm:$0xff]
    %v65 = vld [vmem:[%s0 + $0x158] sm:$0xff]
    %v66 = vld [vmem:[%s0 + $0x160] sm:$0xff]
    %v67 = vld [vmem:[%s0 + $0x168] sm:$0xff]
    %v68 = vld [vmem:[%s0 + $0x170] sm:$0xff]
    %v69 = vld [vmem:[%s0 + $0x178] sm:$0xff]
    %v70 = vld [vmem:[%s0 + $0x180] sm:$0xff]
    %v71 = vld [vmem:[%s0 + $0x188] sm:$0xff]
    %v72 = vld [vmem:[%s0 + $0x190] sm:$0xff]
    %v73 = vld [vmem:[%s0 + $0x198] sm:$0xff]
    %v74 = vld [vmem:[%s0 + $0x1a0] sm:$0xff]
    %v75 = vld [vmem:[%s0 + $0x1a8] sm:$0xff]
    %v76 = vld [vmem:[%s0 + $0x1b0] sm:$0xff]
    %v77 = vld [vmem:[%s0 + $0x1b8] sm:$0xff]
    %v78 = vld [vmem:[%s0 + $0x1c0] sm:$0xff]
    %v79 = vld [vmem:[%s0 + $0x1c8] sm:$0xff]
    %v80 = vld [vmem:[%s0 + $0x1d0] sm:$0xff]
    %v81 = vld [vmem:[%s0 + $0x1d8] sm:$0xff]
    %v82 = vld [vmem:[%s0 + $0x1e0] sm:$0xff]
    %v83 = vld [vmem:[%s0 + $0x1e8] sm:$0xff]
    %v84 = vld [vmem:[%s0 + $0x1f0] sm:$0xff]
    %v85 = vld [vmem:[%s0 + $0x1f8] sm:$0xff]
    %v86 = vld [vmem:[%s1] sm:$0xff]
    %v87 = vld [vmem:[%s1 + $0x8] sm:$0xff]
    %v88 = vld [vmem:[%s1 + $0x10] sm:$0xff]
    %v89 = vld [vmem:[%s1 + $0x18] sm:$0xff]
    %v90 = vld [vmem:[%s1 + $0x20] sm:$0xff]
    %v91 = vld [vmem:[%s1 + $0x28] sm:$0xff]
    %v92 = vld [vmem:[%s1 + $0x30] sm:$0xff]
    %v93 = vld [vmem:[%s1 + $0x38] sm:$0xff]
    %v94 = vld [vmem:[%s1 + $0x40] sm:$0xff]
    %v95 = vld [vmem:[%s1 + $0x48] sm:$0xff]
    %v96 = vld [vmem:[%s1 + $0x50] sm:$0xff]
    %v97 = vld [vmem:[%s1 + $0x58] sm:$0xff]
    %v98 = vld [vmem:[%s1 + $0x60] sm:$0xff]
    %v99 = vld [vmem:[%s1 + $0x68] sm:$0xff]
    %v100 = vld [vmem:[%s1 + $0x70] sm:$0xff]
    %v101 = vld [vmem:[%s1 + $0x78] sm:$0xff]
    %v102 = vld [vmem:[%s1 + $0x80] sm:$0xff]
    %v103 = vld [vmem:[%s1 + $0x88] sm:$0xff]
    %v104 = vld [vmem:[%s1 + $0x90] sm:$0xff]
    %v105 = vld [vmem:[%s1 + $0x98] sm:$0xff]
    %v106 = vld [vmem:[%s1 + $0xa0] sm:$0xff]
    %v107 = vld [vmem:[%s1 + $0xa8] sm:$0xff]
    %v108 = vld [vmem:[%s1 + $0xb0] sm:$0xff]
    %v109 = vld [vmem:[%s1 + $0xb8] sm:$0xff]
    %v110 = vld [vmem:[%s1 + $0xc0] sm:$0xff]
    %v111 = vld [vmem:[%s1 + $0xc8] sm:$0xff]
    %v112 = vld [vmem:[%s1 + $0xd0] sm:$0xff]
    %v113 = vld [vmem:[%s1 + $0xd8] sm:$0xff]
    %v114 = vld [vmem:[%s1 + $0xe0] sm:$0xff]
    %v115 = vld [vmem:[%s1 + $0xe8] sm:$0xff]
    %v116 = vld [vmem:[%s1 + $0xf0] sm:$0xff]
    %v117 = vld [vmem:[%s1 + $0xf8] sm:$0xff]
    %v118 = vld [vmem:[%s2] sm:$0xf]
    %v119 = vld [vmem:[%s2 + $0x4] sm:$0xf]
    %v120 = vld [vmem:[%s2 + $0x8] sm:$0xf]
    %v121 = vld [vmem:[%s2 + $0xc] sm:$0xf]
    %v122 = vld [vmem:[%s2 + $0x10] sm:$0xf]
    %v123 = vld [vmem:[%s2 + $0x14] sm:$0xf]
    %v124 = vld [vmem:[%s2 + $0x18] sm:$0xf]
    %v125 = vld [vmem:[%s2 + $0x1c] sm:$0xf]
    %v126 = vld [vmem:[%s2 + $0x20] sm:$0xf]
    %v127 = vld [vmem:[%s2 + $0x24] sm:$0xf]
    %v128 = vld [vmem:[%s2 + $0x28] sm:$0xf]
    %v129 = vld [vmem:[%s2 + $0x2c] sm:$0xf]
    %v130 = vld [vmem:[%s2 + $0x30] sm:$0xf]
    %v131 = vld [vmem:[%s2 + $0x34] sm:$0xf]
    %v132 = vld [vmem:[%s2 + $0x38] sm:$0xf]
    %v133 = vld [vmem:[%s2 + $0x3c] sm:$0xf]
    %v134 = vld [vmem:[%s2 + $0x40] sm:$0xf]
    %v135 = vld [vmem:[%s2 + $0x44] sm:$0xf]
    %v136 = vld [vmem:[%s2 + $0x48] sm:$0xf]
    %v137 = vld [vmem:[%s2 + $0x4c] sm:$0xf]
    %v138 = vld [vmem:[%s2 + $0x50] sm:$0xf]
    %v139 = vld [vmem:[%s2 + $0x54] sm:$0xf]
    %v140 = vld [vmem:[%s2 + $0x58] sm:$0xf]
    %v141 = vld [vmem:[%s2 + $0x5c] sm:$0xf]
    %v142 = vld [vmem:[%s2 + $0x60] sm:$0xf]
    %v143 = vld [vmem:[%s2 + $0x64] sm:$0xf]
    %v144 = vld [vmem:[%s2 + $0x68] sm:$0xf]
    %v145 = vld [vmem:[%s2 + $0x6c] sm:$0xf]
    %v146 = vld [vmem:[%s2 + $0x70] sm:$0xf]
    %v147 = vld [vmem:[%s2 + $0x74] sm:$0xf]
    %v148 = vld [vmem:[%s2 + $0x78] sm:$0xf]
    %v149 = vld [vmem:[%s2 + $0x7c] sm:$0xf]
    %v150 = vunpack.c.l.bf16 %v118
    %v151 = vunpack.c.l.bf16 %v119
    %v152 = vunpack.c.l.bf16 %v120
    %v153 = vunpack.c.l.bf16 %v121
    %v154 = vunpack.c.l.bf16 %v122
    %v155 = vunpack.c.l.bf16 %v123
    %v156 = vunpack.c.l.bf16 %v124
    %v157 = vunpack.c.l.bf16 %v125
    %v158 = vunpack.c.l.bf16 %v126
    %v159 = vunpack.c.l.bf16 %v127
    %v160 = vunpack.c.l.bf16 %v128
    %v161 = vunpack.c.l.bf16 %v129
    %v162 = vunpack.c.l.bf16 %v130
    %v163 = vunpack.c.l.bf16 %v131
    %v164 = vunpack.c.l.bf16 %v132
    %v165 = vunpack.c.l.bf16 %v133
    %v166 = vunpack.c.l.bf16 %v134
    %v167 = vunpack.c.l.bf16 %v135
    %v168 = vunpack.c.l.bf16 %v136
    %v169 = vunpack.c.l.bf16 %v137
    %v170 = vunpack.c.l.bf16 %v138
    %v171 = vunpack.c.l.bf16 %v139
    %v172 = vunpack.c.l.bf16 %v140
    %v173 = vunpack.c.l.bf16 %v141
    %v174 = vunpack.c.l.bf16 %v142
    %v175 = vunpack.c.l.bf16 %v143
    %v176 = vunpack.c.l.bf16 %v144
    %v177 = vunpack.c.l.bf16 %v145
    %v178 = vunpack.c.l.bf16 %v146
    %v179 = vunpack.c.l.bf16 %v147
    %v180 = vunpack.c.l.bf16 %v148
    %v181 = vunpack.c.l.bf16 %v149
    %v182 = vsub.f32 1.0, %v150
    %v183 = vsub.f32 1.0, %v151
    %v184 = vsub.f32 1.0, %v152
    %v185 = vsub.f32 1.0, %v153
    %v186 = vsub.f32 1.0, %v154
    %v187 = vsub.f32 1.0, %v155
    %v188 = vsub.f32 1.0, %v156
    %v189 = vsub.f32 1.0, %v157
    %v190 = vsub.f32 1.0, %v158
    %v191 = vsub.f32 1.0, %v159
    %v192 = vsub.f32 1.0, %v160
    %v193 = vsub.f32 1.0, %v161
    %v194 = vsub.f32 1.0, %v162
    %v195 = vsub.f32 1.0, %v163
    %v196 = vsub.f32 1.0, %v164
    %v197 = vsub.f32 1.0, %v165
    %v198 = vsub.f32 1.0, %v166
    %v199 = vsub.f32 1.0, %v167
    %v200 = vsub.f32 1.0, %v168
    %v201 = vsub.f32 1.0, %v169
    %v202 = vsub.f32 1.0, %v170
    %v203 = vsub.f32 1.0, %v171
    %v204 = vsub.f32 1.0, %v172
    %v205 = vsub.f32 1.0, %v173
    %v206 = vsub.f32 1.0, %v174
    %v207 = vsub.f32 1.0, %v175
    %v208 = vsub.f32 1.0, %v176
    %v209 = vsub.f32 1.0, %v177
    %v210 = vsub.f32 1.0, %v178
    %v211 = vsub.f32 1.0, %v179
    %v212 = vsub.f32 1.0, %v180
    %v213 = vsub.f32 1.0, %v181
    %v214 = vld [vmem:[%s3] sm:$0xff]
    %v215 = vld [vmem:[%s3 + $0x8] sm:$0xff]
    %v216 = vld [vmem:[%s3 + $0x10] sm:$0xff]
    %v217 = vld [vmem:[%s3 + $0x18] sm:$0xff]
    %v218 = vld [vmem:[%s3 + $0x20] sm:$0xff]
    %v219 = vld [vmem:[%s3 + $0x28] sm:$0xff]
    %v220 = vld [vmem:[%s3 + $0x30] sm:$0xff]
    %v221 = vld [vmem:[%s3 + $0x38] sm:$0xff]
    %v222 = vld [vmem:[%s3 + $0x40] sm:$0xff]
    %v223 = vld [vmem:[%s3 + $0x48] sm:$0xff]
    %v224 = vld [vmem:[%s3 + $0x50] sm:$0xff]
    %v225 = vld [vmem:[%s3 + $0x58] sm:$0xff]
    %v226 = vld [vmem:[%s3 + $0x60] sm:$0xff]
    %v227 = vld [vmem:[%s3 + $0x68] sm:$0xff]
    %v228 = vld [vmem:[%s3 + $0x70] sm:$0xff]
    %v229 = vld [vmem:[%s3 + $0x78] sm:$0xff]
    %v230 = vld [vmem:[%s3 + $0x80] sm:$0xff]
    %v231 = vld [vmem:[%s3 + $0x88] sm:$0xff]
    %v232 = vld [vmem:[%s3 + $0x90] sm:$0xff]
    %v233 = vld [vmem:[%s3 + $0x98] sm:$0xff]
    %v234 = vld [vmem:[%s3 + $0xa0] sm:$0xff]
    %v235 = vld [vmem:[%s3 + $0xa8] sm:$0xff]
    %v236 = vld [vmem:[%s3 + $0xb0] sm:$0xff]
    %v237 = vld [vmem:[%s3 + $0xb8] sm:$0xff]
    %v238 = vld [vmem:[%s3 + $0xc0] sm:$0xff]
    %v239 = vld [vmem:[%s3 + $0xc8] sm:$0xff]
    %v240 = vld [vmem:[%s3 + $0xd0] sm:$0xff]
    %v241 = vld [vmem:[%s3 + $0xd8] sm:$0xff]
    %v242 = vld [vmem:[%s3 + $0xe0] sm:$0xff]
    %v243 = vld [vmem:[%s3 + $0xe8] sm:$0xff]
    %v244 = vld [vmem:[%s3 + $0xf0] sm:$0xff]
    %v245 = vld [vmem:[%s3 + $0xf8] sm:$0xff]
    %v246 = vmul.f32 %v182, %v214
    %v247 = vmul.f32 %v183, %v215
    %v248 = vmul.f32 %v184, %v216
    %v249 = vmul.f32 %v185, %v217
    %v250 = vmul.f32 %v186, %v218
    %v251 = vmul.f32 %v187, %v219
    %v252 = vmul.f32 %v188, %v220
    %v253 = vmul.f32 %v189, %v221
    %v254 = vmul.f32 %v190, %v222
    %v255 = vmul.f32 %v191, %v223
    %v256 = vmul.f32 %v192, %v224
    %v257 = vmul.f32 %v193, %v225
    %v258 = vmul.f32 %v194, %v226
    %v259 = vmul.f32 %v195, %v227
    %v260 = vmul.f32 %v196, %v228
    %v261 = vmul.f32 %v197, %v229
    %v262 = vmul.f32 %v198, %v230
    %v263 = vmul.f32 %v199, %v231
    %v264 = vmul.f32 %v200, %v232
    %v265 = vmul.f32 %v201, %v233
    %v266 = vmul.f32 %v202, %v234
    %v267 = vmul.f32 %v203, %v235
    %v268 = vmul.f32 %v204, %v236
    %v269 = vmul.f32 %v205, %v237
    %v270 = vmul.f32 %v206, %v238
    %v271 = vmul.f32 %v207, %v239
    %v272 = vmul.f32 %v208, %v240
    %v273 = vmul.f32 %v209, %v241
    %v274 = vmul.f32 %v210, %v242
    %v275 = vmul.f32 %v211, %v243
    %v276 = vmul.f32 %v212, %v244
    %v277 = vmul.f32 %v213, %v245
    %278 = vmatprep.subr.mxu0 0.0
    %279 = vmatpush1.msra.mxu0 %v246
    %280 = vmatprep.subr.mxu0 0.0
    %281 = vmatpush1.msra.mxu0 %v247
    %282 = vmatprep.subr.mxu0 0.0
    %283 = vmatpush1.msra.mxu0 %v248
    %284 = vmatprep.subr.mxu0 0.0
    %285 = vmatpush1.msra.mxu0 %v249
    %286 = vmatprep.subr.mxu0 0.0
    %287 = vmatpush1.msra.mxu0 %v250
    %288 = vmatprep.subr.mxu0 0.0
    %289 = vmatpush1.msra.mxu0 %v251
    %290 = vmatprep.subr.mxu0 0.0
    %291 = vmatpush1.msra.mxu0 %v252
    %292 = vmatprep.subr.mxu0 0.0
    %293 = vmatpush1.msra.mxu0 %v253
    %294 = vmatprep.subr.mxu0 0.0
    %295 = vmatpush1.msra.mxu0 %v254
    %296 = vmatprep.subr.mxu0 0.0
    %297 = vmatpush1.msra.mxu0 %v255
    %298 = vmatprep.subr.mxu0 0.0
    %299 = vmatpush1.msra.mxu0 %v256
    %300 = vmatprep.subr.mxu0 0.0
    %301 = vmatpush1.msra.mxu0 %v257
    %302 = vmatprep.subr.mxu0 0.0
    %303 = vmatpush1.msra.mxu0 %v258
    %304 = vmatprep.subr.mxu0 0.0
    %305 = vmatpush1.msra.mxu0 %v259
    %306 = vmatprep.subr.mxu0 0.0
    %307 = vmatpush1.msra.mxu0 %v260
    %308 = vmatprep.subr.mxu0 0.0
    %309 = vmatpush1.msra.mxu0 %v261
    %310 = vmatprep.subr.mxu0 0.0
    %311 = vmatpush1.msra.mxu0 %v262
    %312 = vmatprep.subr.mxu0 0.0
    %313 = vmatpush1.msra.mxu0 %v263
    %314 = vmatprep.subr.mxu0 0.0
    %315 = vmatpush1.msra.mxu0 %v264
    %316 = vmatprep.subr.mxu0 0.0
    %317 = vmatpush1.msra.mxu0 %v265
    %318 = vmatprep.subr.mxu0 0.0
    %319 = vmatpush1.msra.mxu0 %v266
    %320 = vmatprep.subr.mxu0 0.0
    %321 = vmatpush1.msra.mxu0 %v267
    %322 = vmatprep.subr.mxu0 0.0
    %323 = vmatpush1.msra.mxu0 %v268
    %324 = vmatprep.subr.mxu0 0.0
    %325 = vmatpush1.msra.mxu0 %v269
    %326 = vmatprep.subr.mxu0 0.0
    %327 = vmatpush1.msra.mxu0 %v270
    %328 = vmatprep.subr.mxu0 0.0
    %329 = vmatpush1.msra.mxu0 %v271
    %330 = vmatprep.subr.mxu0 0.0
    %331 = vmatpush1.msra.mxu0 %v272
    %332 = vmatprep.subr.mxu0 0.0
    %333 = vmatpush1.msra.mxu0 %v273
    %334 = vmatprep.subr.mxu0 0.0
    %335 = vmatpush1.msra.mxu0 %v274
    %336 = vmatprep.subr.mxu0 0.0
    %337 = vmatpush1.msra.mxu0 %v275
    %338 = vmatprep.subr.mxu0 0.0
    %339 = vmatpush1.msra.mxu0 %v276
    %340 = vmatprep.subr.mxu0 0.0
    %341 = vmatpush1.msra.mxu0 %v277
    %342 = vmatprep.mubr.f32.mxu0 %v23
    %343 = vmatmul.mubr.f32.gmra.mrb[0].mxu0 %v22
    %v344 = vpop.f32.mrb[0].mxu0
    %v345 = vadd.f32 0.0, %v344
    %v346 = vpop.f32.mrb[0].mxu0
    %347 = vmatprep.mubr.f32.mxu0 %v25
    %348 = vmatmul.mubr.f32.gmra.mrb[0].mxu0 %v24
    %v349 = vpop.f32.mrb[0].mxu0
    %v350 = vadd.f32 0.0, %v349
    %v351 = vpop.f32.mrb[0].mxu0
    %352 = vmatprep.mubr.f32.mxu0 %v27
    %353 = vmatmul.mubr.f32.gmra.mrb[0].mxu0 %v26
    %v354 = vpop.f32.mrb[0].mxu0
    %v355 = vadd.f32 0.0, %v354
    %v356 = vpop.f32.mrb[0].mxu0
    %357 = vmatprep.mubr.f32.mxu0 %v29
    %358 = vmatmul.mubr.f32.gmra.mrb[0].mxu0 %v28
    %v359 = vpop.f32.mrb[0].mxu0
    %v360 = vadd.f32 0.0, %v359
    %v361 = vpop.f32.mrb[0].mxu0
    %362 = vmatprep.mubr.f32.mxu0 %v31
    %363 = vmatmul.mubr.f32.gmra.mrb[0].mxu0 %v30
    %v364 = vpop.f32.mrb[0].mxu0
    %v365 = vadd.f32 0.0, %v364
    %v366 = vpop.f32.mrb[0].mxu0
    %367 = vmatprep.mubr.f32.mxu0 %v33
    %368 = vmatmul.mubr.f32.gmra.mrb[0].mxu0 %v32
    %v369 = vpop.f32.mrb[0].mxu0
    %v370 = vadd.f32 0.0, %v369
    %v371 = vpop.f32.mrb[0].mxu0
    %372 = vmatprep.mubr.f32.mxu0 %v35
    %373 = vmatmul.mubr.f32.gmra.mrb[0].mxu0 %v34
    %v374 = vpop.f32.mrb[0].mxu0
    %v375 = vadd.f32 0.0, %v374
    %v376 = vpop.f32.mrb[0].mxu0
    %377 = vmatprep.mubr.f32.mxu0 %v37
    %378 = vmatmul.mubr.f32.gmra.mrb[0].mxu0 %v36
    %v379 = vpop.f32.mrb[0].mxu0
    %v380 = vadd.f32 0.0, %v379
    %v381 = vpop.f32.mrb[0].mxu0
    %382 = vmatprep.mubr.f32.mxu0 %v39
    %383 = vmatmul.mubr.f32.gmra.mrb[0].mxu0 %v38
    %v384 = vpop.f32.mrb[0].mxu0
    %v385 = vadd.f32 0.0, %v384
    %v386 = vpop.f32.mrb[0].mxu0
    %387 = vmatprep.mubr.f32.mxu0 %v41
    %388 = vmatmul.mubr.f32.gmra.mrb[0].mxu0 %v40
    %v389 = vpop.f32.mrb[0].mxu0
    %v390 = vadd.f32 0.0, %v389
    %v391 = vpop.f32.mrb[0].mxu0
    %392 = vmatprep.mubr.f32.mxu0 %v43
    %393 = vmatmul.mubr.f32.gmra.mrb[0].mxu0 %v42
    %v394 = vpop.f32.mrb[0].mxu0
    %v395 = vadd.f32 0.0, %v394
    %v396 = vpop.f32.mrb[0].mxu0
    %397 = vmatprep.mubr.f32.mxu0 %v45
    %398 = vmatmul.mubr.f32.gmra.mrb[0].mxu0 %v44
    %v399 = vpop.f32.mrb[0].mxu0
    %v400 = vadd.f32 0.0, %v399
    %v401 = vpop.f32.mrb[0].mxu0
    %402 = vmatprep.mubr.f32.mxu0 %v47
    %403 = vmatmul.mubr.f32.gmra.mrb[0].mxu0 %v46
    %v404 = vpop.f32.mrb[0].mxu0
    %v405 = vadd.f32 0.0, %v404
    %v406 = vpop.f32.mrb[0].mxu0
    %407 = vmatprep.mubr.f32.mxu0 %v49
    %408 = vmatmul.mubr.f32.gmra.mrb[0].mxu0 %v48
    %v409 = vpop.f32.mrb[0].mxu0
    %v410 = vadd.f32 0.0, %v409
    %v411 = vpop.f32.mrb[0].mxu0
    %412 = vmatprep.mubr.f32.mxu0 %v51
    %413 = vmatmul.mubr.f32.gmra.mrb[0].mxu0 %v50
    %v414 = vpop.f32.mrb[0].mxu0
    %v415 = vadd.f32 0.0, %v414
    %v416 = vpop.f32.mrb[0].mxu0
    %417 = vmatprep.mubr.f32.mxu0 %v53
    %418 = vmatmul.mubr.f32.gmra.mrb[0].mxu0 %v52
    %v419 = vpop.f32.mrb[0].mxu0
    %v420 = vadd.f32 0.0, %v419
    %v421 = vpop.f32.mrb[0].mxu0
    %422 = vmatprep.mubr.f32.mxu0 %v55
    %423 = vmatmul.mubr.f32.gmra.mrb[0].mxu0 %v54
    %v424 = vpop.f32.mrb[0].mxu0
    %v425 = vadd.f32 0.0, %v424
    %v426 = vpop.f32.mrb[0].mxu0
    %427 = vmatprep.mubr.f32.mxu0 %v57
    %428 = vmatmul.mubr.f32.gmra.mrb[0].mxu0 %v56
    %v429 = vpop.f32.mrb[0].mxu0
    %v430 = vadd.f32 0.0, %v429
    %v431 = vpop.f32.mrb[0].mxu0
    %432 = vmatprep.mubr.f32.mxu0 %v59
    %433 = vmatmul.mubr.f32.gmra.mrb[0].mxu0 %v58
    %v434 = vpop.f32.mrb[0].mxu0
    %v435 = vadd.f32 0.0, %v434
    %v436 = vpop.f32.mrb[0].mxu0
    %437 = vmatprep.mubr.f32.mxu0 %v61
    %438 = vmatmul.mubr.f32.gmra.mrb[0].mxu0 %v60
    %v439 = vpop.f32.mrb[0].mxu0
    %v440 = vadd.f32 0.0, %v439
    %v441 = vpop.f32.mrb[0].mxu0
    %442 = vmatprep.mubr.f32.mxu0 %v63
    %443 = vmatmul.mubr.f32.gmra.mrb[0].mxu0 %v62
    %v444 = vpop.f32.mrb[0].mxu0
    %v445 = vadd.f32 0.0, %v444
    %v446 = vpop.f32.mrb[0].mxu0
    %447 = vmatprep.mubr.f32.mxu0 %v65
    %448 = vmatmul.mubr.f32.gmra.mrb[0].mxu0 %v64
    %v449 = vpop.f32.mrb[0].mxu0
    %v450 = vadd.f32 0.0, %v449
    %v451 = vpop.f32.mrb[0].mxu0
    %452 = vmatprep.mubr.f32.mxu0 %v67
    %453 = vmatmul.mubr.f32.gmra.mrb[0].mxu0 %v66
    %v454 = vpop.f32.mrb[0].mxu0
    %v455 = vadd.f32 0.0, %v454
    %v456 = vpop.f32.mrb[0].mxu0
    %457 = vmatprep.mubr.f32.mxu0 %v69
    %458 = vmatmul.mubr.f32.gmra.mrb[0].mxu0 %v68
    %v459 = vpop.f32.mrb[0].mxu0
    %v460 = vadd.f32 0.0, %v459
    %v461 = vpop.f32.mrb[0].mxu0
    %462 = vmatprep.mubr.f32.mxu0 %v71
    %463 = vmatmul.mubr.f32.gmra.mrb[0].mxu0 %v70
    %v464 = vpop.f32.mrb[0].mxu0
    %v465 = vadd.f32 0.0, %v464
    %v466 = vpop.f32.mrb[0].mxu0
    %467 = vmatprep.mubr.f32.mxu0 %v73
    %468 = vmatmul.mubr.f32.gmra.mrb[0].mxu0 %v72
    %v469 = vpop.f32.mrb[0].mxu0
    %v470 = vadd.f32 0.0, %v469
    %v471 = vpop.f32.mrb[0].mxu0
    %472 = vmatprep.mubr.f32.mxu0 %v75
    %473 = vmatmul.mubr.f32.gmra.mrb[0].mxu0 %v74
    %v474 = vpop.f32.mrb[0].mxu0
    %v475 = vadd.f32 0.0, %v474
    %v476 = vpop.f32.mrb[0].mxu0
    %477 = vmatprep.mubr.f32.mxu0 %v77
    %478 = vmatmul.mubr.f32.gmra.mrb[0].mxu0 %v76
    %v479 = vpop.f32.mrb[0].mxu0
    %v480 = vadd.f32 0.0, %v479
    %v481 = vpop.f32.mrb[0].mxu0
    %482 = vmatprep.mubr.f32.mxu0 %v79
    %483 = vmatmul.mubr.f32.gmra.mrb[0].mxu0 %v78
    %v484 = vpop.f32.mrb[0].mxu0
    %v485 = vadd.f32 0.0, %v484
    %v486 = vpop.f32.mrb[0].mxu0
    %487 = vmatprep.mubr.f32.mxu0 %v81
    %488 = vmatmul.mubr.f32.gmra.mrb[0].mxu0 %v80
    %v489 = vpop.f32.mrb[0].mxu0
    %v490 = vadd.f32 0.0, %v489
    %v491 = vpop.f32.mrb[0].mxu0
    %492 = vmatprep.mubr.f32.mxu0 %v83
    %493 = vmatmul.mubr.f32.gmra.mrb[0].mxu0 %v82
    %v494 = vpop.f32.mrb[0].mxu0
    %v495 = vadd.f32 0.0, %v494
    %v496 = vpop.f32.mrb[0].mxu0
    %497 = vmatprep.mubr.f32.mxu0 %v85
    %498 = vmatmul.mubr.f32.gmra.mrb[0].mxu0 %v84
    %v499 = vpop.f32.mrb[0].mxu0
    %v500 = vadd.f32 0.0, %v499
    %v501 = vpop.f32.mrb[0].mxu0
    %502 = vdwg.mxu0
    %v503 = vadd.f32 %v86, %v345
    %v504 = vadd.f32 %v87, %v350
    %v505 = vadd.f32 %v88, %v355
    %v506 = vadd.f32 %v89, %v360
    %v507 = vadd.f32 %v90, %v365
    %v508 = vadd.f32 %v91, %v370
    %v509 = vadd.f32 %v92, %v375
    %v510 = vadd.f32 %v93, %v380
    %v511 = vadd.f32 %v94, %v385
    %v512 = vadd.f32 %v95, %v390
    %v513 = vadd.f32 %v96, %v395
    %v514 = vadd.f32 %v97, %v400
    %v515 = vadd.f32 %v98, %v405
    %v516 = vadd.f32 %v99, %v410
    %v517 = vadd.f32 %v100, %v415
    %v518 = vadd.f32 %v101, %v420
    %v519 = vadd.f32 %v102, %v425
    %v520 = vadd.f32 %v103, %v430
    %v521 = vadd.f32 %v104, %v435
    %v522 = vadd.f32 %v105, %v440
    %v523 = vadd.f32 %v106, %v445
    %v524 = vadd.f32 %v107, %v450
    %v525 = vadd.f32 %v108, %v455
    %v526 = vadd.f32 %v109, %v460
    %v527 = vadd.f32 %v110, %v465
    %v528 = vadd.f32 %v111, %v470
    %v529 = vadd.f32 %v112, %v475
    %v530 = vadd.f32 %v113, %v480
    %v531 = vadd.f32 %v114, %v485
    %v532 = vadd.f32 %v115, %v490
    %v533 = vadd.f32 %v116, %v495
    %v534 = vadd.f32 %v117, %v500
    %535 = vst [vmem:[#allocation2] sm:$0xff] %v503
    %536 = vst [vmem:[#allocation2 + $0x8] sm:$0xff] %v504
    %537 = vst [vmem:[#allocation2 + $0x10] sm:$0xff] %v505
    %538 = vst [vmem:[#allocation2 + $0x18] sm:$0xff] %v506
    %539 = vst [vmem:[#allocation2 + $0x20] sm:$0xff] %v507
    %540 = vst [vmem:[#allocation2 + $0x28] sm:$0xff] %v508
    %541 = vst [vmem:[#allocation2 + $0x30] sm:$0xff] %v509
    %542 = vst [vmem:[#allocation2 + $0x38] sm:$0xff] %v510
    %543 = vst [vmem:[#allocation2 + $0x40] sm:$0xff] %v511
    %544 = vst [vmem:[#allocation2 + $0x48] sm:$0xff] %v512
    %545 = vst [vmem:[#allocation2 + $0x50] sm:$0xff] %v513
    %546 = vst [vmem:[#allocation2 + $0x58] sm:$0xff] %v514
    %547 = vst [vmem:[#allocation2 + $0x60] sm:$0xff] %v515
    %548 = vst [vmem:[#allocation2 + $0x68] sm:$0xff] %v516
    %549 = vst [vmem:[#allocation2 + $0x70] sm:$0xff] %v517
    %550 = vst [vmem:[#allocation2 + $0x78] sm:$0xff] %v518
    %551 = vst [vmem:[#allocation2 + $0x80] sm:$0xff] %v519
    %552 = vst [vmem:[#allocation2 + $0x88] sm:$0xff] %v520
    %553 = vst [vmem:[#allocation2 + $0x90] sm:$0xff] %v521
    %554 = vst [vmem:[#allocation2 + $0x98] sm:$0xff] %v522
    %555 = vst [vmem:[#allocation2 + $0xa0] sm:$0xff] %v523
    %556 = vst [vmem:[#allocation2 + $0xa8] sm:$0xff] %v524
    %557 = vst [vmem:[#allocation2 + $0xb0] sm:$0xff] %v525
    %558 = vst [vmem:[#allocation2 + $0xb8] sm:$0xff] %v526
    %559 = vst [vmem:[#allocation2 + $0xc0] sm:$0xff] %v527
    %560 = vst [vmem:[#allocation2 + $0xc8] sm:$0xff] %v528
    %561 = vst [vmem:[#allocation2 + $0xd0] sm:$0xff] %v529
    %562 = vst [vmem:[#allocation2 + $0xd8] sm:$0xff] %v530
    %563 = vst [vmem:[#allocation2 + $0xe0] sm:$0xff] %v531
    %564 = vst [vmem:[#allocation2 + $0xe8] sm:$0xff] %v532
    %565 = vst [vmem:[#allocation2 + $0xf0] sm:$0xff] %v533
    %566 = vst [vmem:[#allocation2 + $0xf8] sm:$0xff] %v534
    %v567 = vsub.f32 %v503, %v214
    %v568 = vsub.f32 %v504, %v215
    %v569 = vsub.f32 %v505, %v216
    %v570 = vsub.f32 %v506, %v217
    %v571 = vsub.f32 %v507, %v218
    %v572 = vsub.f32 %v508, %v219
    %v573 = vsub.f32 %v509, %v220
    %v574 = vsub.f32 %v510, %v221
    %v575 = vsub.f32 %v511, %v222
    %v576 = vsub.f32 %v512, %v223
    %v577 = vsub.f32 %v513, %v224
    %v578 = vsub.f32 %v514, %v225
    %v579 = vsub.f32 %v515, %v226
    %v580 = vsub.f32 %v516, %v227
    %v581 = vsub.f32 %v517, %v228
    %v582 = vsub.f32 %v518, %v229
    %v583 = vsub.f32 %v519, %v230
    %v584 = vsub.f32 %v520, %v231
    %v585 = vsub.f32 %v521, %v232
    %v586 = vsub.f32 %v522, %v233
    %v587 = vsub.f32 %v523, %v234
    %v588 = vsub.f32 %v524, %v235
    %v589 = vsub.f32 %v525, %v236
    %v590 = vsub.f32 %v526, %v237
    %v591 = vsub.f32 %v527, %v238
    %v592 = vsub.f32 %v528, %v239
    %v593 = vsub.f32 %v529, %v240
    %v594 = vsub.f32 %v530, %v241
    %v595 = vsub.f32 %v531, %v242
    %v596 = vsub.f32 %v532, %v243
    %v597 = vsub.f32 %v533, %v244
    %v598 = vsub.f32 %v534, %v245
    %v599 = vand.u32 2147483647, %v567
    %v600 = vand.u32 2147483647, %v568
    %v601 = vand.u32 2147483647, %v569
    %v602 = vand.u32 2147483647, %v570
    %v603 = vand.u32 2147483647, %v571
    %v604 = vand.u32 2147483647, %v572
    %v605 = vand.u32 2147483647, %v573
    %v606 = vand.u32 2147483647, %v574
    %v607 = vand.u32 2147483647, %v575
    %v608 = vand.u32 2147483647, %v576
    %v609 = vand.u32 2147483647, %v577
    %v610 = vand.u32 2147483647, %v578
    %v611 = vand.u32 2147483647, %v579
    %v612 = vand.u32 2147483647, %v580
    %v613 = vand.u32 2147483647, %v581
    %v614 = vand.u32 2147483647, %v582
    %v615 = vand.u32 2147483647, %v583
    %v616 = vand.u32 2147483647, %v584
    %v617 = vand.u32 2147483647, %v585
    %v618 = vand.u32 2147483647, %v586
    %v619 = vand.u32 2147483647, %v587
    %v620 = vand.u32 2147483647, %v588
    %v621 = vand.u32 2147483647, %v589
    %v622 = vand.u32 2147483647, %v590
    %v623 = vand.u32 2147483647, %v591
    %v624 = vand.u32 2147483647, %v592
    %v625 = vand.u32 2147483647, %v593
    %v626 = vand.u32 2147483647, %v594
    %v627 = vand.u32 2147483647, %v595
    %v628 = vand.u32 2147483647, %v596
    %v629 = vand.u32 2147483647, %v597
    %v630 = vand.u32 2147483647, %v598
    %v631 = vadd.f32 %v599, %v600
    %v632 = vadd.f32 %v631, %v601
    %v633 = vadd.f32 %v632, %v602
    %v634 = vadd.f32 %v633, %v603
    %v635 = vadd.f32 %v634, %v604
    %v636 = vadd.f32 %v635, %v605
    %v637 = vadd.f32 %v636, %v606
    %v638 = vadd.f32 %v637, %v607
    %v639 = vadd.f32 %v638, %v608
    %v640 = vadd.f32 %v639, %v609
    %v641 = vadd.f32 %v640, %v610
    %v642 = vadd.f32 %v641, %v611
    %v643 = vadd.f32 %v642, %v612
    %v644 = vadd.f32 %v643, %v613
    %v645 = vadd.f32 %v644, %v614
    %v646 = vadd.f32 %v645, %v615
    %v647 = vadd.f32 %v646, %v616
    %v648 = vadd.f32 %v647, %v617
    %v649 = vadd.f32 %v648, %v618
    %v650 = vadd.f32 %v649, %v619
    %v651 = vadd.f32 %v650, %v620
    %v652 = vadd.f32 %v651, %v621
    %v653 = vadd.f32 %v652, %v622
    %v654 = vadd.f32 %v653, %v623
    %v655 = vadd.f32 %v654, %v624
    %v656 = vadd.f32 %v655, %v625
    %v657 = vadd.f32 %v656, %v626
    %v658 = vadd.f32 %v657, %v627
    %v659 = vadd.f32 %v658, %v628
    %v660 = vadd.f32 %v659, %v629
    %v661 = vadd.f32 %v660, %v630
    %v662 = vrot.slane %v661, 4
    %v663 = vadd.f32 %v661, %v662
    %v664 = vrot.slane %v663, 2
    %v665 = vadd.f32 %v663, %v664
    %v666 = vrot.slane %v665, 1
    %v667 = vadd.f32 %v665, %v666
    %668 = vst [vmem:[%s6] sm:$0x1] %v667
    %v669 = vand.u32 2147483647, %v503
    %v670 = vand.u32 2147483647, %v504
    %v671 = vand.u32 2147483647, %v505
    %v672 = vand.u32 2147483647, %v506
    %v673 = vand.u32 2147483647, %v507
    %v674 = vand.u32 2147483647, %v508
    %v675 = vand.u32 2147483647, %v509
    %v676 = vand.u32 2147483647, %v510
    %v677 = vand.u32 2147483647, %v511
    %v678 = vand.u32 2147483647, %v512
    %v679 = vand.u32 2147483647, %v513
    %v680 = vand.u32 2147483647, %v514
    %v681 = vand.u32 2147483647, %v515
    %v682 = vand.u32 2147483647, %v516
    %v683 = vand.u32 2147483647, %v517
    %v684 = vand.u32 2147483647, %v518
    %v685 = vand.u32 2147483647, %v519
    %v686 = vand.u32 2147483647, %v520
    %v687 = vand.u32 2147483647, %v521
    %v688 = vand.u32 2147483647, %v522
    %v689 = vand.u32 2147483647, %v523
    %v690 = vand.u32 2147483647, %v524
    %v691 = vand.u32 2147483647, %v525
    %v692 = vand.u32 2147483647, %v526
    %v693 = vand.u32 2147483647, %v527
    %v694 = vand.u32 2147483647, %v528
    %v695 = vand.u32 2147483647, %v529
    %v696 = vand.u32 2147483647, %v530
    %v697 = vand.u32 2147483647, %v531
    %v698 = vand.u32 2147483647, %v532
    %v699 = vand.u32 2147483647, %v533
    %v700 = vand.u32 2147483647, %v534
    %v701 = vadd.f32 %v669, %v670
    %v702 = vadd.f32 %v701, %v671
    %v703 = vadd.f32 %v702, %v672
    %v704 = vadd.f32 %v703, %v673
    %v705 = vadd.f32 %v704, %v674
    %v706 = vadd.f32 %v705, %v675
    %v707 = vadd.f32 %v706, %v676
    %v708 = vadd.f32 %v707, %v677
    %v709 = vadd.f32 %v708, %v678
    %v710 = vadd.f32 %v709, %v679
    %v711 = vadd.f32 %v710, %v680
    %v712 = vadd.f32 %v711, %v681
    %v713 = vadd.f32 %v712, %v682
    %v714 = vadd.f32 %v713, %v683
    %v715 = vadd.f32 %v714, %v684
    %v716 = vadd.f32 %v715, %v685
    %v717 = vadd.f32 %v716, %v686
    %v718 = vadd.f32 %v717, %v687
    %v719 = vadd.f32 %v718, %v688
    %v720 = vadd.f32 %v719, %v689
    %v721 = vadd.f32 %v720, %v690
    %v722 = vadd.f32 %v721, %v691
    %v723 = vadd.f32 %v722, %v692
    %v724 = vadd.f32 %v723, %v693
    %v725 = vadd.f32 %v724, %v694
    %v726 = vadd.f32 %v725, %v695
    %v727 = vadd.f32 %v726, %v696
    %v728 = vadd.f32 %v727, %v697
    %v729 = vadd.f32 %v728, %v698
    %v730 = vadd.f32 %v729, %v699
    %v731 = vadd.f32 %v730, %v700
    %v732 = vrot.slane %v731, 4
    %v733 = vadd.f32 %v731, %v732
    %v734 = vrot.slane %v733, 2
    %v735 = vadd.f32 %v733, %v734
    %v736 = vrot.slane %v735, 1
    %v737 = vadd.f32 %v735, %v736
    %738 = vst [vmem:[%s7] sm:$0x1] %v737
    %v739 = vmul.f32 %v182, %v503
    %v740 = vmul.f32 %v183, %v504
    %v741 = vmul.f32 %v184, %v505
    %v742 = vmul.f32 %v185, %v506
    %v743 = vmul.f32 %v186, %v507
    %v744 = vmul.f32 %v187, %v508
    %v745 = vmul.f32 %v188, %v509
    %v746 = vmul.f32 %v189, %v510
    %v747 = vmul.f32 %v190, %v511
    %v748 = vmul.f32 %v191, %v512
    %v749 = vmul.f32 %v192, %v513
    %v750 = vmul.f32 %v193, %v514
    %v751 = vmul.f32 %v194, %v515
    %v752 = vmul.f32 %v195, %v516
    %v753 = vmul.f32 %v196, %v517
    %v754 = vmul.f32 %v197, %v518
    %v755 = vmul.f32 %v198, %v519
    %v756 = vmul.f32 %v199, %v520
    %v757 = vmul.f32 %v200, %v521
    %v758 = vmul.f32 %v201, %v522
    %v759 = vmul.f32 %v202, %v523
    %v760 = vmul.f32 %v203, %v524
    %v761 = vmul.f32 %v204, %v525
    %v762 = vmul.f32 %v205, %v526
    %v763 = vmul.f32 %v206, %v527
    %v764 = vmul.f32 %v207, %v528
    %v765 = vmul.f32 %v208, %v529
    %v766 = vmul.f32 %v209, %v530
    %v767 = vmul.f32 %v210, %v531
    %v768 = vmul.f32 %v211, %v532
    %v769 = vmul.f32 %v212, %v533
    %v770 = vmul.f32 %v213, %v534
    %771 = vmatprep.subr.mxu0 0.0
    %772 = vmatpush1.msra.mxu0 %v739
    %773 = vmatprep.subr.mxu0 0.0
    %774 = vmatpush1.msra.mxu0 %v740
    %775 = vmatprep.subr.mxu0 0.0
    %776 = vmatpush1.msra.mxu0 %v741
    %777 = vmatprep.subr.mxu0 0.0
    %778 = vmatpush1.msra.mxu0 %v742
    %779 = vmatprep.subr.mxu0 0.0
    %780 = vmatpush1.msra.mxu0 %v743
    %781 = vmatprep.subr.mxu0 0.0
    %782 = vmatpush1.msra.mxu0 %v744
    %783 = vmatprep.subr.mxu0 0.0
    %784 = vmatpush1.msra.mxu0 %v745
    %785 = vmatprep.subr.mxu0 0.0
    %786 = vmatpush1.msra.mxu0 %v746
    %787 = vmatprep.subr.mxu0 0.0
    %788 = vmatpush1.msra.mxu0 %v747
    %789 = vmatprep.subr.mxu0 0.0
    %790 = vmatpush1.msra.mxu0 %v748
    %791 = vmatprep.subr.mxu0 0.0
    %792 = vmatpush1.msra.mxu0 %v749
    %793 = vmatprep.subr.mxu0 0.0
    %794 = vmatpush1.msra.mxu0 %v750
    %795 = vmatprep.subr.mxu0 0.0
    %796 = vmatpush1.msra.mxu0 %v751
    %797 = vmatprep.subr.mxu0 0.0
    %798 = vmatpush1.msra.mxu0 %v752
    %799 = vmatprep.subr.mxu0 0.0
    %800 = vmatpush1.msra.mxu0 %v753
    %801 = vmatprep.subr.mxu0 0.0
    %802 = vmatpush1.msra.mxu0 %v754
    %803 = vmatprep.subr.mxu0 0.0
    %804 = vmatpush1.msra.mxu0 %v755
    %805 = vmatprep.subr.mxu0 0.0
    %806 = vmatpush1.msra.mxu0 %v756
    %807 = vmatprep.subr.mxu0 0.0
    %808 = vmatpush1.msra.mxu0 %v757
    %809 = vmatprep.subr.mxu0 0.0
    %810 = vmatpush1.msra.mxu0 %v758
    %811 = vmatprep.subr.mxu0 0.0
    %812 = vmatpush1.msra.mxu0 %v759
    %813 = vmatprep.subr.mxu0 0.0
    %814 = vmatpush1.msra.mxu0 %v760
    %815 = vmatprep.subr.mxu0 0.0
    %816 = vmatpush1.msra.mxu0 %v761
    %817 = vmatprep.subr.mxu0 0.0
    %818 = vmatpush1.msra.mxu0 %v762
    %819 = vmatprep.subr.mxu0 0.0
    %820 = vmatpush1.msra.mxu0 %v763
    %821 = vmatprep.subr.mxu0 0.0
    %822 = vmatpush1.msra.mxu0 %v764
    %823 = vmatprep.subr.mxu0 0.0
    %824 = vmatpush1.msra.mxu0 %v765
    %825 = vmatprep.subr.mxu0 0.0
    %826 = vmatpush1.msra.mxu0 %v766
    %827 = vmatprep.subr.mxu0 0.0
    %828 = vmatpush1.msra.mxu0 %v767
    %829 = vmatprep.subr.mxu0 0.0
    %830 = vmatpush1.msra.mxu0 %v768
    %831 = vmatprep.subr.mxu0 0.0
    %832 = vmatpush1.msra.mxu0 %v769
    %833 = vmatprep.subr.mxu0 0.0
    %834 = vmatpush1.msra.mxu0 %v770
    %835 = vmatprep.mubr.f32.mxu0 %v23
    %836 = vmatmul.mubr.f32.gmra.mrb[0].mxu0 %v22
    %v837 = vpop.f32.mrb[0].mxu0
    %v838 = vadd.f32 0.0, %v837
    %v839 = vpop.f32.mrb[0].mxu0
    %840 = vmatprep.mubr.f32.mxu0 %v25
    %841 = vmatmul.mubr.f32.gmra.mrb[0].mxu0 %v24
    %v842 = vpop.f32.mrb[0].mxu0
    %v843 = vadd.f32 0.0, %v842
    %v844 = vpop.f32.mrb[0].mxu0
    %845 = vmatprep.mubr.f32.mxu0 %v27
    %846 = vmatmul.mubr.f32.gmra.mrb[0].mxu0 %v26
    %v847 = vpop.f32.mrb[0].mxu0
    %v848 = vadd.f32 0.0, %v847
    %v849 = vpop.f32.mrb[0].mxu0
    %850 = vmatprep.mubr.f32.mxu0 %v29
    %851 = vmatmul.mubr.f32.gmra.mrb[0].mxu0 %v28
    %v852 = vpop.f32.mrb[0].mxu0
    %v853 = vadd.f32 0.0, %v852
    %v854 = vpop.f32.mrb[0].mxu0
    %855 = vmatprep.mubr.f32.mxu0 %v31
    %856 = vmatmul.mubr.f32.gmra.mrb[0].mxu0 %v30
    %v857 = vpop.f32.mrb[0].mxu0
    %v858 = vadd.f32 0.0, %v857
    %v859 = vpop.f32.mrb[0].mxu0
    %860 = vmatprep.mubr.f32.mxu0 %v33
    %861 = vmatmul.mubr.f32.gmra.mrb[0].mxu0 %v32
    %v862 = vpop.f32.mrb[0].mxu0
    %v863 = vadd.f32 0.0, %v862
    %v864 = vpop.f32.mrb[0].mxu0
    %865 = vmatprep.mubr.f32.mxu0 %v35
    %866 = vmatmul.mubr.f32.gmra.mrb[0].mxu0 %v34
    %v867 = vpop.f32.mrb[0].mxu0
    %v868 = vadd.f32 0.0, %v867
    %v869 = vpop.f32.mrb[0].mxu0
    %870 = vmatprep.mubr.f32.mxu0 %v37
    %871 = vmatmul.mubr.f32.gmra.mrb[0].mxu0 %v36
    %v872 = vpop.f32.mrb[0].mxu0
    %v873 = vadd.f32 0.0, %v872
    %v874 = vpop.f32.mrb[0].mxu0
    %875 = vmatprep.mubr.f32.mxu0 %v39
    %876 = vmatmul.mubr.f32.gmra.mrb[0].mxu0 %v38
    %v877 = vpop.f32.mrb[0].mxu0
    %v878 = vadd.f32 0.0, %v877
    %v879 = vpop.f32.mrb[0].mxu0
    %880 = vmatprep.mubr.f32.mxu0 %v41
    %881 = vmatmul.mubr.f32.gmra.mrb[0].mxu0 %v40
    %v882 = vpop.f32.mrb[0].mxu0
    %v883 = vadd.f32 0.0, %v882
    %v884 = vpop.f32.mrb[0].mxu0
    %885 = vmatprep.mubr.f32.mxu0 %v43
    %886 = vmatmul.mubr.f32.gmra.mrb[0].mxu0 %v42
    %v887 = vpop.f32.mrb[0].mxu0
    %v888 = vadd.f32 0.0, %v887
    %v889 = vpop.f32.mrb[0].mxu0
    %890 = vmatprep.mubr.f32.mxu0 %v45
    %891 = vmatmul.mubr.f32.gmra.mrb[0].mxu0 %v44
    %v892 = vpop.f32.mrb[0].mxu0
    %v893 = vadd.f32 0.0, %v892
    %v894 = vpop.f32.mrb[0].mxu0
    %895 = vmatprep.mubr.f32.mxu0 %v47
    %896 = vmatmul.mubr.f32.gmra.mrb[0].mxu0 %v46
    %v897 = vpop.f32.mrb[0].mxu0
    %v898 = vadd.f32 0.0, %v897
    %v899 = vpop.f32.mrb[0].mxu0
    %900 = vmatprep.mubr.f32.mxu0 %v49
    %901 = vmatmul.mubr.f32.gmra.mrb[0].mxu0 %v48
    %v902 = vpop.f32.mrb[0].mxu0
    %v903 = vadd.f32 0.0, %v902
    %v904 = vpop.f32.mrb[0].mxu0
    %905 = vmatprep.mubr.f32.mxu0 %v51
    %906 = vmatmul.mubr.f32.gmra.mrb[0].mxu0 %v50
    %v907 = vpop.f32.mrb[0].mxu0
    %v908 = vadd.f32 0.0, %v907
    %v909 = vpop.f32.mrb[0].mxu0
    %910 = vmatprep.mubr.f32.mxu0 %v53
    %911 = vmatmul.mubr.f32.gmra.mrb[0].mxu0 %v52
    %v912 = vpop.f32.mrb[0].mxu0
    %v913 = vadd.f32 0.0, %v912
    %v914 = vpop.f32.mrb[0].mxu0
    %915 = vmatprep.mubr.f32.mxu0 %v55
    %916 = vmatmul.mubr.f32.gmra.mrb[0].mxu0 %v54
    %v917 = vpop.f32.mrb[0].mxu0
    %v918 = vadd.f32 0.0, %v917
    %v919 = vpop.f32.mrb[0].mxu0
    %920 = vmatprep.mubr.f32.mxu0 %v57
    %921 = vmatmul.mubr.f32.gmra.mrb[0].mxu0 %v56
    %v922 = vpop.f32.mrb[0].mxu0
    %v923 = vadd.f32 0.0, %v922
    %v924 = vpop.f32.mrb[0].mxu0
    %925 = vmatprep.mubr.f32.mxu0 %v59
    %926 = vmatmul.mubr.f32.gmra.mrb[0].mxu0 %v58
    %v927 = vpop.f32.mrb[0].mxu0
    %v928 = vadd.f32 0.0, %v927
    %v929 = vpop.f32.mrb[0].mxu0
    %930 = vmatprep.mubr.f32.mxu0 %v61
    %931 = vmatmul.mubr.f32.gmra.mrb[0].mxu0 %v60
    %v932 = vpop.f32.mrb[0].mxu0
    %v933 = vadd.f32 0.0, %v932
    %v934 = vpop.f32.mrb[0].mxu0
    %935 = vmatprep.mubr.f32.mxu0 %v63
    %936 = vmatmul.mubr.f32.gmra.mrb[0].mxu0 %v62
    %v937 = vpop.f32.mrb[0].mxu0
    %v938 = vadd.f32 0.0, %v937
    %v939 = vpop.f32.mrb[0].mxu0
    %940 = vmatprep.mubr.f32.mxu0 %v65
    %941 = vmatmul.mubr.f32.gmra.mrb[0].mxu0 %v64
    %v942 = vpop.f32.mrb[0].mxu0
    %v943 = vadd.f32 0.0, %v942
    %v944 = vpop.f32.mrb[0].mxu0
    %945 = vmatprep.mubr.f32.mxu0 %v67
    %946 = vmatmul.mubr.f32.gmra.mrb[0].mxu0 %v66
    %v947 = vpop.f32.mrb[0].mxu0
    %v948 = vadd.f32 0.0, %v947
    %v949 = vpop.f32.mrb[0].mxu0
    %950 = vmatprep.mubr.f32.mxu0 %v69
    %951 = vmatmul.mubr.f32.gmra.mrb[0].mxu0 %v68
    %v952 = vpop.f32.mrb[0].mxu0
    %v953 = vadd.f32 0.0, %v952
    %v954 = vpop.f32.mrb[0].mxu0
    %955 = vmatprep.mubr.f32.mxu0 %v71
    %956 = vmatmul.mubr.f32.gmra.mrb[0].mxu0 %v70
    %v957 = vpop.f32.mrb[0].mxu0
    %v958 = vadd.f32 0.0, %v957
    %v959 = vpop.f32.mrb[0].mxu0
    %960 = vmatprep.mubr.f32.mxu0 %v73
    %961 = vmatmul.mubr.f32.gmra.mrb[0].mxu0 %v72
    %v962 = vpop.f32.mrb[0].mxu0
    %v963 = vadd.f32 0.0, %v962
    %v964 = vpop.f32.mrb[0].mxu0
    %965 = vmatprep.mubr.f32.mxu0 %v75
    %966 = vmatmul.mubr.f32.gmra.mrb[0].mxu0 %v74
    %v967 = vpop.f32.mrb[0].mxu0
    %v968 = vadd.f32 0.0, %v967
    %v969 = vpop.f32.mrb[0].mxu0
    %970 = vmatprep.mubr.f32.mxu0 %v77
    %971 = vmatmul.mubr.f32.gmra.mrb[0].mxu0 %v76
    %v972 = vpop.f32.mrb[0].mxu0
    %v973 = vadd.f32 0.0, %v972
    %v974 = vpop.f32.mrb[0].mxu0
    %975 = vmatprep.mubr.f32.mxu0 %v79
    %976 = vmatmul.mubr.f32.gmra.mrb[0].mxu0 %v78
    %v977 = vpop.f32.mrb[0].mxu0
    %v978 = vadd.f32 0.0, %v977
    %v979 = vpop.f32.mrb[0].mxu0
    %980 = vmatprep.mubr.f32.mxu0 %v81
    %981 = vmatmul.mubr.f32.gmra.mrb[0].mxu0 %v80
    %v982 = vpop.f32.mrb[0].mxu0
    %v983 = vadd.f32 0.0, %v982
    %v984 = vpop.f32.mrb[0].mxu0
    %985 = vmatprep.mubr.f32.mxu0 %v83
    %986 = vmatmul.mubr.f32.gmra.mrb[0].mxu0 %v82
    %v987 = vpop.f32.mrb[0].mxu0
    %v988 = vadd.f32 0.0, %v987
    %v989 = vpop.f32.mrb[0].mxu0
    %990 = vmatprep.mubr.f32.mxu0 %v85
    %991 = vmatmul.mubr.f32.gmra.mrb[0].mxu0 %v84
    %v992 = vpop.f32.mrb[0].mxu0
    %v993 = vadd.f32 0.0, %v992
    %v994 = vpop.f32.mrb[0].mxu0
    %995 = vdwg.mxu0
    %v996 = vadd.f32 %v86, %v838
    %v997 = vadd.f32 %v87, %v843
    %v998 = vadd.f32 %v88, %v848
    %v999 = vadd.f32 %v89, %v853
    %v1000 = vadd.f32 %v90, %v858
    %v1001 = vadd.f32 %v91, %v863
    %v1002 = vadd.f32 %v92, %v868
    %v1003 = vadd.f32 %v93, %v873
    %v1004 = vadd.f32 %v94, %v878
    %v1005 = vadd.f32 %v95, %v883
    %v1006 = vadd.f32 %v96, %v888
    %v1007 = vadd.f32 %v97, %v893
    %v1008 = vadd.f32 %v98, %v898
    %v1009 = vadd.f32 %v99, %v903
    %v1010 = vadd.f32 %v100, %v908
    %v1011 = vadd.f32 %v101, %v913
    %v1012 = vadd.f32 %v102, %v918
    %v1013 = vadd.f32 %v103, %v923
    %v1014 = vadd.f32 %v104, %v928
    %v1015 = vadd.f32 %v105, %v933
    %v1016 = vadd.f32 %v106, %v938
    %v1017 = vadd.f32 %v107, %v943
    %v1018 = vadd.f32 %v108, %v948
    %v1019 = vadd.f32 %v109, %v953
    %v1020 = vadd.f32 %v110, %v958
    %v1021 = vadd.f32 %v111, %v963
    %v1022 = vadd.f32 %v112, %v968
    %v1023 = vadd.f32 %v113, %v973
    %v1024 = vadd.f32 %v114, %v978
    %v1025 = vadd.f32 %v115, %v983
    %v1026 = vadd.f32 %v116, %v988
    %v1027 = vadd.f32 %v117, %v993
    %v1028 = vmul.f32 %v182, %v996
    %v1029 = vmul.f32 %v183, %v997
    %v1030 = vmul.f32 %v184, %v998
    %v1031 = vmul.f32 %v185, %v999
    %v1032 = vmul.f32 %v186, %v1000
    %v1033 = vmul.f32 %v187, %v1001
    %v1034 = vmul.f32 %v188, %v1002
    %v1035 = vmul.f32 %v189, %v1003
    %v1036 = vmul.f32 %v190, %v1004
    %v1037 = vmul.f32 %v191, %v1005
    %v1038 = vmul.f32 %v192, %v1006
    %v1039 = vmul.f32 %v193, %v1007
    %v1040 = vmul.f32 %v194, %v1008
    %v1041 = vmul.f32 %v195, %v1009
    %v1042 = vmul.f32 %v196, %v1010
    %v1043 = vmul.f32 %v197, %v1011
    %v1044 = vmul.f32 %v198, %v1012
    %v1045 = vmul.f32 %v199, %v1013
    %v1046 = vmul.f32 %v200, %v1014
    %v1047 = vmul.f32 %v201, %v1015
    %v1048 = vmul.f32 %v202, %v1016
    %v1049 = vmul.f32 %v203, %v1017
    %v1050 = vmul.f32 %v204, %v1018
    %v1051 = vmul.f32 %v205, %v1019
    %v1052 = vmul.f32 %v206, %v1020
    %v1053 = vmul.f32 %v207, %v1021
    %v1054 = vmul.f32 %v208, %v1022
    %v1055 = vmul.f32 %v209, %v1023
    %v1056 = vmul.f32 %v210, %v1024
    %v1057 = vmul.f32 %v211, %v1025
    %v1058 = vmul.f32 %v212, %v1026
    %v1059 = vmul.f32 %v213, %v1027
    %1060 = vmatprep.subr.mxu0 0.0
    %1061 = vmatpush1.msra.mxu0 %v1028
    %1062 = vmatprep.subr.mxu0 0.0
    %1063 = vmatpush1.msra.mxu0 %v1029
    %1064 = vmatprep.subr.mxu0 0.0
    %1065 = vmatpush1.msra.mxu0 %v1030
    %1066 = vmatprep.subr.mxu0 0.0
    %1067 = vmatpush1.msra.mxu0 %v1031
    %1068 = vmatprep.subr.mxu0 0.0
    %1069 = vmatpush1.msra.mxu0 %v1032
    %1070 = vmatprep.subr.mxu0 0.0
    %1071 = vmatpush1.msra.mxu0 %v1033
    %1072 = vmatprep.subr.mxu0 0.0
    %1073 = vmatpush1.msra.mxu0 %v1034
    %1074 = vmatprep.subr.mxu0 0.0
    %1075 = vmatpush1.msra.mxu0 %v1035
    %1076 = vmatprep.subr.mxu0 0.0
    %1077 = vmatpush1.msra.mxu0 %v1036
    %1078 = vmatprep.subr.mxu0 0.0
    %1079 = vmatpush1.msra.mxu0 %v1037
    %1080 = vmatprep.subr.mxu0 0.0
    %1081 = vmatpush1.msra.mxu0 %v1038
    %1082 = vmatprep.subr.mxu0 0.0
    %1083 = vmatpush1.msra.mxu0 %v1039
    %1084 = vmatprep.subr.mxu0 0.0
    %1085 = vmatpush1.msra.mxu0 %v1040
    %1086 = vmatprep.subr.mxu0 0.0
    %1087 = vmatpush1.msra.mxu0 %v1041
    %1088 = vmatprep.subr.mxu0 0.0
    %1089 = vmatpush1.msra.mxu0 %v1042
    %1090 = vmatprep.subr.mxu0 0.0
    %1091 = vmatpush1.msra.mxu0 %v1043
    %1092 = vmatprep.subr.mxu0 0.0
    %1093 = vmatpush1.msra.mxu0 %v1044
    %1094 = vmatprep.subr.mxu0 0.0
    %1095 = vmatpush1.msra.mxu0 %v1045
    %1096 = vmatprep.subr.mxu0 0.0
    %1097 = vmatpush1.msra.mxu0 %v1046
    %1098 = vmatprep.subr.mxu0 0.0
    %1099 = vmatpush1.msra.mxu0 %v1047
    %1100 = vmatprep.subr.mxu0 0.0
    %1101 = vmatpush1.msra.mxu0 %v1048
    %1102 = vmatprep.subr.mxu0 0.0
    %1103 = vmatpush1.msra.mxu0 %v1049
    %1104 = vmatprep.subr.mxu0 0.0
    %1105 = vmatpush1.msra.mxu0 %v1050
    %1106 = vmatprep.subr.mxu0 0.0
    %1107 = vmatpush1.msra.mxu0 %v1051
    %1108 = vmatprep.subr.mxu0 0.0
    %1109 = vmatpush1.msra.mxu0 %v1052
    %1110 = vmatprep.subr.mxu0 0.0
    %1111 = vmatpush1.msra.mxu0 %v1053
    %1112 = vmatprep.subr.mxu0 0.0
    %1113 = vmatpush1.msra.mxu0 %v1054
    %1114 = vmatprep.subr.mxu0 0.0
    %1115 = vmatpush1.msra.mxu0 %v1055
    %1116 = vmatprep.subr.mxu0 0.0
    %1117 = vmatpush1.msra.mxu0 %v1056
    %1118 = vmatprep.subr.mxu0 0.0
    %1119 = vmatpush1.msra.mxu0 %v1057
    %1120 = vmatprep.subr.mxu0 0.0
    %1121 = vmatpush1.msra.mxu0 %v1058
    %1122 = vmatprep.subr.mxu0 0.0
    %1123 = vmatpush1.msra.mxu0 %v1059
    %1124 = vmatprep.mubr.f32.mxu0 %v23
    %1125 = vmatmul.mubr.f32.gmra.mrb[0].mxu0 %v22
    %v1126 = vpop.f32.mrb[0].mxu0
    %v1127 = vadd.f32 0.0, %v1126
    %v1128 = vpop.f32.mrb[0].mxu0
    %1129 = vmatprep.mubr.f32.mxu0 %v25
    %1130 = vmatmul.mubr.f32.gmra.mrb[0].mxu0 %v24
    %v1131 = vpop.f32.mrb[0].mxu0
    %v1132 = vadd.f32 0.0, %v1131
    %v1133 = vpop.f32.mrb[0].mxu0
    %1134 = vmatprep.mubr.f32.mxu0 %v27
    %1135 = vmatmul.mubr.f32.gmra.mrb[0].mxu0 %v26
    %v1136 = vpop.f32.mrb[0].mxu0
    %v1137 = vadd.f32 0.0, %v1136
    %v1138 = vpop.f32.mrb[0].mxu0
    %1139 = vmatprep.mubr.f32.mxu0 %v29
    %1140 = vmatmul.mubr.f32.gmra.mrb[0].mxu0 %v28
    %v1141 = vpop.f32.mrb[0].mxu0
    %v1142 = vadd.f32 0.0, %v1141
    %v1143 = vpop.f32.mrb[0].mxu0
    %1144 = vmatprep.mubr.f32.mxu0 %v31
    %1145 = vmatmul.mubr.f32.gmra.mrb[0].mxu0 %v30
    %v1146 = vpop.f32.mrb[0].mxu0
    %v1147 = vadd.f32 0.0, %v1146
    %v1148 = vpop.f32.mrb[0].mxu0
    %1149 = vmatprep.mubr.f32.mxu0 %v33
    %1150 = vmatmul.mubr.f32.gmra.mrb[0].mxu0 %v32
    %v1151 = vpop.f32.mrb[0].mxu0
    %v1152 = vadd.f32 0.0, %v1151
    %v1153 = vpop.f32.mrb[0].mxu0
    %1154 = vmatprep.mubr.f32.mxu0 %v35
    %1155 = vmatmul.mubr.f32.gmra.mrb[0].mxu0 %v34
    %v1156 = vpop.f32.mrb[0].mxu0
    %v1157 = vadd.f32 0.0, %v1156
    %v1158 = vpop.f32.mrb[0].mxu0
    %1159 = vmatprep.mubr.f32.mxu0 %v37
    %1160 = vmatmul.mubr.f32.gmra.mrb[0].mxu0 %v36
    %v1161 = vpop.f32.mrb[0].mxu0
    %v1162 = vadd.f32 0.0, %v1161
    %v1163 = vpop.f32.mrb[0].mxu0
    %1164 = vmatprep.mubr.f32.mxu0 %v39
    %1165 = vmatmul.mubr.f32.gmra.mrb[0].mxu0 %v38
    %v1166 = vpop.f32.mrb[0].mxu0
    %v1167 = vadd.f32 0.0, %v1166
    %v1168 = vpop.f32.mrb[0].mxu0
    %1169 = vmatprep.mubr.f32.mxu0 %v41
    %1170 = vmatmul.mubr.f32.gmra.mrb[0].mxu0 %v40
    %v1171 = vpop.f32.mrb[0].mxu0
    %v1172 = vadd.f32 0.0, %v1171
    %v1173 = vpop.f32.mrb[0].mxu0
    %1174 = vmatprep.mubr.f32.mxu0 %v43
    %1175 = vmatmul.mubr.f32.gmra.mrb[0].mxu0 %v42
    %v1176 = vpop.f32.mrb[0].mxu0
    %v1177 = vadd.f32 0.0, %v1176
    %v1178 = vpop.f32.mrb[0].mxu0
    %1179 = vmatprep.mubr.f32.mxu0 %v45
    %1180 = vmatmul.mubr.f32.gmra.mrb[0].mxu0 %v44
    %v1181 = vpop.f32.mrb[0].mxu0
    %v1182 = vadd.f32 0.0, %v1181
    %v1183 = vpop.f32.mrb[0].mxu0
    %1184 = vmatprep.mubr.f32.mxu0 %v47
    %1185 = vmatmul.mubr.f32.gmra.mrb[0].mxu0 %v46
    %v1186 = vpop.f32.mrb[0].mxu0
    %v1187 = vadd.f32 0.0, %v1186
    %v1188 = vpop.f32.mrb[0].mxu0
    %1189 = vmatprep.mubr.f32.mxu0 %v49
    %1190 = vmatmul.mubr.f32.gmra.mrb[0].mxu0 %v48
    %v1191 = vpop.f32.mrb[0].mxu0
    %v1192 = vadd.f32 0.0, %v1191
    %v1193 = vpop.f32.mrb[0].mxu0
    %1194 = vmatprep.mubr.f32.mxu0 %v51
    %1195 = vmatmul.mubr.f32.gmra.mrb[0].mxu0 %v50
    %v1196 = vpop.f32.mrb[0].mxu0
    %v1197 = vadd.f32 0.0, %v1196
    %v1198 = vpop.f32.mrb[0].mxu0
    %1199 = vmatprep.mubr.f32.mxu0 %v53
    %1200 = vmatmul.mubr.f32.gmra.mrb[0].mxu0 %v52
    %v1201 = vpop.f32.mrb[0].mxu0
    %v1202 = vadd.f32 0.0, %v1201
    %v1203 = vpop.f32.mrb[0].mxu0
    %1204 = vmatprep.mubr.f32.mxu0 %v55
    %1205 = vmatmul.mubr.f32.gmra.mrb[0].mxu0 %v54
    %v1206 = vpop.f32.mrb[0].mxu0
    %v1207 = vadd.f32 0.0, %v1206
    %v1208 = vpop.f32.mrb[0].mxu0
    %1209 = vmatprep.mubr.f32.mxu0 %v57
    %1210 = vmatmul.mubr.f32.gmra.mrb[0].mxu0 %v56
    %v1211 = vpop.f32.mrb[0].mxu0
    %v1212 = vadd.f32 0.0, %v1211
    %v1213 = vpop.f32.mrb[0].mxu0
    %1214 = vmatprep.mubr.f32.mxu0 %v59
    %1215 = vmatmul.mubr.f32.gmra.mrb[0].mxu0 %v58
    %v1216 = vpop.f32.mrb[0].mxu0
    %v1217 = vadd.f32 0.0, %v1216
    %v1218 = vpop.f32.mrb[0].mxu0
    %1219 = vmatprep.mubr.f32.mxu0 %v61
    %1220 = vmatmul.mubr.f32.gmra.mrb[0].mxu0 %v60
    %v1221 = vpop.f32.mrb[0].mxu0
    %v1222 = vadd.f32 0.0, %v1221
    %v1223 = vpop.f32.mrb[0].mxu0
    %1224 = vmatprep.mubr.f32.mxu0 %v63
    %1225 = vmatmul.mubr.f32.gmra.mrb[0].mxu0 %v62
    %v1226 = vpop.f32.mrb[0].mxu0
    %v1227 = vadd.f32 0.0, %v1226
    %v1228 = vpop.f32.mrb[0].mxu0
    %1229 = vmatprep.mubr.f32.mxu0 %v65
    %1230 = vmatmul.mubr.f32.gmra.mrb[0].mxu0 %v64
    %v1231 = vpop.f32.mrb[0].mxu0
    %v1232 = vadd.f32 0.0, %v1231
    %v1233 = vpop.f32.mrb[0].mxu0
    %1234 = vmatprep.mubr.f32.mxu0 %v67
    %1235 = vmatmul.mubr.f32.gmra.mrb[0].mxu0 %v66
    %v1236 = vpop.f32.mrb[0].mxu0
    %v1237 = vadd.f32 0.0, %v1236
    %v1238 = vpop.f32.mrb[0].mxu0
    %1239 = vmatprep.mubr.f32.mxu0 %v69
    %1240 = vmatmul.mubr.f32.gmra.mrb[0].mxu0 %v68
    %v1241 = vpop.f32.mrb[0].mxu0
    %v1242 = vadd.f32 0.0, %v1241
    %v1243 = vpop.f32.mrb[0].mxu0
    %1244 = vmatprep.mubr.f32.mxu0 %v71
    %1245 = vmatmul.mubr.f32.gmra.mrb[0].mxu0 %v70
    %v1246 = vpop.f32.mrb[0].mxu0
    %v1247 = vadd.f32 0.0, %v1246
    %v1248 = vpop.f32.mrb[0].mxu0
    %1249 = vmatprep.mubr.f32.mxu0 %v73
    %1250 = vmatmul.mubr.f32.gmra.mrb[0].mxu0 %v72
    %v1251 = vpop.f32.mrb[0].mxu0
    %v1252 = vadd.f32 0.0, %v1251
    %v1253 = vpop.f32.mrb[0].mxu0
    %1254 = vmatprep.mubr.f32.mxu0 %v75
    %1255 = vmatmul.mubr.f32.gmra.mrb[0].mxu0 %v74
    %v1256 = vpop.f32.mrb[0].mxu0
    %v1257 = vadd.f32 0.0, %v1256
    %v1258 = vpop.f32.mrb[0].mxu0
    %1259 = vmatprep.mubr.f32.mxu0 %v77
    %1260 = vmatmul.mubr.f32.gmra.mrb[0].mxu0 %v76
    %v1261 = vpop.f32.mrb[0].mxu0
    %v1262 = vadd.f32 0.0, %v1261
    %v1263 = vpop.f32.mrb[0].mxu0
    %1264 = vmatprep.mubr.f32.mxu0 %v79
    %1265 = vmatmul.mubr.f32.gmra.mrb[0].mxu0 %v78
    %v1266 = vpop.f32.mrb[0].mxu0
    %v1267 = vadd.f32 0.0, %v1266
    %v1268 = vpop.f32.mrb[0].mxu0
    %1269 = vmatprep.mubr.f32.mxu0 %v81
    %1270 = vmatmul.mubr.f32.gmra.mrb[0].mxu0 %v80
    %v1271 = vpop.f32.mrb[0].mxu0
    %v1272 = vadd.f32 0.0, %v1271
    %v1273 = vpop.f32.mrb[0].mxu0
    %1274 = vmatprep.mubr.f32.mxu0 %v83
    %1275 = vmatmul.mubr.f32.gmra.mrb[0].mxu0 %v82
    %v1276 = vpop.f32.mrb[0].mxu0
    %v1277 = vadd.f32 0.0, %v1276
    %v1278 = vpop.f32.mrb[0].mxu0
    %1279 = vmatprep.mubr.f32.mxu0 %v85
    %1280 = vmatmul.mubr.f32.gmra.mrb[0].mxu0 %v84
    %v1281 = vpop.f32.mrb[0].mxu0
    %v1282 = vadd.f32 0.0, %v1281
    %v1283 = vpop.f32.mrb[0].mxu0
    %1284 = vdwg.mxu0
    %v1285 = vadd.f32 %v86, %v1127
    %v1286 = vadd.f32 %v87, %v1132
    %v1287 = vadd.f32 %v88, %v1137
    %v1288 = vadd.f32 %v89, %v1142
    %v1289 = vadd.f32 %v90, %v1147
    %v1290 = vadd.f32 %v91, %v1152
    %v1291 = vadd.f32 %v92, %v1157
    %v1292 = vadd.f32 %v93, %v1162
    %v1293 = vadd.f32 %v94, %v1167
    %v1294 = vadd.f32 %v95, %v1172
    %v1295 = vadd.f32 %v96, %v1177
    %v1296 = vadd.f32 %v97, %v1182
    %v1297 = vadd.f32 %v98, %v1187
    %v1298 = vadd.f32 %v99, %v1192
    %v1299 = vadd.f32 %v100, %v1197
    %v1300 = vadd.f32 %v101, %v1202
    %v1301 = vadd.f32 %v102, %v1207
    %v1302 = vadd.f32 %v103, %v1212
    %v1303 = vadd.f32 %v104, %v1217
    %v1304 = vadd.f32 %v105, %v1222
    %v1305 = vadd.f32 %v106, %v1227
    %v1306 = vadd.f32 %v107, %v1232
    %v1307 = vadd.f32 %v108, %v1237
    %v1308 = vadd.f32 %v109, %v1242
    %v1309 = vadd.f32 %v110, %v1247
    %v1310 = vadd.f32 %v111, %v1252
    %v1311 = vadd.f32 %v112, %v1257
    %v1312 = vadd.f32 %v113, %v1262
    %v1313 = vadd.f32 %v114, %v1267
    %v1314 = vadd.f32 %v115, %v1272
    %v1315 = vadd.f32 %v116, %v1277
    %v1316 = vadd.f32 %v117, %v1282
    %v1317 = vmul.f32 %v182, %v1285
    %v1318 = vmul.f32 %v183, %v1286
    %v1319 = vmul.f32 %v184, %v1287
    %v1320 = vmul.f32 %v185, %v1288
    %v1321 = vmul.f32 %v186, %v1289
    %v1322 = vmul.f32 %v187, %v1290
    %v1323 = vmul.f32 %v188, %v1291
    %v1324 = vmul.f32 %v189, %v1292
    %v1325 = vmul.f32 %v190, %v1293
    %v1326 = vmul.f32 %v191, %v1294
    %v1327 = vmul.f32 %v192, %v1295
    %v1328 = vmul.f32 %v193, %v1296
    %v1329 = vmul.f32 %v194, %v1297
    %v1330 = vmul.f32 %v195, %v1298
    %v1331 = vmul.f32 %v196, %v1299
    %v1332 = vmul.f32 %v197, %v1300
    %v1333 = vmul.f32 %v198, %v1301
    %v1334 = vmul.f32 %v199, %v1302
    %v1335 = vmul.f32 %v200, %v1303
    %v1336 = vmul.f32 %v201, %v1304
    %v1337 = vmul.f32 %v202, %v1305
    %v1338 = vmul.f32 %v203, %v1306
    %v1339 = vmul.f32 %v204, %v1307
    %v1340 = vmul.f32 %v205, %v1308
    %v1341 = vmul.f32 %v206, %v1309
    %v1342 = vmul.f32 %v207, %v1310
    %v1343 = vmul.f32 %v208, %v1311
    %v1344 = vmul.f32 %v209, %v1312
    %v1345 = vmul.f32 %v210, %v1313
    %v1346 = vmul.f32 %v211, %v1314
    %v1347 = vmul.f32 %v212, %v1315
    %v1348 = vmul.f32 %v213, %v1316
    %1349 = vmatprep.subr.mxu0 0.0
    %1350 = vmatpush1.msra.mxu0 %v1317
    %1351 = vmatprep.subr.mxu0 0.0
    %1352 = vmatpush1.msra.mxu0 %v1318
    %1353 = vmatprep.subr.mxu0 0.0
    %1354 = vmatpush1.msra.mxu0 %v1319
    %1355 = vmatprep.subr.mxu0 0.0
    %1356 = vmatpush1.msra.mxu0 %v1320
    %1357 = vmatprep.subr.mxu0 0.0
    %1358 = vmatpush1.msra.mxu0 %v1321
    %1359 = vmatprep.subr.mxu0 0.0
    %1360 = vmatpush1.msra.mxu0 %v1322
    %1361 = vmatprep.subr.mxu0 0.0
    %1362 = vmatpush1.msra.mxu0 %v1323
    %1363 = vmatprep.subr.mxu0 0.0
    %1364 = vmatpush1.msra.mxu0 %v1324
    %1365 = vmatprep.subr.mxu0 0.0
    %1366 = vmatpush1.msra.mxu0 %v1325
    %1367 = vmatprep.subr.mxu0 0.0
    %1368 = vmatpush1.msra.mxu0 %v1326
    %1369 = vmatprep.subr.mxu0 0.0
    %1370 = vmatpush1.msra.mxu0 %v1327
    %1371 = vmatprep.subr.mxu0 0.0
    %1372 = vmatpush1.msra.mxu0 %v1328
    %1373 = vmatprep.subr.mxu0 0.0
    %1374 = vmatpush1.msra.mxu0 %v1329
    %1375 = vmatprep.subr.mxu0 0.0
    %1376 = vmatpush1.msra.mxu0 %v1330
    %1377 = vmatprep.subr.mxu0 0.0
    %1378 = vmatpush1.msra.mxu0 %v1331
    %1379 = vmatprep.subr.mxu0 0.0
    %1380 = vmatpush1.msra.mxu0 %v1332
    %1381 = vmatprep.subr.mxu0 0.0
    %1382 = vmatpush1.msra.mxu0 %v1333
    %1383 = vmatprep.subr.mxu0 0.0
    %1384 = vmatpush1.msra.mxu0 %v1334
    %1385 = vmatprep.subr.mxu0 0.0
    %1386 = vmatpush1.msra.mxu0 %v1335
    %1387 = vmatprep.subr.mxu0 0.0
    %1388 = vmatpush1.msra.mxu0 %v1336
    %1389 = vmatprep.subr.mxu0 0.0
    %1390 = vmatpush1.msra.mxu0 %v1337
    %1391 = vmatprep.subr.mxu0 0.0
    %1392 = vmatpush1.msra.mxu0 %v1338
    %1393 = vmatprep.subr.mxu0 0.0
    %1394 = vmatpush1.msra.mxu0 %v1339
    %1395 = vmatprep.subr.mxu0 0.0
    %1396 = vmatpush1.msra.mxu0 %v1340
    %1397 = vmatprep.subr.mxu0 0.0
    %1398 = vmatpush1.msra.mxu0 %v1341
    %1399 = vmatprep.subr.mxu0 0.0
    %1400 = vmatpush1.msra.mxu0 %v1342
    %1401 = vmatprep.subr.mxu0 0.0
    %1402 = vmatpush1.msra.mxu0 %v1343
    %1403 = vmatprep.subr.mxu0 0.0
    %1404 = vmatpush1.msra.mxu0 %v1344
    %1405 = vmatprep.subr.mxu0 0.0
    %1406 = vmatpush1.msra.mxu0 %v1345
    %1407 = vmatprep.subr.mxu0 0.0
    %1408 = vmatpush1.msra.mxu0 %v1346
    %1409 = vmatprep.subr.mxu0 0.0
    %1410 = vmatpush1.msra.mxu0 %v1347
    %1411 = vmatprep.subr.mxu0 0.0
    %1412 = vmatpush1.msra.mxu0 %v1348
    %1413 = vmatprep.mubr.f32.mxu0 %v23
    %1414 = vmatmul.mubr.f32.gmra.mrb[0].mxu0 %v22
    %v1415 = vpop.f32.mrb[0].mxu0
    %v1416 = vadd.f32 0.0, %v1415
    %v1417 = vpop.f32.mrb[0].mxu0
    %1418 = vmatprep.mubr.f32.mxu0 %v25
    %1419 = vmatmul.mubr.f32.gmra.mrb[0].mxu0 %v24
    %v1420 = vpop.f32.mrb[0].mxu0
    %v1421 = vadd.f32 0.0, %v1420
    %v1422 = vpop.f32.mrb[0].mxu0
    %1423 = vmatprep.mubr.f32.mxu0 %v27
    %1424 = vmatmul.mubr.f32.gmra.mrb[0].mxu0 %v26
    %v1425 = vpop.f32.mrb[0].mxu0
    %v1426 = vadd.f32 0.0, %v1425
    %v1427 = vpop.f32.mrb[0].mxu0
    %1428 = vmatprep.mubr.f32.mxu0 %v29
    %1429 = vmatmul.mubr.f32.gmra.mrb[0].mxu0 %v28
    %v1430 = vpop.f32.mrb[0].mxu0
    %v1431 = vadd.f32 0.0, %v1430
    %v1432 = vpop.f32.mrb[0].mxu0
    %1433 = vmatprep.mubr.f32.mxu0 %v31
    %1434 = vmatmul.mubr.f32.gmra.mrb[0].mxu0 %v30
    %v1435 = vpop.f32.mrb[0].mxu0
    %v1436 = vadd.f32 0.0, %v1435
    %v1437 = vpop.f32.mrb[0].mxu0
    %1438 = vmatprep.mubr.f32.mxu0 %v33
    %1439 = vmatmul.mubr.f32.gmra.mrb[0].mxu0 %v32
    %v1440 = vpop.f32.mrb[0].mxu0
    %v1441 = vadd.f32 0.0, %v1440
    %v1442 = vpop.f32.mrb[0].mxu0
    %1443 = vmatprep.mubr.f32.mxu0 %v35
    %1444 = vmatmul.mubr.f32.gmra.mrb[0].mxu0 %v34
    %v1445 = vpop.f32.mrb[0].mxu0
    %v1446 = vadd.f32 0.0, %v1445
    %v1447 = vpop.f32.mrb[0].mxu0
    %1448 = vmatprep.mubr.f32.mxu0 %v37
    %1449 = vmatmul.mubr.f32.gmra.mrb[0].mxu0 %v36
    %v1450 = vpop.f32.mrb[0].mxu0
    %v1451 = vadd.f32 0.0, %v1450
    %v1452 = vpop.f32.mrb[0].mxu0
    %1453 = vmatprep.mubr.f32.mxu0 %v39
    %1454 = vmatmul.mubr.f32.gmra.mrb[0].mxu0 %v38
    %v1455 = vpop.f32.mrb[0].mxu0
    %v1456 = vadd.f32 0.0, %v1455
    %v1457 = vpop.f32.mrb[0].mxu0
    %1458 = vmatprep.mubr.f32.mxu0 %v41
    %1459 = vmatmul.mubr.f32.gmra.mrb[0].mxu0 %v40
    %v1460 = vpop.f32.mrb[0].mxu0
    %v1461 = vadd.f32 0.0, %v1460
    %v1462 = vpop.f32.mrb[0].mxu0
    %1463 = vmatprep.mubr.f32.mxu0 %v43
    %1464 = vmatmul.mubr.f32.gmra.mrb[0].mxu0 %v42
    %v1465 = vpop.f32.mrb[0].mxu0
    %v1466 = vadd.f32 0.0, %v1465
    %v1467 = vpop.f32.mrb[0].mxu0
    %1468 = vmatprep.mubr.f32.mxu0 %v45
    %1469 = vmatmul.mubr.f32.gmra.mrb[0].mxu0 %v44
    %v1470 = vpop.f32.mrb[0].mxu0
    %v1471 = vadd.f32 0.0, %v1470
    %v1472 = vpop.f32.mrb[0].mxu0
    %1473 = vmatprep.mubr.f32.mxu0 %v47
    %1474 = vmatmul.mubr.f32.gmra.mrb[0].mxu0 %v46
    %v1475 = vpop.f32.mrb[0].mxu0
    %v1476 = vadd.f32 0.0, %v1475
    %v1477 = vpop.f32.mrb[0].mxu0
    %1478 = vmatprep.mubr.f32.mxu0 %v49
    %1479 = vmatmul.mubr.f32.gmra.mrb[0].mxu0 %v48
    %v1480 = vpop.f32.mrb[0].mxu0
    %v1481 = vadd.f32 0.0, %v1480
    %v1482 = vpop.f32.mrb[0].mxu0
    %1483 = vmatprep.mubr.f32.mxu0 %v51
    %1484 = vmatmul.mubr.f32.gmra.mrb[0].mxu0 %v50
    %v1485 = vpop.f32.mrb[0].mxu0
    %v1486 = vadd.f32 0.0, %v1485
    %v1487 = vpop.f32.mrb[0].mxu0
    %1488 = vmatprep.mubr.f32.mxu0 %v53
    %1489 = vmatmul.mubr.f32.gmra.mrb[0].mxu0 %v52
    %v1490 = vpop.f32.mrb[0].mxu0
    %v1491 = vadd.f32 0.0, %v1490
    %v1492 = vpop.f32.mrb[0].mxu0
    %1493 = vmatprep.mubr.f32.mxu0 %v55
    %1494 = vmatmul.mubr.f32.gmra.mrb[0].mxu0 %v54
    %v1495 = vpop.f32.mrb[0].mxu0
    %v1496 = vadd.f32 0.0, %v1495
    %v1497 = vpop.f32.mrb[0].mxu0
    %1498 = vmatprep.mubr.f32.mxu0 %v57
    %1499 = vmatmul.mubr.f32.gmra.mrb[0].mxu0 %v56
    %v1500 = vpop.f32.mrb[0].mxu0
    %v1501 = vadd.f32 0.0, %v1500
    %v1502 = vpop.f32.mrb[0].mxu0
    %1503 = vmatprep.mubr.f32.mxu0 %v59
    %1504 = vmatmul.mubr.f32.gmra.mrb[0].mxu0 %v58
    %v1505 = vpop.f32.mrb[0].mxu0
    %v1506 = vadd.f32 0.0, %v1505
    %v1507 = vpop.f32.mrb[0].mxu0
    %1508 = vmatprep.mubr.f32.mxu0 %v61
    %1509 = vmatmul.mubr.f32.gmra.mrb[0].mxu0 %v60
    %v1510 = vpop.f32.mrb[0].mxu0
    %v1511 = vadd.f32 0.0, %v1510
    %v1512 = vpop.f32.mrb[0].mxu0
    %1513 = vmatprep.mubr.f32.mxu0 %v63
    %1514 = vmatmul.mubr.f32.gmra.mrb[0].mxu0 %v62
    %v1515 = vpop.f32.mrb[0].mxu0
    %v1516 = vadd.f32 0.0, %v1515
    %v1517 = vpop.f32.mrb[0].mxu0
    %1518 = vmatprep.mubr.f32.mxu0 %v65
    %1519 = vmatmul.mubr.f32.gmra.mrb[0].mxu0 %v64
    %v1520 = vpop.f32.mrb[0].mxu0
    %v1521 = vadd.f32 0.0, %v1520
    %v1522 = vpop.f32.mrb[0].mxu0
    %1523 = vmatprep.mubr.f32.mxu0 %v67
    %1524 = vmatmul.mubr.f32.gmra.mrb[0].mxu0 %v66
    %v1525 = vpop.f32.mrb[0].mxu0
    %v1526 = vadd.f32 0.0, %v1525
    %v1527 = vpop.f32.mrb[0].mxu0
    %1528 = vmatprep.mubr.f32.mxu0 %v69
    %1529 = vmatmul.mubr.f32.gmra.mrb[0].mxu0 %v68
    %v1530 = vpop.f32.mrb[0].mxu0
    %v1531 = vadd.f32 0.0, %v1530
    %v1532 = vpop.f32.mrb[0].mxu0
    %1533 = vmatprep.mubr.f32.mxu0 %v71
    %1534 = vmatmul.mubr.f32.gmra.mrb[0].mxu0 %v70
    %v1535 = vpop.f32.mrb[0].mxu0
    %v1536 = vadd.f32 0.0, %v1535
    %v1537 = vpop.f32.mrb[0].mxu0
    %1538 = vmatprep.mubr.f32.mxu0 %v73
    %1539 = vmatmul.mubr.f32.gmra.mrb[0].mxu0 %v72
    %v1540 = vpop.f32.mrb[0].mxu0
    %v1541 = vadd.f32 0.0, %v1540
    %v1542 = vpop.f32.mrb[0].mxu0
    %1543 = vmatprep.mubr.f32.mxu0 %v75
    %1544 = vmatmul.mubr.f32.gmra.mrb[0].mxu0 %v74
    %v1545 = vpop.f32.mrb[0].mxu0
    %v1546 = vadd.f32 0.0, %v1545
    %v1547 = vpop.f32.mrb[0].mxu0
    %1548 = vmatprep.mubr.f32.mxu0 %v77
    %1549 = vmatmul.mubr.f32.gmra.mrb[0].mxu0 %v76
    %v1550 = vpop.f32.mrb[0].mxu0
    %v1551 = vadd.f32 0.0, %v1550
    %v1552 = vpop.f32.mrb[0].mxu0
    %1553 = vmatprep.mubr.f32.mxu0 %v79
    %1554 = vmatmul.mubr.f32.gmra.mrb[0].mxu0 %v78
    %v1555 = vpop.f32.mrb[0].mxu0
    %v1556 = vadd.f32 0.0, %v1555
    %v1557 = vpop.f32.mrb[0].mxu0
    %1558 = vmatprep.mubr.f32.mxu0 %v81
    %1559 = vmatmul.mubr.f32.gmra.mrb[0].mxu0 %v80
    %v1560 = vpop.f32.mrb[0].mxu0
    %v1561 = vadd.f32 0.0, %v1560
    %v1562 = vpop.f32.mrb[0].mxu0
    %1563 = vmatprep.mubr.f32.mxu0 %v83
    %1564 = vmatmul.mubr.f32.gmra.mrb[0].mxu0 %v82
    %v1565 = vpop.f32.mrb[0].mxu0
    %v1566 = vadd.f32 0.0, %v1565
    %v1567 = vpop.f32.mrb[0].mxu0
    %1568 = vmatprep.mubr.f32.mxu0 %v85
    %1569 = vmatmul.mubr.f32.gmra.mrb[0].mxu0 %v84
    %v1570 = vpop.f32.mrb[0].mxu0
    %v1571 = vadd.f32 0.0, %v1570
    %v1572 = vpop.f32.mrb[0].mxu0
    %1573 = vdwg.mxu0
    %v1574 = vadd.f32 %v86, %v1416
    %v1575 = vadd.f32 %v87, %v1421
    %v1576 = vadd.f32 %v88, %v1426
    %v1577 = vadd.f32 %v89, %v1431
    %v1578 = vadd.f32 %v90, %v1436
    %v1579 = vadd.f32 %v91, %v1441
    %v1580 = vadd.f32 %v92, %v1446
    %v1581 = vadd.f32 %v93, %v1451
    %v1582 = vadd.f32 %v94, %v1456
    %v1583 = vadd.f32 %v95, %v1461
    %v1584 = vadd.f32 %v96, %v1466
    %v1585 = vadd.f32 %v97, %v1471
    %v1586 = vadd.f32 %v98, %v1476
    %v1587 = vadd.f32 %v99, %v1481
    %v1588 = vadd.f32 %v100, %v1486
    %v1589 = vadd.f32 %v101, %v1491
    %v1590 = vadd.f32 %v102, %v1496
    %v1591 = vadd.f32 %v103, %v1501
    %v1592 = vadd.f32 %v104, %v1506
    %v1593 = vadd.f32 %v105, %v1511
    %v1594 = vadd.f32 %v106, %v1516
    %v1595 = vadd.f32 %v107, %v1521
    %v1596 = vadd.f32 %v108, %v1526
    %v1597 = vadd.f32 %v109, %v1531
    %v1598 = vadd.f32 %v110, %v1536
    %v1599 = vadd.f32 %v111, %v1541
    %v1600 = vadd.f32 %v112, %v1546
    %v1601 = vadd.f32 %v113, %v1551
    %v1602 = vadd.f32 %v114, %v1556
    %v1603 = vadd.f32 %v115, %v1561
    %v1604 = vadd.f32 %v116, %v1566
    %v1605 = vadd.f32 %v117, %v1571
    %v1606 = vmul.f32 %v182, %v1574
    %v1607 = vmul.f32 %v183, %v1575
    %v1608 = vmul.f32 %v184, %v1576
    %v1609 = vmul.f32 %v185, %v1577
    %v1610 = vmul.f32 %v186, %v1578
    %v1611 = vmul.f32 %v187, %v1579
    %v1612 = vmul.f32 %v188, %v1580
    %v1613 = vmul.f32 %v189, %v1581
    %v1614 = vmul.f32 %v190, %v1582
    %v1615 = vmul.f32 %v191, %v1583
    %v1616 = vmul.f32 %v192, %v1584
    %v1617 = vmul.f32 %v193, %v1585
    %v1618 = vmul.f32 %v194, %v1586
    %v1619 = vmul.f32 %v195, %v1587
    %v1620 = vmul.f32 %v196, %v1588
    %v1621 = vmul.f32 %v197, %v1589
    %v1622 = vmul.f32 %v198, %v1590
    %v1623 = vmul.f32 %v199, %v1591
    %v1624 = vmul.f32 %v200, %v1592
    %v1625 = vmul.f32 %v201, %v1593
    %v1626 = vmul.f32 %v202, %v1594
    %v1627 = vmul.f32 %v203, %v1595
    %v1628 = vmul.f32 %v204, %v1596
    %v1629 = vmul.f32 %v205, %v1597
    %v1630 = vmul.f32 %v206, %v1598
    %v1631 = vmul.f32 %v207, %v1599
    %v1632 = vmul.f32 %v208, %v1600
    %v1633 = vmul.f32 %v209, %v1601
    %v1634 = vmul.f32 %v210, %v1602
    %v1635 = vmul.f32 %v211, %v1603
    %v1636 = vmul.f32 %v212, %v1604
    %v1637 = vmul.f32 %v213, %v1605
    %1638 = vmatprep.subr.mxu0 0.0
    %1639 = vmatpush1.msra.mxu0 %v1606
    %1640 = vmatprep.subr.mxu0 0.0
    %1641 = vmatpush1.msra.mxu0 %v1607
    %1642 = vmatprep.subr.mxu0 0.0
    %1643 = vmatpush1.msra.mxu0 %v1608
    %1644 = vmatprep.subr.mxu0 0.0
    %1645 = vmatpush1.msra.mxu0 %v1609
    %1646 = vmatprep.subr.mxu0 0.0
    %1647 = vmatpush1.msra.mxu0 %v1610
    %1648 = vmatprep.subr.mxu0 0.0
    %1649 = vmatpush1.msra.mxu0 %v1611
    %1650 = vmatprep.subr.mxu0 0.0
    %1651 = vmatpush1.msra.mxu0 %v1612
    %1652 = vmatprep.subr.mxu0 0.0
    %1653 = vmatpush1.msra.mxu0 %v1613
    %1654 = vmatprep.subr.mxu0 0.0
    %1655 = vmatpush1.msra.mxu0 %v1614
    %1656 = vmatprep.subr.mxu0 0.0
    %1657 = vmatpush1.msra.mxu0 %v1615
    %1658 = vmatprep.subr.mxu0 0.0
    %1659 = vmatpush1.msra.mxu0 %v1616
    %1660 = vmatprep.subr.mxu0 0.0
    %1661 = vmatpush1.msra.mxu0 %v1617
    %1662 = vmatprep.subr.mxu0 0.0
    %1663 = vmatpush1.msra.mxu0 %v1618
    %1664 = vmatprep.subr.mxu0 0.0
    %1665 = vmatpush1.msra.mxu0 %v1619
    %1666 = vmatprep.subr.mxu0 0.0
    %1667 = vmatpush1.msra.mxu0 %v1620
    %1668 = vmatprep.subr.mxu0 0.0
    %1669 = vmatpush1.msra.mxu0 %v1621
    %1670 = vmatprep.subr.mxu0 0.0
    %1671 = vmatpush1.msra.mxu0 %v1622
    %1672 = vmatprep.subr.mxu0 0.0
    %1673 = vmatpush1.msra.mxu0 %v1623
    %1674 = vmatprep.subr.mxu0 0.0
    %1675 = vmatpush1.msra.mxu0 %v1624
    %1676 = vmatprep.subr.mxu0 0.0
    %1677 = vmatpush1.msra.mxu0 %v1625
    %1678 = vmatprep.subr.mxu0 0.0
    %1679 = vmatpush1.msra.mxu0 %v1626
    %1680 = vmatprep.subr.mxu0 0.0
    %1681 = vmatpush1.msra.mxu0 %v1627
    %1682 = vmatprep.subr.mxu0 0.0
    %1683 = vmatpush1.msra.mxu0 %v1628
    %1684 = vmatprep.subr.mxu0 0.0
    %1685 = vmatpush1.msra.mxu0 %v1629
    %1686 = vmatprep.subr.mxu0 0.0
    %1687 = vmatpush1.msra.mxu0 %v1630
    %1688 = vmatprep.subr.mxu0 0.0
    %1689 = vmatpush1.msra.mxu0 %v1631
    %1690 = vmatprep.subr.mxu0 0.0
    %1691 = vmatpush1.msra.mxu0 %v1632
    %1692 = vmatprep.subr.mxu0 0.0
    %1693 = vmatpush1.msra.mxu0 %v1633
    %1694 = vmatprep.subr.mxu0 0.0
    %1695 = vmatpush1.msra.mxu0 %v1634
    %1696 = vmatprep.subr.mxu0 0.0
    %1697 = vmatpush1.msra.mxu0 %v1635
    %1698 = vmatprep.subr.mxu0 0.0
    %1699 = vmatpush1.msra.mxu0 %v1636
    %1700 = vmatprep.subr.mxu0 0.0
    %1701 = vmatpush1.msra.mxu0 %v1637
    %1702 = vmatprep.mubr.f32.mxu0 %v23
    %1703 = vmatmul.mubr.f32.gmra.mrb[0].mxu0 %v22
    %v1704 = vpop.f32.mrb[0].mxu0
    %v1705 = vadd.f32 0.0, %v1704
    %v1706 = vpop.f32.mrb[0].mxu0
    %1707 = vmatprep.mubr.f32.mxu0 %v25
    %1708 = vmatmul.mubr.f32.gmra.mrb[0].mxu0 %v24
    %v1709 = vpop.f32.mrb[0].mxu0
    %v1710 = vadd.f32 0.0, %v1709
    %v1711 = vpop.f32.mrb[0].mxu0
    %1712 = vmatprep.mubr.f32.mxu0 %v27
    %1713 = vmatmul.mubr.f32.gmra.mrb[0].mxu0 %v26
    %v1714 = vpop.f32.mrb[0].mxu0
    %v1715 = vadd.f32 0.0, %v1714
    %v1716 = vpop.f32.mrb[0].mxu0
    %1717 = vmatprep.mubr.f32.mxu0 %v29
    %1718 = vmatmul.mubr.f32.gmra.mrb[0].mxu0 %v28
    %v1719 = vpop.f32.mrb[0].mxu0
    %v1720 = vadd.f32 0.0, %v1719
    %v1721 = vpop.f32.mrb[0].mxu0
    %1722 = vmatprep.mubr.f32.mxu0 %v31
    %1723 = vmatmul.mubr.f32.gmra.mrb[0].mxu0 %v30
    %v1724 = vpop.f32.mrb[0].mxu0
    %v1725 = vadd.f32 0.0, %v1724
    %v1726 = vpop.f32.mrb[0].mxu0
    %1727 = vmatprep.mubr.f32.mxu0 %v33
    %1728 = vmatmul.mubr.f32.gmra.mrb[0].mxu0 %v32
    %v1729 = vpop.f32.mrb[0].mxu0
    %v1730 = vadd.f32 0.0, %v1729
    %v1731 = vpop.f32.mrb[0].mxu0
    %1732 = vmatprep.mubr.f32.mxu0 %v35
    %1733 = vmatmul.mubr.f32.gmra.mrb[0].mxu0 %v34
    %v1734 = vpop.f32.mrb[0].mxu0
    %v1735 = vadd.f32 0.0, %v1734
    %v1736 = vpop.f32.mrb[0].mxu0
    %1737 = vmatprep.mubr.f32.mxu0 %v37
    %1738 = vmatmul.mubr.f32.gmra.mrb[0].mxu0 %v36
    %v1739 = vpop.f32.mrb[0].mxu0
    %v1740 = vadd.f32 0.0, %v1739
    %v1741 = vpop.f32.mrb[0].mxu0
    %1742 = vmatprep.mubr.f32.mxu0 %v39
    %1743 = vmatmul.mubr.f32.gmra.mrb[0].mxu0 %v38
    %v1744 = vpop.f32.mrb[0].mxu0
    %v1745 = vadd.f32 0.0, %v1744
    %v1746 = vpop.f32.mrb[0].mxu0
    %1747 = vmatprep.mubr.f32.mxu0 %v41
    %1748 = vmatmul.mubr.f32.gmra.mrb[0].mxu0 %v40
    %v1749 = vpop.f32.mrb[0].mxu0
    %v1750 = vadd.f32 0.0, %v1749
    %v1751 = vpop.f32.mrb[0].mxu0
    %1752 = vmatprep.mubr.f32.mxu0 %v43
    %1753 = vmatmul.mubr.f32.gmra.mrb[0].mxu0 %v42
    %v1754 = vpop.f32.mrb[0].mxu0
    %v1755 = vadd.f32 0.0, %v1754
    %v1756 = vpop.f32.mrb[0].mxu0
    %1757 = vmatprep.mubr.f32.mxu0 %v45
    %1758 = vmatmul.mubr.f32.gmra.mrb[0].mxu0 %v44
    %v1759 = vpop.f32.mrb[0].mxu0
    %v1760 = vadd.f32 0.0, %v1759
    %v1761 = vpop.f32.mrb[0].mxu0
    %1762 = vmatprep.mubr.f32.mxu0 %v47
    %1763 = vmatmul.mubr.f32.gmra.mrb[0].mxu0 %v46
    %v1764 = vpop.f32.mrb[0].mxu0
    %v1765 = vadd.f32 0.0, %v1764
    %v1766 = vpop.f32.mrb[0].mxu0
    %1767 = vmatprep.mubr.f32.mxu0 %v49
    %1768 = vmatmul.mubr.f32.gmra.mrb[0].mxu0 %v48
    %v1769 = vpop.f32.mrb[0].mxu0
    %v1770 = vadd.f32 0.0, %v1769
    %v1771 = vpop.f32.mrb[0].mxu0
    %1772 = vmatprep.mubr.f32.mxu0 %v51
    %1773 = vmatmul.mubr.f32.gmra.mrb[0].mxu0 %v50
    %v1774 = vpop.f32.mrb[0].mxu0
    %v1775 = vadd.f32 0.0, %v1774
    %v1776 = vpop.f32.mrb[0].mxu0
    %1777 = vmatprep.mubr.f32.mxu0 %v53
    %1778 = vmatmul.mubr.f32.gmra.mrb[0].mxu0 %v52
    %v1779 = vpop.f32.mrb[0].mxu0
    %v1780 = vadd.f32 0.0, %v1779
    %v1781 = vpop.f32.mrb[0].mxu0
    %1782 = vmatprep.mubr.f32.mxu0 %v55
    %1783 = vmatmul.mubr.f32.gmra.mrb[0].mxu0 %v54
    %v1784 = vpop.f32.mrb[0].mxu0
    %v1785 = vadd.f32 0.0, %v1784
    %v1786 = vpop.f32.mrb[0].mxu0
    %1787 = vmatprep.mubr.f32.mxu0 %v57
    %1788 = vmatmul.mubr.f32.gmra.mrb[0].mxu0 %v56
    %v1789 = vpop.f32.mrb[0].mxu0
    %v1790 = vadd.f32 0.0, %v1789
    %v1791 = vpop.f32.mrb[0].mxu0
    %1792 = vmatprep.mubr.f32.mxu0 %v59
    %1793 = vmatmul.mubr.f32.gmra.mrb[0].mxu0 %v58
    %v1794 = vpop.f32.mrb[0].mxu0
    %v1795 = vadd.f32 0.0, %v1794
    %v1796 = vpop.f32.mrb[0].mxu0
    %1797 = vmatprep.mubr.f32.mxu0 %v61
    %1798 = vmatmul.mubr.f32.gmra.mrb[0].mxu0 %v60
    %v1799 = vpop.f32.mrb[0].mxu0
    %v1800 = vadd.f32 0.0, %v1799
    %v1801 = vpop.f32.mrb[0].mxu0
    %1802 = vmatprep.mubr.f32.mxu0 %v63
    %1803 = vmatmul.mubr.f32.gmra.mrb[0].mxu0 %v62
    %v1804 = vpop.f32.mrb[0].mxu0
    %v1805 = vadd.f32 0.0, %v1804
    %v1806 = vpop.f32.mrb[0].mxu0
    %1807 = vmatprep.mubr.f32.mxu0 %v65
    %1808 = vmatmul.mubr.f32.gmra.mrb[0].mxu0 %v64
    %v1809 = vpop.f32.mrb[0].mxu0
    %v1810 = vadd.f32 0.0, %v1809
    %v1811 = vpop.f32.mrb[0].mxu0
    %1812 = vmatprep.mubr.f32.mxu0 %v67
    %1813 = vmatmul.mubr.f32.gmra.mrb[0].mxu0 %v66
    %v1814 = vpop.f32.mrb[0].mxu0
    %v1815 = vadd.f32 0.0, %v1814
    %v1816 = vpop.f32.mrb[0].mxu0
    %1817 = vmatprep.mubr.f32.mxu0 %v69
    %1818 = vmatmul.mubr.f32.gmra.mrb[0].mxu0 %v68
    %v1819 = vpop.f32.mrb[0].mxu0
    %v1820 = vadd.f32 0.0, %v1819
    %v1821 = vpop.f32.mrb[0].mxu0
    %1822 = vmatprep.mubr.f32.mxu0 %v71
    %1823 = vmatmul.mubr.f32.gmra.mrb[0].mxu0 %v70
    %v1824 = vpop.f32.mrb[0].mxu0
    %v1825 = vadd.f32 0.0, %v1824
    %v1826 = vpop.f32.mrb[0].mxu0
    %1827 = vmatprep.mubr.f32.mxu0 %v73
    %1828 = vmatmul.mubr.f32.gmra.mrb[0].mxu0 %v72
    %v1829 = vpop.f32.mrb[0].mxu0
    %v1830 = vadd.f32 0.0, %v1829
    %v1831 = vpop.f32.mrb[0].mxu0
    %1832 = vmatprep.mubr.f32.mxu0 %v75
    %1833 = vmatmul.mubr.f32.gmra.mrb[0].mxu0 %v74
    %v1834 = vpop.f32.mrb[0].mxu0
    %v1835 = vadd.f32 0.0, %v1834
    %v1836 = vpop.f32.mrb[0].mxu0
    %1837 = vmatprep.mubr.f32.mxu0 %v77
    %1838 = vmatmul.mubr.f32.gmra.mrb[0].mxu0 %v76
    %v1839 = vpop.f32.mrb[0].mxu0
    %v1840 = vadd.f32 0.0, %v1839
    %v1841 = vpop.f32.mrb[0].mxu0
    %1842 = vmatprep.mubr.f32.mxu0 %v79
    %1843 = vmatmul.mubr.f32.gmra.mrb[0].mxu0 %v78
    %v1844 = vpop.f32.mrb[0].mxu0
    %v1845 = vadd.f32 0.0, %v1844
    %v1846 = vpop.f32.mrb[0].mxu0
    %1847 = vmatprep.mubr.f32.mxu0 %v81
    %1848 = vmatmul.mubr.f32.gmra.mrb[0].mxu0 %v80
    %v1849 = vpop.f32.mrb[0].mxu0
    %v1850 = vadd.f32 0.0, %v1849
    %v1851 = vpop.f32.mrb[0].mxu0
    %1852 = vmatprep.mubr.f32.mxu0 %v83
    %1853 = vmatmul.mubr.f32.gmra.mrb[0].mxu0 %v82
    %v1854 = vpop.f32.mrb[0].mxu0
    %v1855 = vadd.f32 0.0, %v1854
    %v1856 = vpop.f32.mrb[0].mxu0
    %1857 = vmatprep.mubr.f32.mxu0 %v85
    %1858 = vmatmul.mubr.f32.gmra.mrb[0].mxu0 %v84
    %v1859 = vpop.f32.mrb[0].mxu0
    %v1860 = vadd.f32 0.0, %v1859
    %v1861 = vpop.f32.mrb[0].mxu0
    %1862 = vdwg.mxu0
    %v1863 = vadd.f32 %v86, %v1705
    %v1864 = vadd.f32 %v87, %v1710
    %v1865 = vadd.f32 %v88, %v1715
    %v1866 = vadd.f32 %v89, %v1720
    %v1867 = vadd.f32 %v90, %v1725
    %v1868 = vadd.f32 %v91, %v1730
    %v1869 = vadd.f32 %v92, %v1735
    %v1870 = vadd.f32 %v93, %v1740
    %v1871 = vadd.f32 %v94, %v1745
    %v1872 = vadd.f32 %v95, %v1750
    %v1873 = vadd.f32 %v96, %v1755
    %v1874 = vadd.f32 %v97, %v1760
    %v1875 = vadd.f32 %v98, %v1765
    %v1876 = vadd.f32 %v99, %v1770
    %v1877 = vadd.f32 %v100, %v1775
    %v1878 = vadd.f32 %v101, %v1780
    %v1879 = vadd.f32 %v102, %v1785
    %v1880 = vadd.f32 %v103, %v1790
    %v1881 = vadd.f32 %v104, %v1795
    %v1882 = vadd.f32 %v105, %v1800
    %v1883 = vadd.f32 %v106, %v1805
    %v1884 = vadd.f32 %v107, %v1810
    %v1885 = vadd.f32 %v108, %v1815
    %v1886 = vadd.f32 %v109, %v1820
    %v1887 = vadd.f32 %v110, %v1825
    %v1888 = vadd.f32 %v111, %v1830
    %v1889 = vadd.f32 %v112, %v1835
    %v1890 = vadd.f32 %v113, %v1840
    %v1891 = vadd.f32 %v114, %v1845
    %v1892 = vadd.f32 %v115, %v1850
    %v1893 = vadd.f32 %v116, %v1855
    %v1894 = vadd.f32 %v117, %v1860
    %1895 = vst [vmem:[%s5] sm:$0xff] %v1863
    %1896 = vst [vmem:[%s5 + $0x8] sm:$0xff] %v1864
    %1897 = vst [vmem:[%s5 + $0x10] sm:$0xff] %v1865
    %1898 = vst [vmem:[%s5 + $0x18] sm:$0xff] %v1866
    %1899 = vst [vmem:[%s5 + $0x20] sm:$0xff] %v1867
    %1900 = vst [vmem:[%s5 + $0x28] sm:$0xff] %v1868
    %1901 = vst [vmem:[%s5 + $0x30] sm:$0xff] %v1869
    %1902 = vst [vmem:[%s5 + $0x38] sm:$0xff] %v1870
    %1903 = vst [vmem:[%s5 + $0x40] sm:$0xff] %v1871
    %1904 = vst [vmem:[%s5 + $0x48] sm:$0xff] %v1872
    %1905 = vst [vmem:[%s5 + $0x50] sm:$0xff] %v1873
    %1906 = vst [vmem:[%s5 + $0x58] sm:$0xff] %v1874
    %1907 = vst [vmem:[%s5 + $0x60] sm:$0xff] %v1875
    %1908 = vst [vmem:[%s5 + $0x68] sm:$0xff] %v1876
    %1909 = vst [vmem:[%s5 + $0x70] sm:$0xff] %v1877
    %1910 = vst [vmem:[%s5 + $0x78] sm:$0xff] %v1878
    %1911 = vst [vmem:[%s5 + $0x80] sm:$0xff] %v1879
    %1912 = vst [vmem:[%s5 + $0x88] sm:$0xff] %v1880
    %1913 = vst [vmem:[%s5 + $0x90] sm:$0xff] %v1881
    %1914 = vst [vmem:[%s5 + $0x98] sm:$0xff] %v1882
    %1915 = vst [vmem:[%s5 + $0xa0] sm:$0xff] %v1883
    %1916 = vst [vmem:[%s5 + $0xa8] sm:$0xff] %v1884
    %1917 = vst [vmem:[%s5 + $0xb0] sm:$0xff] %v1885
    %1918 = vst [vmem:[%s5 + $0xb8] sm:$0xff] %v1886
    %1919 = vst [vmem:[%s5 + $0xc0] sm:$0xff] %v1887
    %1920 = vst [vmem:[%s5 + $0xc8] sm:$0xff] %v1888
    %1921 = vst [vmem:[%s5 + $0xd0] sm:$0xff] %v1889
    %1922 = vst [vmem:[%s5 + $0xd8] sm:$0xff] %v1890
    %1923 = vst [vmem:[%s5 + $0xe0] sm:$0xff] %v1891
    %1924 = vst [vmem:[%s5 + $0xe8] sm:$0xff] %v1892
    %1925 = vst [vmem:[%s5 + $0xf0] sm:$0xff] %v1893
    %1926 = vst [vmem:[%s5 + $0xf8] sm:$0xff] %v1894
    // Predicated region
    $region18: #{body.4} parent=1 // pred_check
      _
    $region19: #{body.4} parent=1 // pred_check_branch
      %1928 = sbr.rel (0) target = $region21
    $region20: #{body.4} parent=1 // pred_region
      %s1930 = ssub.s32 4096, 4096
      %1931 = vsyncadd [#allocation3], %s1930
      %s1932 = sshll.u32 [#allocation2], 4
      %s1933 = int_to_ptr.vmem [resolvable:$true] %s1932
      %1938 = dma.vmem_to_hbm [thread:$0]  %s1933, 4096, %s4, [#allocation3], 128, 128, 8
    $region21: #{body.4} parent=1 // pred_fallthru
      _
    // Predicated region
    $region22: #{body.4} parent=1 // pred_check
      _
    $region23: #{body.4} parent=1 // pred_check_branch
      %1940 = sbr.rel (0) target = $region25
    $region24: #{body.4} parent=1 // pred_region
      _
    $region25: #{body.4} parent=1 // pred_fallthru
      _
    // Predicated region
    $region26: #{body.4} parent=1 // pred_check
      _
    $region27: #{body.4} parent=1 // pred_check_branch
      %1942 = sbr.rel (0) target = $region29
    $region28: #{body.4} parent=1 // pred_region
      _
    $region29: #{body.4} parent=1 // pred_fallthru
      _
    // Predicated region
    $region30: #{body.4} parent=1 // pred_check
      _
    $region31: #{body.4} parent=1 // pred_check_branch
      %1944 = sbr.rel (0) target = $region33
    $region32: #{body.4} parent=1 // pred_region
      _
    $region33: #{body.4} parent=1 // pred_fallthru
      _
    // Predicated region
    $region34: #{body.4} parent=1 // pred_check
      _
    $region35: #{body.4} parent=1 // pred_check_branch
      %1946 = sbr.rel (0) target = $region37
    $region36: #{body.4} parent=1 // pred_region
      %1947 = dma.done [#allocation3], 4096
    $region37: #{body.4} parent=1 // pred_fallthru
      _
    // Predicated region
    $region38: #{body.4} parent=1 // pred_check
      _
    $region39: #{body.4} parent=1 // pred_check_branch
      %1949 = sbr.rel (0) target = $region41
    $region40: #{body.4} parent=1 // pred_region
      _
    $region41: #{body.4} parent=1 // pred_fallthru
      _
    // Predicated region
    $region42: #{body.4} parent=1 // pred_check
      _
    $region43: #{body.4} parent=1 // pred_check_branch
      %1951 = sbr.rel (0) target = $region45
    $region44: #{body.4} parent=1 // pred_region
      _
    $region45: #{body.4} parent=1 // pred_fallthru
      _
    // Predicated region
    $region46: #{body.4} parent=1 // pred_check
      _
    $region47: #{body.4} parent=1 // pred_check_branch
      %1953 = sbr.rel (0) target = $region49
    $region48: #{body.4} parent=1 // pred_region
      _
    $region49: #{body.4} parent=1 // pred_fallthru
      _
    %1954 = vsyncpa [#allocation3], 1

</llo_original>
